<compile_context>
chip_gen: v7x
topology: tpu7x:2x2x1
jax: 0.10.0
libtpu: 0.0.40
codegen_flags: <defaults>
</compile_context>

<pallas_src>
import functools

import jax
import jax.numpy as jnp
from jax.experimental import pallas as pl
from jax.experimental.pallas import tpu as pltpu


def _round_up(x, m):
    return ((x + m - 1) // m) * m


# ----------------------------- Pallas kernel ------------------------------- #
def decoder_step_kernel(img_ref, wf_ref, gates_emb_ref, h0_ref, c0_ref,
                        attv_ref, attbias_ref, gateb_ref, whf_ref, wihc_ref,
                        h_out_ref, alpha_out_ref, h_sc, c_sc,
                        *, H, E, S1, S2):
    """One decode step. Grid = (batch_block, t); h/c carried in VMEM scratch."""
    t = pl.program_id(1)

    @pl.when(t == 0)
    def _():
        h_sc[...] = h0_ref[...]
        c_sc[...] = c0_ref[...]

    h = h_sc[...]                                           # (bb, H)
    c = c_sc[...]                                           # (bb, H)

    # ---- ONE fused MXU pass for all h-LHS matmuls: [attU | gateW | Whh] ----
    hz = jnp.dot(h, whf_ref[...], preferred_element_type=jnp.float32)
    uh = hz[:, 0:H]                                         # h @ attU
    gate_pre = hz[:, S1:S1 + E]                             # h @ gateW
    gates_h = hz[:, S1 + S2:S1 + S2 + 4 * H]                # h @ Whh

    # ---- additive attention (attb + attUb folded into wf; attvb dropped) ---
    wf = wf_ref[...]                                        # (bb, Lp, H)
    att = jnp.tanh(wf + uh[:, None, :])                     # (bb, Lp, H)
    attv_b = jnp.broadcast_to(attv_ref[...].reshape(1, 1, H), att.shape)
    e = jnp.sum(att * attv_b, axis=-1) + attbias_ref[...]   # (bb, Lp), pad masked
    e_max = jnp.max(e, axis=-1, keepdims=True)
    ex = jnp.exp(e - e_max)
    denom = jnp.sum(ex, axis=-1, keepdims=True)
    inv = pl.reciprocal(denom, approx=True)                 # EUP slot
    inv = inv * (2.0 - denom * inv)                         # 1 Newton step
    alpha = ex * inv                                        # (bb, Lp)

    img = img_ref[...]                                      # (bb, Lp, E)
    context = jnp.sum(img * alpha[:, :, None], axis=1)      # (bb, E)

    # ---- gated context ----
    gate_out = jax.nn.sigmoid(gate_pre + gateb_ref[...])
    context_gate = context * gate_out                       # (bb, E)

    # ---- LSTMCell: embedding gate contribution was hoisted to the wrapper --
    gates = (gates_emb_ref[0]                               # emb@Wih_e + bih + bhh
             + jnp.dot(context_gate, wihc_ref[...],
                       preferred_element_type=jnp.float32)
             + gates_h)                                     # (bb, 4H)
    i_g = jax.nn.sigmoid(gates[:, 0 * H:1 * H])
    f_g = jax.nn.sigmoid(gates[:, 1 * H:2 * H])
    g_g = jnp.tanh(gates[:, 2 * H:3 * H])
    o_g = jax.nn.sigmoid(gates[:, 3 * H:4 * H])
    c_new = f_g * c + i_g * g_g
    h_new = o_g * jnp.tanh(c_new)
    # TODO(synk): nn.Dropout(p=0.5) is stochastic; modeled as identity (eval mode).

    h_sc[...] = h_new
    c_sc[...] = c_new
    h_out_ref[0] = h_new                                    # streamed per-t writeback
    alpha_out_ref[0] = alpha                                # lane-dense (Lp mult of 128)


# ------------------------------ host wrapper ------------------------------- #
def decoder_rasha_forward(params, img_feat, captions, lengths):
    B, L, E = img_feat.shape
    H = params["attU"].shape[0]
    M = params["embedding"].shape[1]
    V = params["embedding"].shape[0]
    T = int(max(lengths))

    # ---- batch / region padding (sublane + lane density) --------------------
    if B > 8:
        Bp = _round_up(B, 16)
        block_b = Bp // 2            # 2 batch blocks -> both v7x TensorCores
    else:
        Bp = 8
        block_b = 8
    pad_b = Bp - B
    Lp = _round_up(L, 128)           # lane-dense alpha output
    pad_l = Lp - L

    img_p = jnp.pad(img_feat, ((0, pad_b), (0, pad_l), (0, 0)))     # (Bp, Lp, E)

    # ---- prologue (plain XLA): hoisted time-invariant work ------------------
    mean_feat = jnp.mean(img_feat, axis=1)                          # (B, E)
    h0 = jnp.tanh(mean_feat @ params["hW"] + params["hb"])          # (B, H)
    c0 = jnp.tanh(mean_feat @ params["cW"] + params["cb"])
    h0 = jnp.pad(h0, ((0, pad_b), (0, 0)))                          # (Bp, H)
    c0 = jnp.pad(c0, ((0, pad_b), (0, 0)))

    # wf = img@attW + attb + attUb (attUb folded in so kernel skips that add)
    wf = (jnp.einsum("ble,eh->blh", img_p, params["attW"])
          + params["attb"] + params["attUb"])                       # (Bp, Lp, H)

    # additive mask for the padded region axis (softmax-exact)
    att_bias = jnp.where(jnp.arange(Lp) < L, 0.0, -1e30
                         ).reshape(1, Lp).astype(jnp.float32)

    # embedding gate contribution hoisted out of the recurrence
    emb = jnp.take(params["embedding"], captions[:, :T], axis=0)    # (B, T, M)
    emb_p = jnp.pad(emb, ((0, pad_b), (0, 0), (0, 0)))              # (Bp, T, M)
    Wih_e = params["Wih"][:M]                                       # (M, 4H)
    Wih_c = params["Wih"][M:]                                       # (E, 4H)
    gates_emb = (jnp.einsum("btm,mg->btg", emb_p, Wih_e)
                 + params["bih"] + params["bhh"])                   # (Bp, T, 4H)
    gates_emb = jnp.transpose(gates_emb, (1, 0, 2))                 # (T, Bp, 4H)

    # fused h-LHS weight: [attU | gateW | Whh], segments padded to 128 lanes
    S1 = _round_up(H, 128)
    S2 = _round_up(E, 128)
    S3 = _round_up(4 * H, 128)
    Wh_fused = jnp.zeros((H, S1 + S2 + S3), jnp.float32)
    Wh_fused = Wh_fused.at[:, 0:H].set(params["attU"])
    Wh_fused = Wh_fused.at[:, S1:S1 + E].set(params["gateW"])
    Wh_fused = Wh_fused.at[:, S1 + S2:S1 + S2 + 4 * H].set(params["Whh"])

    attv_row = params["attv"].T                                     # (1, H)

    kernel = functools.partial(decoder_step_kernel, H=H, E=E, S1=S1, S2=S2)
    grid = (Bp // block_b, T)

    h_all, alpha_all = pl.pallas_call(
        kernel,
        out_shape=(jax.ShapeDtypeStruct((T, Bp, H), jnp.float32),
                   jax.ShapeDtypeStruct((T, Bp, Lp), jnp.float32)),
        grid_spec=pltpu.PrefetchScalarGridSpec(
            num_scalar_prefetch=0,
            grid=grid,
            in_specs=[
                # per-batch-block, resident across the t axis
                pl.BlockSpec((block_b, Lp, E), lambda b, t: (b, 0, 0)),  # img
                pl.BlockSpec((block_b, Lp, H), lambda b, t: (b, 0, 0)),  # wf
                # streamed per step (double-buffered by the pipeline)
                pl.BlockSpec((1, block_b, 4 * H), lambda b, t: (t, b, 0)),  # gates_emb
                pl.BlockSpec((block_b, H), lambda b, t: (b, 0)),         # h0
                pl.BlockSpec((block_b, H), lambda b, t: (b, 0)),         # c0
                # small time-invariant params, fully resident
                pl.BlockSpec((1, H), lambda b, t: (0, 0)),               # attv row
                pl.BlockSpec((1, Lp), lambda b, t: (0, 0)),              # region mask
                pl.BlockSpec((1, E), lambda b, t: (0, 0)),               # gate bias
                pl.BlockSpec((H, S1 + S2 + S3), lambda b, t: (0, 0)),    # fused h-weight
                pl.BlockSpec((E, 4 * H), lambda b, t: (0, 0)),           # Wih context rows
            ],
            out_specs=[
                pl.BlockSpec((1, block_b, H), lambda b, t: (t, b, 0)),
                pl.BlockSpec((1, block_b, Lp), lambda b, t: (t, b, 0)),
            ],
            scratch_shapes=[pltpu.VMEM((block_b, H), jnp.float32),   # h carry
                            pltpu.VMEM((block_b, H), jnp.float32)]), # c carry
        compiler_params=pltpu.CompilerParams(
            dimension_semantics=("parallel", "arbitrary"),
            vmem_limit_bytes=64 * 1024 * 1024),
    )(img_p, wf, gates_emb, h0, c0, attv_row, att_bias, params["gateb"],
      Wh_fused, Wih_c)

    # ---- epilogue (plain XLA): batched vocab projection over T*B rows -------
    h_states = h_all[:, :B, :]                                       # (T, B, H)
    logits = (h_states.reshape(T * B, H) @ params["outW"]
              + params["outb"]).reshape(T, B, V)
    out_matrix = jnp.transpose(logits, (1, 0, 2))                    # (B, T, V)
    alpha_matrix = jnp.transpose(alpha_all[:, :B, :L], (1, 0, 2))    # (B, T, L)
    return out_matrix, alpha_matrix


# --------------------------- pure-JAX reference ----------------------------- #
def reference_forward(params, img_feat, captions, lengths):
    B, L, E = img_feat.shape
    H = params["attU"].shape[0]
    T = int(max(lengths))

    mean_feat = jnp.mean(img_feat, axis=1)
    h = jnp.tanh(mean_feat @ params["hW"] + params["hb"])
    c = jnp.tanh(mean_feat @ params["cW"] + params["cb"])
    emb = jnp.take(params["embedding"], captions, axis=0)

    outs, alphas = [], []
    for i in range(T):
        Wf = jnp.einsum("ble,eh->blh", img_feat, params["attW"]) + params["attb"]
        Uh = h @ params["attU"] + params["attUb"]
        e = jnp.einsum("blh,hj->blj", jnp.tanh(Wf + Uh[:, None, :]),
                       params["attv"])[:, :, 0] + params["attvb"][0, 0]
        alpha = jax.nn.softmax(e, axis=1)
        context = jnp.sum(img_feat * alpha[:, :, None], axis=1)
        gate_out = jax.nn.sigmoid(h @ params["gateW"] + params["gateb"])
        x = jnp.concatenate([emb[:, i], context * gate_out], axis=1)
        gates = x @ params["Wih"] + params["bih"] + h @ params["Whh"] + params["bhh"]
        i_g = jax.nn.sigmoid(gates[:, 0 * H:1 * H])
        f_g = jax.nn.sigmoid(gates[:, 1 * H:2 * H])
        g_g = jnp.tanh(gates[:, 2 * H:3 * H])
        o_g = jax.nn.sigmoid(gates[:, 3 * H:4 * H])
        c = f_g * c + i_g * g_g
        h = o_g * jnp.tanh(c)
        outs.append(h @ params["outW"] + params["outb"])
        alphas.append(alpha)
    return jnp.stack(outs, axis=1), jnp.stack(alphas, axis=1)


# --------------------------------- main ------------------------------------- #
def init_params(key, vocab, embed_size, hidden_dim, enc_dim):
    def u(k, shape, scale=0.1):
        return jax.random.uniform(k, shape, jnp.float32, -scale, scale)

    ks = jax.random.split(key, 20)
    H, E, M, V = hidden_dim, enc_dim, embed_size, vocab
    return {
        "embedding": u(ks[0], (V, M)),
        "hW": u(ks[1], (E, H)), "hb": u(ks[2], (1, H)),
        "cW": u(ks[3], (E, H)), "cb": u(ks[4], (1, H)),
        "gateW": u(ks[5], (H, E)), "gateb": u(ks[6], (1, E)),
        "attW": u(ks[7], (E, H)), "attb": u(ks[8], (1, H)),
        "attU": u(ks[9], (H, H)), "attUb": u(ks[10], (1, H)),
        "attv": u(ks[11], (H, 1)), "attvb": u(ks[12], (1, 1)),
        "Wih": u(ks[13], (M + E, 4 * H)), "bih": u(ks[14], (1, 4 * H)),
        "Whh": u(ks[15], (H, 4 * H)), "bhh": u(ks[16], (1, 4 * H)),
        "outW": u(ks[17], (H, V)), "outb": u(ks[18], (1, V)),
    }


if __name__ == "__main__":
    B, L = 2, 16                 # batch, num image regions
    enc_dim, hidden_dim = 32, 32
    embed_size, vocab = 32, 64
    Tc = 8
    lengths = [8, 6]

    key = jax.random.PRNGKey(0)
    k_img, k_cap, k_par = jax.random.split(key, 3)

    params = init_params(k_par, vocab, embed_size, hidden_dim, enc_dim)
    img_feat = jax.random.normal(k_img, (B, L, enc_dim), jnp.float32)
    captions = jax.random.randint(k_cap, (B, Tc), 0, vocab, jnp.int32)

    out_matrix, alpha_matrix = decoder_rasha_forward(params, img_feat, captions, lengths)
    out_matrix = jax.block_until_ready(out_matrix)
    alpha_matrix = jax.block_until_ready(alpha_matrix)

    ref_out, ref_alpha = reference_forward(params, img_feat, captions, lengths)
    assert out_matrix.shape == (B, max(lengths), vocab)
    assert alpha_matrix.shape == (B, max(lengths), L)
    # Tolerance loosened slightly (1e-3) because softmax uses the EUP approx
    # reciprocal (+ one Newton step) instead of an exact divide.
    assert jnp.allclose(out_matrix, ref_out, atol=1e-3, rtol=1e-3)
    assert jnp.allclose(alpha_matrix, ref_alpha, atol=1e-3, rtol=1e-3)

    print("KERNEL_OK")
</pallas_src>

<mosaic_0001>
module attributes {stable_mosaic.version = 11 : i64} {
  func.func @decoder_step_kernel(%arg0: i32, %arg1: i32, %arg2: memref<8x128x32xf32, #tpu.memory_space<vmem>>, %arg3: memref<8x128x32xf32, #tpu.memory_space<vmem>>, %arg4: memref<1x8x128xf32, #tpu.memory_space<vmem>>, %arg5: memref<8x32xf32, #tpu.memory_space<vmem>>, %arg6: memref<8x32xf32, #tpu.memory_space<vmem>>, %arg7: memref<1x32xf32, #tpu.memory_space<vmem>>, %arg8: memref<1x128xf32, #tpu.memory_space<vmem>>, %arg9: memref<1x32xf32, #tpu.memory_space<vmem>>, %arg10: memref<32x384xf32, #tpu.memory_space<vmem>>, %arg11: memref<32x128xf32, #tpu.memory_space<vmem>>, %arg12: memref<1x8x32xf32, #tpu.memory_space<vmem>>, %arg13: memref<1x8x128xf32, #tpu.memory_space<vmem>>, %arg14: memref<8x32xf32, #tpu.memory_space<vmem>>, %arg15: memref<8x32xf32, #tpu.memory_space<vmem>>) attributes {dimension_semantics = [#tpu.dimension_semantics<parallel>, #tpu.dimension_semantics<arbitrary>], iteration_bounds = array<i64: 1, 8>, scalar_prefetch = 0 : i64, scratch_operands = 2 : i64, tpu.core_type = #tpu.core_type<tc>, window_params = [{transform_indices = @transform_0, window_bounds = array<i64: 8, 128, 32>}, {transform_indices = @transform_1, window_bounds = array<i64: 8, 128, 32>}, {transform_indices = @transform_2, window_bounds = array<i64: 1, 8, 128>}, {transform_indices = @transform_3, window_bounds = array<i64: 8, 32>}, {transform_indices = @transform_4, window_bounds = array<i64: 8, 32>}, {pipeline_mode = #tpu.pipeline_mode<synchronous>, transform_indices = @transform_5, window_bounds = array<i64: 1, 32>}, {pipeline_mode = #tpu.pipeline_mode<synchronous>, transform_indices = @transform_6, window_bounds = array<i64: 1, 128>}, {pipeline_mode = #tpu.pipeline_mode<synchronous>, transform_indices = @transform_7, window_bounds = array<i64: 1, 32>}, {pipeline_mode = #tpu.pipeline_mode<synchronous>, transform_indices = @transform_8, window_bounds = array<i64: 32, 384>}, {pipeline_mode = #tpu.pipeline_mode<synchronous>, transform_indices = @transform_9, window_bounds = array<i64: 32, 128>}, {transform_indices = @transform_10, window_bounds = array<i64: 1, 8, 32>}, {transform_indices = @transform_11, window_bounds = array<i64: 1, 8, 128>}]} {
    %c0_i32 = arith.constant 0 : i32
    %0 = arith.cmpi eq, %arg1, %c0_i32 : i32
    %1 = arith.extui %0 : i1 to i32
    %c0_i32_0 = arith.constant 0 : i32
    %2 = arith.cmpi ne, %1, %c0_i32_0 : i32
    scf.if %2 {
      %c0_43 = arith.constant 0 : index
      %c0_44 = arith.constant 0 : index
      %91 = vector.load %arg5[%c0_43, %c0_44] : memref<8x32xf32, #tpu.memory_space<vmem>>, vector<8x32xf32>
      %c0_45 = arith.constant 0 : index
      %c0_46 = arith.constant 0 : index
      %92 = vector.load %arg14[%c0_45, %c0_46] : memref<8x32xf32, #tpu.memory_space<vmem>>, vector<8x32xf32>
      tpu.vector_store %arg14[%c0_45, %c0_46], %91 {strides = array<i32>} : memref<8x32xf32, #tpu.memory_space<vmem>>, vector<8x32xf32>,
      %c0_47 = arith.constant 0 : index
      %c0_48 = arith.constant 0 : index
      %93 = vector.load %arg6[%c0_47, %c0_48] : memref<8x32xf32, #tpu.memory_space<vmem>>, vector<8x32xf32>
      %c0_49 = arith.constant 0 : index
      %c0_50 = arith.constant 0 : index
      %94 = vector.load %arg15[%c0_49, %c0_50] : memref<8x32xf32, #tpu.memory_space<vmem>>, vector<8x32xf32>
      tpu.vector_store %arg15[%c0_49, %c0_50], %93 {strides = array<i32>} : memref<8x32xf32, #tpu.memory_space<vmem>>, vector<8x32xf32>,
    } else {
    }
    %c0 = arith.constant 0 : index
    %c0_1 = arith.constant 0 : index
    %3 = vector.load %arg14[%c0, %c0_1] : memref<8x32xf32, #tpu.memory_space<vmem>>, vector<8x32xf32>
    %c0_2 = arith.constant 0 : index
    %c0_3 = arith.constant 0 : index
    %4 = vector.load %arg15[%c0_2, %c0_3] : memref<8x32xf32, #tpu.memory_space<vmem>>, vector<8x32xf32>
    %c0_4 = arith.constant 0 : index
    %c0_5 = arith.constant 0 : index
    %5 = vector.load %arg10[%c0_4, %c0_5] : memref<32x384xf32, #tpu.memory_space<vmem>>, vector<32x384xf32>
    %cst = arith.constant dense<0.000000e+00> : vector<8x384xf32>
    %6 = tpu.matmul %3, %5, %cst {dimension_numbers = #tpu.dot_dimension_numbers<[1], [0], [0], [1], [0, 0, 1, 1], [], []>} : vector<8x32xf32>, vector<32x384xf32>, vector<8x384xf32> -> vector<8x384xf32>
    %7 = vector.extract_strided_slice %6 {offsets = [0, 0], sizes = [8, 32], strides = [1, 1]} : vector<8x384xf32> to vector<8x32xf32>
    %8 = vector.extract_strided_slice %6 {offsets = [0, 128], sizes = [8, 32], strides = [1, 1]} : vector<8x384xf32> to vector<8x32xf32>
    %9 = vector.extract_strided_slice %6 {offsets = [0, 256], sizes = [8, 128], strides = [1, 1]} : vector<8x384xf32> to vector<8x128xf32>
    %c0_6 = arith.constant 0 : index
    %c0_7 = arith.constant 0 : index
    %c0_8 = arith.constant 0 : index
    %10 = vector.load %arg3[%c0_6, %c0_7, %c0_8] : memref<8x128x32xf32, #tpu.memory_space<vmem>>, vector<8x128x32xf32>
    %11 = vector.shape_cast %7 : vector<8x32xf32> to vector<8x1x32xf32>
    %12 = vector.broadcast %11 : vector<8x1x32xf32> to vector<8x128x32xf32>
    %13 = arith.addf %10, %12 : vector<8x128x32xf32>
    %14 = math.tanh %13 : vector<8x128x32xf32>
    %c0_9 = arith.constant 0 : index
    %c0_10 = arith.constant 0 : index
    %15 = vector.load %arg7[%c0_9, %c0_10] : memref<1x32xf32, #tpu.memory_space<vmem>>, vector<1x32xf32>
    %16 = vector.shape_cast %15 : vector<1x32xf32> to vector<1x1x32xf32>
    %17 = vector.shape_cast %16 : vector<1x1x32xf32> to vector<1x1x32xf32>
    %18 = vector.broadcast %17 : vector<1x1x32xf32> to vector<8x128x32xf32>
    %19 = arith.mulf %14, %18 : vector<8x128x32xf32>
    %cst_11 = arith.constant dense<0.000000e+00> : vector<8x128xf32>
    %20 = vector.multi_reduction <add>, %19, %cst_11 [2] : vector<8x128x32xf32> to vector<8x128xf32>
    %c0_12 = arith.constant 0 : index
    %c0_13 = arith.constant 0 : index
    %21 = vector.load %arg8[%c0_12, %c0_13] : memref<1x128xf32, #tpu.memory_space<vmem>>, vector<1x128xf32>
    %22 = vector.broadcast %21 : vector<1x128xf32> to vector<8x128xf32>
    %23 = arith.addf %20, %22 : vector<8x128xf32>
    %cst_14 = arith.constant dense<0xFF800000> : vector<8xf32>
    %24 = vector.multi_reduction <maximumf>, %23, %cst_14 [1] : vector<8x128xf32> to vector<8xf32>
    %25 = vector.shape_cast %24 : vector<8xf32> to vector<8x1xf32>
    %26 = vector.broadcast %25 : vector<8x1xf32> to vector<8x128xf32>
    %27 = arith.subf %23, %26 : vector<8x128xf32>
    %28 = math.exp %27 : vector<8x128xf32>
    %cst_15 = arith.constant dense<0.000000e+00> : vector<8xf32>
    %29 = vector.multi_reduction <add>, %28, %cst_15 [1] : vector<8x128xf32> to vector<8xf32>
    %30 = vector.shape_cast %29 : vector<8xf32> to vector<8x1xf32>
    %31 = tpu.reciprocal %30 {approx = true} : vector<8x1xf32> -> vector<8x1xf32>
    %32 = arith.mulf %30, %31 : vector<8x1xf32>
    %cst_16 = arith.constant 2.000000e+00 : f32
    %33 = vector.broadcast %cst_16 : f32 to vector<8x1xf32>
    %34 = arith.subf %33, %32 : vector<8x1xf32>
    %35 = arith.mulf %31, %34 : vector<8x1xf32>
    %36 = vector.broadcast %35 : vector<8x1xf32> to vector<8x128xf32>
    %37 = arith.mulf %28, %36 : vector<8x128xf32>
    %c0_17 = arith.constant 0 : index
    %c0_18 = arith.constant 0 : index
    %c0_19 = arith.constant 0 : index
    %38 = vector.load %arg2[%c0_17, %c0_18, %c0_19] : memref<8x128x32xf32, #tpu.memory_space<vmem>>, vector<8x128x32xf32>
    %39 = vector.shape_cast %37 : vector<8x128xf32> to vector<8x128x1xf32>
    %40 = vector.broadcast %39 : vector<8x128x1xf32> to vector<8x128x32xf32>
    %41 = arith.mulf %38, %40 : vector<8x128x32xf32>
    %cst_20 = arith.constant dense<0.000000e+00> : vector<8x32xf32>
    %42 = vector.multi_reduction <add>, %41, %cst_20 [1] : vector<8x128x32xf32> to vector<8x32xf32>
    %c0_21 = arith.constant 0 : index
    %c0_22 = arith.constant 0 : index
    %43 = vector.load %arg9[%c0_21, %c0_22] : memref<1x32xf32, #tpu.memory_space<vmem>>, vector<1x32xf32>
    %44 = vector.broadcast %43 : vector<1x32xf32> to vector<8x32xf32>
    %45 = arith.addf %8, %44 : vector<8x32xf32>
    %46 = arith.negf %45 : vector<8x32xf32>
    %47 = math.exp %46 : vector<8x32xf32>
    %cst_23 = arith.constant 1.000000e+00 : f32
    %48 = vector.broadcast %cst_23 : f32 to vector<8x32xf32>
    %49 = arith.addf %48, %47 : vector<8x32xf32>
    %50 = arith.divf %48, %49 : vector<8x32xf32>
    %51 = arith.mulf %42, %50 : vector<8x32xf32>
    %c0_24 = arith.constant 0 : index
    %c0_25 = arith.constant 0 : index
    %c0_26 = arith.constant 0 : index
    %52 = vector.load %arg4[%c0_24, %c0_25, %c0_26] : memref<1x8x128xf32, #tpu.memory_space<vmem>>, vector<1x8x128xf32>
    %53 = vector.shape_cast %52 : vector<1x8x128xf32> to vector<8x128xf32>
    %c0_27 = arith.constant 0 : index
    %c0_28 = arith.constant 0 : index
    %54 = vector.load %arg11[%c0_27, %c0_28] : memref<32x128xf32, #tpu.memory_space<vmem>>, vector<32x128xf32>
    %cst_29 = arith.constant dense<0.000000e+00> : vector<8x128xf32>
    %55 = tpu.matmul %51, %54, %cst_29 {dimension_numbers = #tpu.dot_dimension_numbers<[1], [0], [0], [1], [0, 0, 1, 1], [], []>} : vector<8x32xf32>, vector<32x128xf32>, vector<8x128xf32> -> vector<8x128xf32>
    %56 = arith.addf %53, %55 : vector<8x128xf32>
    %57 = arith.addf %56, %9 : vector<8x128xf32>
    %58 = vector.extract_strided_slice %57 {offsets = [0, 0], sizes = [8, 32], strides = [1, 1]} : vector<8x128xf32> to vector<8x32xf32>
    %59 = arith.negf %58 : vector<8x32xf32>
    %60 = math.exp %59 : vector<8x32xf32>
    %cst_30 = arith.constant 1.000000e+00 : f32
    %61 = vector.broadcast %cst_30 : f32 to vector<8x32xf32>
    %62 = arith.addf %61, %60 : vector<8x32xf32>
    %63 = arith.divf %61, %62 : vector<8x32xf32>
    %64 = vector.extract_strided_slice %57 {offsets = [0, 32], sizes = [8, 32], strides = [1, 1]} : vector<8x128xf32> to vector<8x32xf32>
    %65 = arith.negf %64 : vector<8x32xf32>
    %66 = math.exp %65 : vector<8x32xf32>
    %cst_31 = arith.constant 1.000000e+00 : f32
    %67 = vector.broadcast %cst_31 : f32 to vector<8x32xf32>
    %68 = arith.addf %67, %66 : vector<8x32xf32>
    %69 = arith.divf %67, %68 : vector<8x32xf32>
    %70 = vector.extract_strided_slice %57 {offsets = [0, 64], sizes = [8, 32], strides = [1, 1]} : vector<8x128xf32> to vector<8x32xf32>
    %71 = math.tanh %70 : vector<8x32xf32>
    %72 = vector.extract_strided_slice %57 {offsets = [0, 96], sizes = [8, 32], strides = [1, 1]} : vector<8x128xf32> to vector<8x32xf32>
    %73 = arith.negf %72 : vector<8x32xf32>
    %74 = math.exp %73 : vector<8x32xf32>
    %cst_32 = arith.constant 1.000000e+00 : f32
    %75 = vector.broadcast %cst_32 : f32 to vector<8x32xf32>
    %76 = arith.addf %75, %74 : vector<8x32xf32>
    %77 = arith.divf %75, %76 : vector<8x32xf32>
    %78 = arith.mulf %69, %4 : vector<8x32xf32>
    %79 = arith.mulf %63, %71 : vector<8x32xf32>
    %80 = arith.addf %78, %79 : vector<8x32xf32>
    %81 = math.tanh %80 : vector<8x32xf32>
    %82 = arith.mulf %77, %81 : vector<8x32xf32>
    %c0_33 = arith.constant 0 : index
    %c0_34 = arith.constant 0 : index
    %83 = vector.load %arg14[%c0_33, %c0_34] : memref<8x32xf32, #tpu.memory_space<vmem>>, vector<8x32xf32>
    tpu.vector_store %arg14[%c0_33, %c0_34], %82 {strides = array<i32>} : memref<8x32xf32, #tpu.memory_space<vmem>>, vector<8x32xf32>,
    %c0_35 = arith.constant 0 : index
    %c0_36 = arith.constant 0 : index
    %84 = vector.load %arg15[%c0_35, %c0_36] : memref<8x32xf32, #tpu.memory_space<vmem>>, vector<8x32xf32>
    tpu.vector_store %arg15[%c0_35, %c0_36], %80 {strides = array<i32>} : memref<8x32xf32, #tpu.memory_space<vmem>>, vector<8x32xf32>,
    %c0_37 = arith.constant 0 : index
    %c0_38 = arith.constant 0 : index
    %c0_39 = arith.constant 0 : index
    %85 = vector.load %arg12[%c0_37, %c0_38, %c0_39] : memref<1x8x32xf32, #tpu.memory_space<vmem>>, vector<1x8x32xf32>
    %86 = vector.shape_cast %85 : vector<1x8x32xf32> to vector<8x32xf32>
    %87 = vector.shape_cast %82 : vector<8x32xf32> to vector<1x8x32xf32>
    tpu.vector_store %arg12[%c0_37, %c0_38, %c0_39], %87 {strides = array<i32>} : memref<1x8x32xf32, #tpu.memory_space<vmem>>, vector<1x8x32xf32>,
    %c0_40 = arith.constant 0 : index
    %c0_41 = arith.constant 0 : index
    %c0_42 = arith.constant 0 : index
    %88 = vector.load %arg13[%c0_40, %c0_41, %c0_42] : memref<1x8x128xf32, #tpu.memory_space<vmem>>, vector<1x8x128xf32>
    %89 = vector.shape_cast %88 : vector<1x8x128xf32> to vector<8x128xf32>
    %90 = vector.shape_cast %37 : vector<8x128xf32> to vector<1x8x128xf32>
    tpu.vector_store %arg13[%c0_40, %c0_41, %c0_42], %90 {strides = array<i32>} : memref<1x8x128xf32, #tpu.memory_space<vmem>>, vector<1x8x128xf32>,
    return
  }
  func.func @transform_0(%arg0: i32, %arg1: i32) -> (i32, i32, i32) {
    %c0_i32 = arith.constant 0 : i32
    %c0_i32_0 = arith.constant 0 : i32
    %c0_i32_1 = arith.constant 0 : i32
    return %arg0, %c0_i32, %c0_i32_0 : i32, i32, i32
  }
  func.func @transform_1(%arg0: i32, %arg1: i32) -> (i32, i32, i32) {
    %c0_i32 = arith.constant 0 : i32
    %c0_i32_0 = arith.constant 0 : i32
    %c0_i32_1 = arith.constant 0 : i32
    return %arg0, %c0_i32, %c0_i32_0 : i32, i32, i32
  }
  func.func @transform_2(%arg0: i32, %arg1: i32) -> (i32, i32, i32) {
    %c0_i32 = arith.constant 0 : i32
    %c0_i32_0 = arith.constant 0 : i32
    return %arg1, %arg0, %c0_i32 : i32, i32, i32
  }
  func.func @transform_3(%arg0: i32, %arg1: i32) -> (i32, i32) {
    %c0_i32 = arith.constant 0 : i32
    %c0_i32_0 = arith.constant 0 : i32
    return %arg0, %c0_i32 : i32, i32
  }
  func.func @transform_4(%arg0: i32, %arg1: i32) -> (i32, i32) {
    %c0_i32 = arith.constant 0 : i32
    %c0_i32_0 = arith.constant 0 : i32
    return %arg0, %c0_i32 : i32, i32
  }
  func.func @transform_5(%arg0: i32, %arg1: i32) -> (i32, i32) {
    %c0_i32 = arith.constant 0 : i32
    %c0_i32_0 = arith.constant 0 : i32
    %c0_i32_1 = arith.constant 0 : i32
    return %c0_i32, %c0_i32_0 : i32, i32
  }
  func.func @transform_6(%arg0: i32, %arg1: i32) -> (i32, i32) {
    %c0_i32 = arith.constant 0 : i32
    %c0_i32_0 = arith.constant 0 : i32
    %c0_i32_1 = arith.constant 0 : i32
    return %c0_i32, %c0_i32_0 : i32, i32
  }
  func.func @transform_7(%arg0: i32, %arg1: i32) -> (i32, i32) {
    %c0_i32 = arith.constant 0 : i32
    %c0_i32_0 = arith.constant 0 : i32
    %c0_i32_1 = arith.constant 0 : i32
    return %c0_i32, %c0_i32_0 : i32, i32
  }
  func.func @transform_8(%arg0: i32, %arg1: i32) -> (i32, i32) {
    %c0_i32 = arith.constant 0 : i32
    %c0_i32_0 = arith.constant 0 : i32
    %c0_i32_1 = arith.constant 0 : i32
    return %c0_i32, %c0_i32_0 : i32, i32
  }
  func.func @transform_9(%arg0: i32, %arg1: i32) -> (i32, i32) {
    %c0_i32 = arith.constant 0 : i32
    %c0_i32_0 = arith.constant 0 : i32
    %c0_i32_1 = arith.constant 0 : i32
    return %c0_i32, %c0_i32_0 : i32, i32
  }
  func.func @transform_10(%arg0: i32, %arg1: i32) -> (i32, i32, i32) {
    %c0_i32 = arith.constant 0 : i32
    %c0_i32_0 = arith.constant 0 : i32
    return %arg1, %arg0, %c0_i32 : i32, i32, i32
  }
  func.func @transform_11(%arg0: i32, %arg1: i32) -> (i32, i32, i32) {
    %c0_i32 = arith.constant 0 : i32
    %c0_i32_0 = arith.constant 0 : i32
    return %arg1, %arg0, %c0_i32 : i32, i32, i32
  }
}

</mosaic_0001>

<llo_original>
// kernel: tpu_custom_call.1
$region0: #{tpu_custom_call.1}
  #allocation0 [shape = 'u32[]', space=smem, size = 0x4, offset = 0x4, fixed_abs, tag = 'smem constant byte address 0x4 - core index']
  #allocation1 [shape = 'u32[144,128]{1,0:T(1,128)}', space=vmem, size = 0x12000, scoped, tag = 'internal scratch']
  #allocation2 [shape = 'f32[8,32]{1,0:T(8,128)}', space=vmem, size = 0x1000, scoped, tag = 'scratch operand']
  #allocation3 [shape = 'f32[8,32]{1,0:T(8,128)}', space=vmem, size = 0x1000, scoped, tag = 'scratch operand']
  %s0 = inlined_call_operand.hbm [shape: f32[8,128,32], index: 0, kind: input, shape index: {}]
  %s1 = inlined_call_operand.hbm [shape: f32[8,128,32], index: 1, kind: input, shape index: {}]
  %s2 = inlined_call_operand.hbm [shape: f32[8,8,128], index: 2, kind: input, shape index: {}]
  %s3 = inlined_call_operand.hbm [shape: f32[8,32], index: 3, kind: input, shape index: {}]
  %s4 = inlined_call_operand.hbm [shape: f32[8,32], index: 4, kind: input, shape index: {}]
  %s5 = inlined_call_operand.hbm [shape: f32[1,32], index: 5, kind: input, shape index: {}]
  %s6 = inlined_call_operand.hbm [shape: f32[1,128], index: 6, kind: input, shape index: {}]
  %s7 = inlined_call_operand.hbm [shape: f32[1,32], index: 7, kind: input, shape index: {}]
  %s8 = inlined_call_operand.hbm [shape: f32[32,384], index: 8, kind: input, shape index: {}]
  %s9 = inlined_call_operand.hbm [shape: f32[32,128], index: 9, kind: input, shape index: {}]
  %s10 = inlined_call_operand.hbm [shape: f32[8,8,32], index: 10, kind: output, shape index: {0}]
  %s11 = inlined_call_operand.hbm [shape: f32[8,8,128], index: 11, kind: output, shape index: {1}]
  %12 = xla_tuple %s10, %s11
  %s13 = sld [smem:[#allocation0]]
  $region125: #{tpu_custom_call.1} parent=0
    _
  %s15 = ssub.s32 1, %s13
  %s16 = scalar_select 0, %s15, %s13
  $region1: #{tpu_custom_call.1} parent=0
    #allocation4 [shape = 'u8[524288]{0}', space=vmem, size = 0x80000, scoped, tag = 'input window, operand 0, single buffered']
    #allocation5 [shape = 's32[2]{0}', space=sflag, size = 0x8, scoped, tag = 'scoped memory for tpu_custom_call.1']
    #allocation6 [shape = 's32[2]{0}', space=sflag, size = 0x8, scoped, tag = 'scoped memory for tpu_custom_call.1']
    #allocation7 [shape = 'u8[524288]{0}', space=vmem, size = 0x80000, scoped, tag = 'input window, operand 1, single buffered']
    #allocation8 [shape = 's32[1]{0}', space=sflag, size = 0x4, scoped, tag = 'scoped memory for tpu_custom_call.1']
    #allocation9 [shape = 'u8[8192]{0}', space=vmem, size = 0x2000, scoped, tag = 'input window, operand 2']
    #allocation10 [shape = 'u8[4096]{0}', space=vmem, size = 0x1000, scoped, tag = 'input window, operand 3, single buffered']
    #allocation11 [shape = 'u8[4096]{0}', space=vmem, size = 0x1000, scoped, tag = 'input window, operand 4, single buffered']
    #allocation12 [shape = 's32[1]{0}', space=sflag, size = 0x4, scoped, tag = 'scoped memory for tpu_custom_call.1']
    #allocation13 [shape = 'u8[512]{0}', space=vmem, size = 0x400, scoped, tag = 'input window, operand 5, single buffered']
    #allocation14 [shape = 'u8[512]{0}', space=vmem, size = 0x400, scoped, tag = 'input window, operand 6, single buffered']
    #allocation15 [shape = 's32[1]{0}', space=sflag, size = 0x4, scoped, tag = 'scoped memory for tpu_custom_call.1']
    #allocation16 [shape = 'u8[512]{0}', space=vmem, size = 0x400, scoped, tag = 'input window, operand 7, single buffered']
    #allocation17 [shape = 'u8[49152]{0}', space=vmem, size = 0xc000, scoped, tag = 'input window, operand 8, single buffered']
    #allocation18 [shape = 's32[1]{0}', space=sflag, size = 0x4, scoped, tag = 'scoped memory for tpu_custom_call.1']
    #allocation19 [shape = 'u8[16384]{0}', space=vmem, size = 0x4000, scoped, tag = 'input window, operand 9, single buffered']
    #allocation20 [shape = 'u8[8192]{0}', space=vmem, size = 0x2000, scoped, tag = 'output window, operand 0']
    #allocation21 [shape = 'u8[8192]{0}', space=vmem, size = 0x2000, scoped, tag = 'output window, operand 1']
    #allocation22 [shape = 's32[2]{0}', space=sflag, size = 0x8, scoped, tag = 'scoped memory for tpu_custom_call.1']
    %17 = vsyncpa [#allocation5], 0
    %18 = vsyncpa [#allocation8], 0
    %19 = vsyncpa [#allocation12], 0
    %20 = vsyncpa [#allocation15], 0
    %21 = vsyncpa [#allocation18], 0
    %22 = vsyncpa [#allocation6], 0
    %s23 = scalar_lea.sflag [#allocation6], 1
    %24 = vsyncpa %s23, 0
    %25 = vsyncpa [#allocation22], 0
    %s26 = scalar_lea.sflag [#allocation22], 1
    %27 = vsyncpa %s26, 0
    loop: start=0, step=1, limit=10
    $region2: #{tpu_custom_call.1} parent=1 // loop_pre_header
      _
    $region3: #{tpu_custom_call.1} parent=1 // loop_header
      %s29 = sphi 0, %s33
      %p30 = scmp.ge.s32.totalorder %s29, 10
      %s36 = sphi 0, %s48
      %s37 = sphi 0, %s44
      %s38 = sphi 0, %s36
      %s39 = sphi 0, %s37
      %s40 = sphi 0, %s38
      %s41 = sphi 0, %s39
      %s51 = sphi 0, %s53
      %s54 = sphi 0, %s51
      %s55 = sphi 0, %s54
      %s71 = sphi 0, %s55
      %s77 = sphi 0, %s79
      %s80 = sphi 0, %s77
      %s81 = sphi 0, %s80
      %s97 = sphi 0, %s81
      %s105 = sphi 0, %s107
      %s108 = sphi 0, %s105
      %s109 = sphi 0, %s108
      %s125 = sphi 0, %s109
      %s131 = sphi 0, %s133
      %s134 = sphi 0, %s131
      %s135 = sphi 0, %s134
      %s151 = sphi 0, %s135
      %s157 = sphi 0, %s159
      %s160 = sphi 0, %s157
      %s161 = sphi 0, %s160
      %s177 = sphi 0, %s161
      %s181 = sphi 0, %s181
      %s183 = sphi 0, %s181
      %s184 = sphi 0, %s183
      %s198 = sphi 0, %s184
      %s202 = sphi 0, %s202
      %s204 = sphi 0, %s202
      %s205 = sphi 0, %s204
      %s219 = sphi 0, %s205
      %s223 = sphi 0, %s223
      %s225 = sphi 0, %s223
      %s226 = sphi 0, %s225
      %s240 = sphi 0, %s226
      %s244 = sphi 0, %s244
      %s246 = sphi 0, %s244
      %s247 = sphi 0, %s246
      %s261 = sphi 0, %s247
      %s265 = sphi 0, %s265
      %s267 = sphi 0, %s265
      %s268 = sphi 0, %s267
      %s282 = sphi 0, %s268
      %s290 = sphi 0, %s292
      %s293 = sphi 0, %s290
      %s294 = sphi 0, %s293
      %s310 = sphi 0, %s294
      %s318 = sphi 0, %s320
      %s321 = sphi 0, %s318
      %s322 = sphi 0, %s321
      %s338 = sphi 0, %s322
    $region4: #{tpu_custom_call.1} parent=1 // loop_header_branch
      %32 = sbr.rel (%p30) target = $region8
    $region5: #{tpu_custom_call.1} parent=1 // loop_body
      %s34 = ssub.s32 %s29, 1
      %s35 = ssub.s32 %s29, 2
      %s42 = sadd.s32 1, %s37
      %p43 = scmp.ge.s32.totalorder %s42, 8
      %s44 = scalar_select %p43, 0, %s42
      %s45 = sadd.s32 1, %s36
      %s46 = scalar_select %p43, %s45, %s36
      %p47 = scmp.ge.s32.totalorder %s46, 1
      %s48 = scalar_select %p47, 0, %s46
      %s49 = ssub.s32 %s36, %s48
      %p50 = scmp.eq.s32.totalorder %s49, 0
      %s52 = sadd.s32 %s51, 1
      %s53 = scalar_select %p50, %s51, %s52
      %p56 = pneg %p50
      %p57 = scmp.eq.s32.totalorder %s29, 7
      %p58 = por %p56, %p57
      %p59 = scmp.ne.s32.totalorder %s51, %s54
      %p60 = scmp.eq.s32.totalorder %s29, 0
      %p61 = por %p59, %p60
      %p62 = scmp.ne.s32.totalorder %s51, %s54
      %p63 = scmp.eq.s32.totalorder %s34, 7
      %p64 = por %p62, %p63
      %p65 = scmp.ne.s32.totalorder %s54, %s55
      %p66 = scmp.eq.s32.totalorder %s34, 0
      %p67 = por %p65, %p66
      %p68 = scmp.ne.s32.totalorder %s54, %s55
      %p69 = scmp.eq.s32.totalorder %s35, 7
      %p70 = por %p68, %p69
      %p72 = scmp.ne.s32.totalorder %s55, %s71
      %p73 = scmp.eq.s32.totalorder %s35, 0
      %p74 = por %p72, %p73
      %s75 = ssub.s32 %s36, %s48
      %p76 = scmp.eq.s32.totalorder %s75, 0
      %s78 = sadd.s32 %s77, 1
      %s79 = scalar_select %p76, %s77, %s78
      %p82 = pneg %p76
      %p83 = scmp.eq.s32.totalorder %s29, 7
      %p84 = por %p82, %p83
      %p85 = scmp.ne.s32.totalorder %s77, %s80
      %p86 = scmp.eq.s32.totalorder %s29, 0
      %p87 = por %p85, %p86
      %p88 = scmp.ne.s32.totalorder %s77, %s80
      %p89 = scmp.eq.s32.totalorder %s34, 7
      %p90 = por %p88, %p89
      %p91 = scmp.ne.s32.totalorder %s80, %s81
      %p92 = scmp.eq.s32.totalorder %s34, 0
      %p93 = por %p91, %p92
      %p94 = scmp.ne.s32.totalorder %s80, %s81
      %p95 = scmp.eq.s32.totalorder %s35, 7
      %p96 = por %p94, %p95
      %p98 = scmp.ne.s32.totalorder %s81, %s97
      %p99 = scmp.eq.s32.totalorder %s35, 0
      %p100 = por %p98, %p99
      %s101 = ssub.s32 %s37, %s44
      %s102 = ssub.s32 %s36, %s48
      %s103 = sor.u32 %s101, %s102
      %p104 = scmp.eq.s32.totalorder %s103, 0
      %s106 = sadd.s32 %s105, 1
      %s107 = scalar_select %p104, %s105, %s106
      %p110 = pneg %p104
      %p111 = scmp.eq.s32.totalorder %s29, 7
      %p112 = por %p110, %p111
      %p113 = scmp.ne.s32.totalorder %s105, %s108
      %p114 = scmp.eq.s32.totalorder %s29, 0
      %p115 = por %p113, %p114
      %p116 = scmp.ne.s32.totalorder %s105, %s108
      %p117 = scmp.eq.s32.totalorder %s34, 7
      %p118 = por %p116, %p117
      %p119 = scmp.ne.s32.totalorder %s108, %s109
      %p120 = scmp.eq.s32.totalorder %s34, 0
      %p121 = por %p119, %p120
      %p122 = scmp.ne.s32.totalorder %s108, %s109
      %p123 = scmp.eq.s32.totalorder %s35, 7
      %p124 = por %p122, %p123
      %p126 = scmp.ne.s32.totalorder %s109, %s125
      %p127 = scmp.eq.s32.totalorder %s35, 0
      %p128 = por %p126, %p127
      %s129 = ssub.s32 %s36, %s48
      %p130 = scmp.eq.s32.totalorder %s129, 0
      %s132 = sadd.s32 %s131, 1
      %s133 = scalar_select %p130, %s131, %s132
      %p136 = pneg %p130
      %p137 = scmp.eq.s32.totalorder %s29, 7
      %p138 = por %p136, %p137
      %p139 = scmp.ne.s32.totalorder %s131, %s134
      %p140 = scmp.eq.s32.totalorder %s29, 0
      %p141 = por %p139, %p140
      %p142 = scmp.ne.s32.totalorder %s131, %s134
      %p143 = scmp.eq.s32.totalorder %s34, 7
      %p144 = por %p142, %p143
      %p145 = scmp.ne.s32.totalorder %s134, %s135
      %p146 = scmp.eq.s32.totalorder %s34, 0
      %p147 = por %p145, %p146
      %p148 = scmp.ne.s32.totalorder %s134, %s135
      %p149 = scmp.eq.s32.totalorder %s35, 7
      %p150 = por %p148, %p149
      %p152 = scmp.ne.s32.totalorder %s135, %s151
      %p153 = scmp.eq.s32.totalorder %s35, 0
      %p154 = por %p152, %p153
      %s155 = ssub.s32 %s36, %s48
      %p156 = scmp.eq.s32.totalorder %s155, 0
      %s158 = sadd.s32 %s157, 1
      %s159 = scalar_select %p156, %s157, %s158
      %p162 = pneg %p156
      %p163 = scmp.eq.s32.totalorder %s29, 7
      %p164 = por %p162, %p163
      %p165 = scmp.ne.s32.totalorder %s157, %s160
      %p166 = scmp.eq.s32.totalorder %s29, 0
      %p167 = por %p165, %p166
      %p168 = scmp.ne.s32.totalorder %s157, %s160
      %p169 = scmp.eq.s32.totalorder %s34, 7
      %p170 = por %p168, %p169
      %p171 = scmp.ne.s32.totalorder %s160, %s161
      %p172 = scmp.eq.s32.totalorder %s34, 0
      %p173 = por %p171, %p172
      %p174 = scmp.ne.s32.totalorder %s160, %s161
      %p175 = scmp.eq.s32.totalorder %s35, 7
      %p176 = por %p174, %p175
      %p178 = scmp.ne.s32.totalorder %s161, %s177
      %p179 = scmp.eq.s32.totalorder %s35, 0
      %p180 = por %p178, %p179
      %s182 = sadd.s32 %s181, 1
      %p185 = scmp.eq.s32.totalorder %s29, 7
      %p186 = scmp.ne.s32.totalorder %s181, %s183
      %p187 = scmp.eq.s32.totalorder %s29, 0
      %p188 = por %p186, %p187
      %p189 = scmp.ne.s32.totalorder %s181, %s183
      %p190 = scmp.eq.s32.totalorder %s34, 7
      %p191 = por %p189, %p190
      %p192 = scmp.ne.s32.totalorder %s183, %s184
      %p193 = scmp.eq.s32.totalorder %s34, 0
      %p194 = por %p192, %p193
      %p195 = scmp.ne.s32.totalorder %s183, %s184
      %p196 = scmp.eq.s32.totalorder %s35, 7
      %p197 = por %p195, %p196
      %p199 = scmp.ne.s32.totalorder %s184, %s198
      %p200 = scmp.eq.s32.totalorder %s35, 0
      %p201 = por %p199, %p200
      %s203 = sadd.s32 %s202, 1
      %p206 = scmp.eq.s32.totalorder %s29, 7
      %p207 = scmp.ne.s32.totalorder %s202, %s204
      %p208 = scmp.eq.s32.totalorder %s29, 0
      %p209 = por %p207, %p208
      %p210 = scmp.ne.s32.totalorder %s202, %s204
      %p211 = scmp.eq.s32.totalorder %s34, 7
      %p212 = por %p210, %p211
      %p213 = scmp.ne.s32.totalorder %s204, %s205
      %p214 = scmp.eq.s32.totalorder %s34, 0
      %p215 = por %p213, %p214
      %p216 = scmp.ne.s32.totalorder %s204, %s205
      %p217 = scmp.eq.s32.totalorder %s35, 7
      %p218 = por %p216, %p217
      %p220 = scmp.ne.s32.totalorder %s205, %s219
      %p221 = scmp.eq.s32.totalorder %s35, 0
      %p222 = por %p220, %p221
      %s224 = sadd.s32 %s223, 1
      %p227 = scmp.eq.s32.totalorder %s29, 7
      %p228 = scmp.ne.s32.totalorder %s223, %s225
      %p229 = scmp.eq.s32.totalorder %s29, 0
      %p230 = por %p228, %p229
      %p231 = scmp.ne.s32.totalorder %s223, %s225
      %p232 = scmp.eq.s32.totalorder %s34, 7
      %p233 = por %p231, %p232
      %p234 = scmp.ne.s32.totalorder %s225, %s226
      %p235 = scmp.eq.s32.totalorder %s34, 0
      %p236 = por %p234, %p235
      %p237 = scmp.ne.s32.totalorder %s225, %s226
      %p238 = scmp.eq.s32.totalorder %s35, 7
      %p239 = por %p237, %p238
      %p241 = scmp.ne.s32.totalorder %s226, %s240
      %p242 = scmp.eq.s32.totalorder %s35, 0
      %p243 = por %p241, %p242
      %s245 = sadd.s32 %s244, 1
      %p248 = scmp.eq.s32.totalorder %s29, 7
      %p249 = scmp.ne.s32.totalorder %s244, %s246
      %p250 = scmp.eq.s32.totalorder %s29, 0
      %p251 = por %p249, %p250
      %p252 = scmp.ne.s32.totalorder %s244, %s246
      %p253 = scmp.eq.s32.totalorder %s34, 7
      %p254 = por %p252, %p253
      %p255 = scmp.ne.s32.totalorder %s246, %s247
      %p256 = scmp.eq.s32.totalorder %s34, 0
      %p257 = por %p255, %p256
      %p258 = scmp.ne.s32.totalorder %s246, %s247
      %p259 = scmp.eq.s32.totalorder %s35, 7
      %p260 = por %p258, %p259
      %p262 = scmp.ne.s32.totalorder %s247, %s261
      %p263 = scmp.eq.s32.totalorder %s35, 0
      %p264 = por %p262, %p263
      %s266 = sadd.s32 %s265, 1
      %p269 = scmp.eq.s32.totalorder %s29, 7
      %p270 = scmp.ne.s32.totalorder %s265, %s267
      %p271 = scmp.eq.s32.totalorder %s29, 0
      %p272 = por %p270, %p271
      %p273 = scmp.ne.s32.totalorder %s265, %s267
      %p274 = scmp.eq.s32.totalorder %s34, 7
      %p275 = por %p273, %p274
      %p276 = scmp.ne.s32.totalorder %s267, %s268
      %p277 = scmp.eq.s32.totalorder %s34, 0
      %p278 = por %p276, %p277
      %p279 = scmp.ne.s32.totalorder %s267, %s268
      %p280 = scmp.eq.s32.totalorder %s35, 7
      %p281 = por %p279, %p280
      %p283 = scmp.ne.s32.totalorder %s268, %s282
      %p284 = scmp.eq.s32.totalorder %s35, 0
      %p285 = por %p283, %p284
      %s286 = ssub.s32 %s37, %s44
      %s287 = ssub.s32 %s36, %s48
      %s288 = sor.u32 %s286, %s287
      %p289 = scmp.eq.s32.totalorder %s288, 0
      %s291 = sadd.s32 %s290, 1
      %s292 = scalar_select %p289, %s290, %s291
      %p295 = pneg %p289
      %p296 = scmp.eq.s32.totalorder %s29, 7
      %p297 = por %p295, %p296
      %p298 = scmp.ne.s32.totalorder %s290, %s293
      %p299 = scmp.eq.s32.totalorder %s29, 0
      %p300 = por %p298, %p299
      %p301 = scmp.ne.s32.totalorder %s290, %s293
      %p302 = scmp.eq.s32.totalorder %s34, 7
      %p303 = por %p301, %p302
      %p304 = scmp.ne.s32.totalorder %s293, %s294
      %p305 = scmp.eq.s32.totalorder %s34, 0
      %p306 = por %p304, %p305
      %p307 = scmp.ne.s32.totalorder %s293, %s294
      %p308 = scmp.eq.s32.totalorder %s35, 7
      %p309 = por %p307, %p308
      %p311 = scmp.ne.s32.totalorder %s294, %s310
      %p312 = scmp.eq.s32.totalorder %s35, 0
      %p313 = por %p311, %p312
      %s314 = ssub.s32 %s37, %s44
      %s315 = ssub.s32 %s36, %s48
      %s316 = sor.u32 %s314, %s315
      %p317 = scmp.eq.s32.totalorder %s316, 0
      %s319 = sadd.s32 %s318, 1
      %s320 = scalar_select %p317, %s318, %s319
      %p323 = pneg %p317
      %p324 = scmp.eq.s32.totalorder %s29, 7
      %p325 = por %p323, %p324
      %p326 = scmp.ne.s32.totalorder %s318, %s321
      %p327 = scmp.eq.s32.totalorder %s29, 0
      %p328 = por %p326, %p327
      %p329 = scmp.ne.s32.totalorder %s318, %s321
      %p330 = scmp.eq.s32.totalorder %s34, 7
      %p331 = por %p329, %p330
      %p332 = scmp.ne.s32.totalorder %s321, %s322
      %p333 = scmp.eq.s32.totalorder %s34, 0
      %p334 = por %p332, %p333
      %p335 = scmp.ne.s32.totalorder %s321, %s322
      %p336 = scmp.eq.s32.totalorder %s35, 7
      %p337 = por %p335, %p336
      %p339 = scmp.ne.s32.totalorder %s322, %s338
      %p340 = scmp.eq.s32.totalorder %s35, 0
      %p341 = por %p339, %p340
      %p342 = scmp.le.s32.totalorder 1, %s29
      %p343 = scmp.lt.s32.totalorder %s29, 9
      %p344 = pnand %p342, %p343
      %p345 = pneg %p344
      // Predicated region
      $region9: #{tpu_custom_call.1} parent=5 // pred_check
        _
      $region10: #{tpu_custom_call.1} parent=5 // pred_check_branch
        %347 = sbr.rel (%p344) target = $region12
      $region11: #{tpu_custom_call.1} parent=5 // pred_region
        %s348 = ssub.s32 %s29, 1
        // Predicated region
        $region13: #{tpu_custom_call.1} parent=11 // pred_check
          %p349 = pneg %p67
        $region14: #{tpu_custom_call.1} parent=11 // pred_check_branch
          %351 = sbr.rel (%p349) target = $region16
        $region15: #{tpu_custom_call.1} parent=11 // pred_region
          %s352 = smul.u32 8, %s38
          %s354 = ssub.s32 16384, 16384
          %355 = vsyncadd [#allocation5], %s354
          %s356 = smul.addr %s352, 16
          %s357 = smul.addr %s356, 128
          %s358 = scalar_lea.hbm %s0, %s357
          %s359 = sshll.u32 [#allocation4], 4
          %s360 = int_to_ptr.vmem [resolvable:$true] %s359
          %365 = dma.hbm_to_vmem [thread:$0]  %s358, 16384, %s360, [#allocation5], 128, 128, 8
        $region16: #{tpu_custom_call.1} parent=11 // pred_fallthru
          _
        // Predicated region
        $region17: #{tpu_custom_call.1} parent=11 // pred_check
          %p366 = pneg %p93
        $region18: #{tpu_custom_call.1} parent=11 // pred_check_branch
          %368 = sbr.rel (%p366) target = $region20
        $region19: #{tpu_custom_call.1} parent=11 // pred_region
          %s369 = smul.u32 8, %s38
          %s371 = ssub.s32 16384, 16384
          %372 = vsyncadd [#allocation8], %s371
          %s373 = smul.addr %s369, 16
          %s374 = smul.addr %s373, 128
          %s375 = scalar_lea.hbm %s1, %s374
          %s376 = sshll.u32 [#allocation7], 4
          %s377 = int_to_ptr.vmem [resolvable:$true] %s376
          %382 = dma.hbm_to_vmem [thread:$0]  %s375, 16384, %s377, [#allocation8], 128, 128, 8
        $region20: #{tpu_custom_call.1} parent=11 // pred_fallthru
          _
        // Predicated region
        $region21: #{tpu_custom_call.1} parent=11 // pred_check
          %p383 = pneg %p147
        $region22: #{tpu_custom_call.1} parent=11 // pred_check_branch
          %385 = sbr.rel (%p383) target = $region24
        $region23: #{tpu_custom_call.1} parent=11 // pred_region
          %s387 = ssub.s32 128, 128
          %388 = vsyncadd [#allocation8], %s387
          %s389 = smul.addr %s38, 128
          %s390 = scalar_lea.hbm %s3, %s389
          %s392 = sshll.u32 [#allocation10], 4
          %s393 = int_to_ptr.vmem [resolvable:$true] %s392
          %395 = dma.hbm_to_vmem [thread:$0]  %s390, 128, %s393, [#allocation8]
        $region24: #{tpu_custom_call.1} parent=11 // pred_fallthru
          _
        // Predicated region
        $region25: #{tpu_custom_call.1} parent=11 // pred_check
          %p396 = pneg %p173
        $region26: #{tpu_custom_call.1} parent=11 // pred_check_branch
          %398 = sbr.rel (%p396) target = $region28
        $region27: #{tpu_custom_call.1} parent=11 // pred_region
          %s400 = ssub.s32 128, 128
          %401 = vsyncadd [#allocation12], %s400
          %s402 = smul.addr %s38, 128
          %s403 = scalar_lea.hbm %s4, %s402
          %s405 = sshll.u32 [#allocation11], 4
          %s406 = int_to_ptr.vmem [resolvable:$true] %s405
          %408 = dma.hbm_to_vmem [thread:$0]  %s403, 128, %s406, [#allocation12]
        $region28: #{tpu_custom_call.1} parent=11 // pred_fallthru
          _
        // Predicated region
        $region29: #{tpu_custom_call.1} parent=11 // pred_check
          %p409 = pneg %p194
        $region30: #{tpu_custom_call.1} parent=11 // pred_check_branch
          %411 = sbr.rel (%p409) target = $region32
        $region31: #{tpu_custom_call.1} parent=11 // pred_region
          %s413 = ssub.s32 16, 16
          %414 = vsyncadd [#allocation12], %s413
          %s416 = sshll.u32 [#allocation13], 4
          %s417 = int_to_ptr.vmem [resolvable:$true] %s416
          %419 = dma.hbm_to_vmem [thread:$0]  %s5, 16, %s417, [#allocation12]
        $region32: #{tpu_custom_call.1} parent=11 // pred_fallthru
          _
        // Predicated region
        $region33: #{tpu_custom_call.1} parent=11 // pred_check
          %p420 = pneg %p215
        $region34: #{tpu_custom_call.1} parent=11 // pred_check_branch
          %422 = sbr.rel (%p420) target = $region36
        $region35: #{tpu_custom_call.1} parent=11 // pred_region
          %s424 = ssub.s32 16, 16
          %425 = vsyncadd [#allocation15], %s424
          %s427 = sshll.u32 [#allocation14], 4
          %s428 = int_to_ptr.vmem [resolvable:$true] %s427
          %430 = dma.hbm_to_vmem [thread:$0]  %s6, 16, %s428, [#allocation15]
        $region36: #{tpu_custom_call.1} parent=11 // pred_fallthru
          _
        // Predicated region
        $region37: #{tpu_custom_call.1} parent=11 // pred_check
          %p431 = pneg %p236
        $region38: #{tpu_custom_call.1} parent=11 // pred_check_branch
          %433 = sbr.rel (%p431) target = $region40
        $region39: #{tpu_custom_call.1} parent=11 // pred_region
          %s435 = ssub.s32 16, 16
          %436 = vsyncadd [#allocation15], %s435
          %s438 = sshll.u32 [#allocation16], 4
          %s439 = int_to_ptr.vmem [resolvable:$true] %s438
          %441 = dma.hbm_to_vmem [thread:$0]  %s7, 16, %s439, [#allocation15]
        $region40: #{tpu_custom_call.1} parent=11 // pred_fallthru
          _
        // Predicated region
        $region41: #{tpu_custom_call.1} parent=11 // pred_check
          %p442 = pneg %p257
        $region42: #{tpu_custom_call.1} parent=11 // pred_check_branch
          %444 = sbr.rel (%p442) target = $region44
        $region43: #{tpu_custom_call.1} parent=11 // pred_region
          %s446 = ssub.s32 1536, 1536
          %447 = vsyncadd [#allocation18], %s446
          %s448 = sshll.u32 [#allocation17], 4
          %s449 = int_to_ptr.vmem [resolvable:$true] %s448
          %454 = dma.hbm_to_vmem [thread:$0]  %s8, 1536, %s449, [#allocation18], 384, 384, 24
        $region44: #{tpu_custom_call.1} parent=11 // pred_fallthru
          _
        // Predicated region
        $region45: #{tpu_custom_call.1} parent=11 // pred_check
          %p455 = pneg %p278
        $region46: #{tpu_custom_call.1} parent=11 // pred_check_branch
          %457 = sbr.rel (%p455) target = $region48
        $region47: #{tpu_custom_call.1} parent=11 // pred_region
          %s459 = ssub.s32 512, 512
          %460 = vsyncadd [#allocation18], %s459
          %s461 = sshll.u32 [#allocation19], 4
          %s462 = int_to_ptr.vmem [resolvable:$true] %s461
          %467 = dma.hbm_to_vmem [thread:$0]  %s9, 512, %s462, [#allocation18], 128, 128, 8
        $region48: #{tpu_custom_call.1} parent=11 // pred_fallthru
          _
      $region12: #{tpu_custom_call.1} parent=5 // pred_fallthru
        _
      %p468 = scmp.lt.s32.totalorder %s29, 8
      // Predicated region
      $region49: #{tpu_custom_call.1} parent=5 // pred_check
        %p469 = pneg %p468
      $region50: #{tpu_custom_call.1} parent=5 // pred_check_branch
        %471 = sbr.rel (%p469) target = $region52
      $region51: #{tpu_custom_call.1} parent=5 // pred_region
        // Predicated region
        $region53: #{tpu_custom_call.1} parent=51 // pred_check
          %p472 = pneg %p115
        $region54: #{tpu_custom_call.1} parent=51 // pred_check_branch
          %474 = sbr.rel (%p472) target = $region56
        $region55: #{tpu_custom_call.1} parent=51 // pred_region
          %s475 = sand.u32 %s29, 1
          %s476 = scalar_lea.sflag [#allocation5], %s475
          %s477 = sand.u32 %s105, 1
          %s478 = smul.addr %s477, 8
          %s479 = scalar_lea.vmem [#allocation9], %s478
          %s481 = ssub.s32 128, 128
          %482 = vsyncadd %s476, %s481
          %s483 = sadd.s32 %s36, %s37
          %s484 = smul.addr %s483, 128
          %s485 = scalar_lea.hbm %s2, %s484
          %s487 = sshll.u32 %s479, 4
          %s488 = int_to_ptr.vmem [resolvable:$true] %s487
          %490 = dma.hbm_to_vmem [thread:$0]  %s485, 128, %s488, %s476
        $region56: #{tpu_custom_call.1} parent=51 // pred_fallthru
          _
      $region52: #{tpu_custom_call.1} parent=5 // pred_fallthru
        _
      %p491 = scmp.le.s32.totalorder 1, %s29
      %p492 = scmp.lt.s32.totalorder %s29, 9
      %p493 = pnand %p491, %p492
      %p494 = pneg %p493
      // Predicated region
      $region57: #{tpu_custom_call.1} parent=5 // pred_check
        _
      $region58: #{tpu_custom_call.1} parent=5 // pred_check_branch
        %496 = sbr.rel (%p493) target = $region60
      $region59: #{tpu_custom_call.1} parent=5 // pred_region
        %s497 = ssub.s32 %s29, 1
        // Predicated region
        $region61: #{tpu_custom_call.1} parent=59 // pred_check
          %p498 = pneg %p67
        $region62: #{tpu_custom_call.1} parent=59 // pred_check_branch
          %500 = sbr.rel (%p498) target = $region64
        $region63: #{tpu_custom_call.1} parent=59 // pred_region
          %501 = dma.done [#allocation5], 16384
        $region64: #{tpu_custom_call.1} parent=59 // pred_fallthru
          _
        // Predicated region
        $region65: #{tpu_custom_call.1} parent=59 // pred_check
          %p502 = pneg %p93
        $region66: #{tpu_custom_call.1} parent=59 // pred_check_branch
          %504 = sbr.rel (%p502) target = $region68
        $region67: #{tpu_custom_call.1} parent=59 // pred_region
          %505 = dma.done [#allocation8], 16384
        $region68: #{tpu_custom_call.1} parent=59 // pred_fallthru
          _
        %s506 = sand.u32 %s34, 1
        %s507 = scalar_lea.sflag [#allocation5], %s506
        %s508 = sand.u32 %s108, 1
        %s509 = smul.addr %s508, 8
        %s510 = scalar_lea.vmem [#allocation9], %s509
        // Predicated region
        $region69: #{tpu_custom_call.1} parent=59 // pred_check
          %p511 = pneg %p121
        $region70: #{tpu_custom_call.1} parent=59 // pred_check_branch
          %513 = sbr.rel (%p511) target = $region72
        $region71: #{tpu_custom_call.1} parent=59 // pred_region
          %514 = dma.done %s507, 128
        $region72: #{tpu_custom_call.1} parent=59 // pred_fallthru
          _
        // Predicated region
        $region73: #{tpu_custom_call.1} parent=59 // pred_check
          %p515 = pneg %p147
        $region74: #{tpu_custom_call.1} parent=59 // pred_check_branch
          %517 = sbr.rel (%p515) target = $region76
        $region75: #{tpu_custom_call.1} parent=59 // pred_region
          %518 = dma.done [#allocation8], 128
        $region76: #{tpu_custom_call.1} parent=59 // pred_fallthru
          _
        // Predicated region
        $region77: #{tpu_custom_call.1} parent=59 // pred_check
          %p519 = pneg %p173
        $region78: #{tpu_custom_call.1} parent=59 // pred_check_branch
          %521 = sbr.rel (%p519) target = $region80
        $region79: #{tpu_custom_call.1} parent=59 // pred_region
          %522 = dma.done [#allocation12], 128
        $region80: #{tpu_custom_call.1} parent=59 // pred_fallthru
          _
        // Predicated region
        $region81: #{tpu_custom_call.1} parent=59 // pred_check
          %p523 = pneg %p194
        $region82: #{tpu_custom_call.1} parent=59 // pred_check_branch
          %525 = sbr.rel (%p523) target = $region84
        $region83: #{tpu_custom_call.1} parent=59 // pred_region
          %526 = dma.done [#allocation12], 16
        $region84: #{tpu_custom_call.1} parent=59 // pred_fallthru
          _
        // Predicated region
        $region85: #{tpu_custom_call.1} parent=59 // pred_check
          %p527 = pneg %p215
        $region86: #{tpu_custom_call.1} parent=59 // pred_check_branch
          %529 = sbr.rel (%p527) target = $region88
        $region87: #{tpu_custom_call.1} parent=59 // pred_region
          %530 = dma.done [#allocation15], 16
        $region88: #{tpu_custom_call.1} parent=59 // pred_fallthru
          _
        // Predicated region
        $region89: #{tpu_custom_call.1} parent=59 // pred_check
          %p531 = pneg %p236
        $region90: #{tpu_custom_call.1} parent=59 // pred_check_branch
          %533 = sbr.rel (%p531) target = $region92
        $region91: #{tpu_custom_call.1} parent=59 // pred_region
          %534 = dma.done [#allocation15], 16
        $region92: #{tpu_custom_call.1} parent=59 // pred_fallthru
          _
        // Predicated region
        $region93: #{tpu_custom_call.1} parent=59 // pred_check
          %p535 = pneg %p257
        $region94: #{tpu_custom_call.1} parent=59 // pred_check_branch
          %537 = sbr.rel (%p535) target = $region96
        $region95: #{tpu_custom_call.1} parent=59 // pred_region
          %538 = dma.done [#allocation18], 1536
        $region96: #{tpu_custom_call.1} parent=59 // pred_fallthru
          _
        // Predicated region
        $region97: #{tpu_custom_call.1} parent=59 // pred_check
          %p539 = pneg %p278
        $region98: #{tpu_custom_call.1} parent=59 // pred_check_branch
          %541 = sbr.rel (%p539) target = $region100
        $region99: #{tpu_custom_call.1} parent=59 // pred_region
          %542 = dma.done [#allocation18], 512
        $region100: #{tpu_custom_call.1} parent=59 // pred_fallthru
          _
        %p543 = pneg %p67
        %p544 = pneg %p64
        %p545 = pneg %p93
        %p546 = pneg %p90
        %s547 = sand.u32 %s34, 1
        %s548 = scalar_lea.sflag [#allocation5], %s547
        %s549 = sand.u32 %s108, 1
        %s550 = smul.addr %s549, 8
        %s551 = scalar_lea.vmem [#allocation9], %s550
        %p552 = pneg %p121
        %p553 = pneg %p118
        %p554 = pneg %p147
        %p555 = pneg %p144
        %p556 = pneg %p173
        %p557 = pneg %p170
        %p558 = pneg %p194
        %p559 = pneg %p191
        %p560 = pneg %p215
        %p561 = pneg %p212
        %p562 = pneg %p236
        %p563 = pneg %p233
        %p564 = pneg %p257
        %p565 = pneg %p254
        %p566 = pneg %p278
        %p567 = pneg %p275
        %p568 = pneg %p306
        %p569 = pneg %p303
        %s570 = sand.u32 %s293, 1
        %s571 = scalar_lea.sflag [#allocation6], %s570
        %s572 = sand.u32 %s293, 1
        %s573 = smul.addr %s572, 8
        %s574 = scalar_lea.vmem [#allocation20], %s573
        %p575 = pneg %p334
        %p576 = pneg %p331
        %s577 = sand.u32 %s321, 1
        %s578 = scalar_lea.sflag [#allocation22], %s577
        %s579 = sand.u32 %s321, 1
        %s580 = smul.addr %s579, 8
        %s581 = scalar_lea.vmem [#allocation21], %s580
        %s582 = smul.u32 8, %s38
        %s583 = smul.u32 8, %s38
        %p584 = scmp.eq.s32.totalorder %s39, 0
        // Predicated region
        $region101: #{tpu_custom_call.1} parent=59 // pred_check
          %p585 = pneg %p584
        $region102: #{tpu_custom_call.1} parent=59 // pred_check_branch
          %587 = sbr.rel (%p585) target = $region104
        $region103: #{tpu_custom_call.1} parent=59 // pred_region
          %v588 = vld [vmem:[#allocation10] sm:$0xff]
          %vm589 = vcmask 261120
          %590 = vst.msk [vmem:[#allocation2] sm:$0xff] %vm589, %v588
          %v591 = vld [vmem:[#allocation11] sm:$0xff]
          %592 = vst.msk [vmem:[#allocation3] sm:$0xff] %vm589, %v591
        $region104: #{tpu_custom_call.1} parent=59 // pred_fallthru
          _
        %v593 = vld [vmem:[#allocation2] sm:$0xff]
        %v594 = vld [vmem:[#allocation3] sm:$0xff]
        %v595 = vld [vmem:[#allocation17] sm:$0xff]
        %v596 = vld [vmem:[#allocation17 + $0x8] sm:$0xff]
        %v597 = vld [vmem:[#allocation17 + $0x10] sm:$0xff]
        %v598 = vld [vmem:[#allocation17 + $0x18] sm:$0xff]
        %v599 = vld [vmem:[#allocation17 + $0x20] sm:$0xff]
        %v600 = vld [vmem:[#allocation17 + $0x28] sm:$0xff]
        %v601 = vld [vmem:[#allocation17 + $0x30] sm:$0xff]
        %v602 = vld [vmem:[#allocation17 + $0x38] sm:$0xff]
        %v603 = vld [vmem:[#allocation17 + $0x40] sm:$0xff]
        %v604 = vld [vmem:[#allocation17 + $0x48] sm:$0xff]
        %v605 = vld [vmem:[#allocation17 + $0x50] sm:$0xff]
        %v606 = vld [vmem:[#allocation17 + $0x58] sm:$0xff]
        %vm607 = vcmask 261120
        %v609 = vsel %vm607, %v593, 0
        %611 = vmatprep.subr.mxu0 %v596
        %612 = vmatpush1.msra.mxu0 %v595
        %613 = vmatprep.subr.mxu0 %v599
        %614 = vmatpush1.msra.mxu0 %v598
        %615 = vmatprep.subr.mxu0 %v602
        %616 = vmatpush1.msra.mxu0 %v601
        %617 = vmatprep.subr.mxu0 %v605
        %618 = vmatpush1.msra.mxu0 %v604
        %619 = vmatprep.subr.mxu0 0.0
        %620 = vmatpush1.msra.mxu0 0.0
        %621 = vmatprep.subr.mxu0 0.0
        %622 = vmatpush1.msra.mxu0 0.0
        %623 = vmatprep.subr.mxu0 0.0
        %624 = vmatpush1.msra.mxu0 0.0
        %625 = vmatprep.subr.mxu0 0.0
        %626 = vmatpush1.msra.mxu0 0.0
        %627 = vmatprep.subr.mxu0 0.0
        %628 = vmatpush1.msra.mxu0 0.0
        %629 = vmatprep.subr.mxu0 0.0
        %630 = vmatpush1.msra.mxu0 0.0
        %631 = vmatprep.subr.mxu0 0.0
        %632 = vmatpush1.msra.mxu0 0.0
        %633 = vmatprep.subr.mxu0 0.0
        %634 = vmatpush1.msra.mxu0 0.0
        %635 = vmatprep.subr.mxu0 0.0
        %636 = vmatpush1.msra.mxu0 0.0
        %637 = vmatprep.subr.mxu0 0.0
        %638 = vmatpush1.msra.mxu0 0.0
        %639 = vmatprep.subr.mxu0 0.0
        %640 = vmatpush1.msra.mxu0 0.0
        %641 = vmatprep.subr.mxu0 0.0
        %642 = vmatpush1.msra.mxu0 0.0
        %643 = vmatprep.subr.mxu0 0.0
        %644 = vmatpush1.msra.mxu0 0.0
        %645 = vmatprep.subr.mxu0 0.0
        %646 = vmatpush1.msra.mxu0 0.0
        %647 = vmatprep.subr.mxu0 0.0
        %648 = vmatpush1.msra.mxu0 0.0
        %649 = vmatprep.subr.mxu0 0.0
        %650 = vmatpush1.msra.mxu0 0.0
        %651 = vmatprep.subr.mxu0 0.0
        %652 = vmatpush1.msra.mxu0 0.0
        %653 = vmatprep.subr.mxu0 0.0
        %654 = vmatpush1.msra.mxu0 0.0
        %655 = vmatprep.subr.mxu0 0.0
        %656 = vmatpush1.msra.mxu0 0.0
        %657 = vmatprep.subr.mxu0 0.0
        %658 = vmatpush1.msra.mxu0 0.0
        %659 = vmatprep.subr.mxu0 0.0
        %660 = vmatpush1.msra.mxu0 0.0
        %661 = vmatprep.subr.mxu0 0.0
        %662 = vmatpush1.msra.mxu0 0.0
        %663 = vmatprep.subr.mxu0 0.0
        %664 = vmatpush1.msra.mxu0 0.0
        %665 = vmatprep.subr.mxu0 0.0
        %666 = vmatpush1.msra.mxu0 0.0
        %667 = vmatprep.subr.mxu0 0.0
        %668 = vmatpush1.msra.mxu0 0.0
        %669 = vmatprep.subr.mxu0 0.0
        %670 = vmatpush1.msra.mxu0 0.0
        %671 = vmatprep.subr.mxu0 0.0
        %672 = vmatpush1.msra.mxu0 0.0
        %673 = vmatprep.subr.mxu0 0.0
        %674 = vmatpush1.msra.mxu0 0.0
        %675 = vmatprep.mubr.f32.mxu0 0.0
        %676 = vmatmul.mubr.f32.gmra.mrb[0].mxu0 %v609
        %v677 = vpop.f32.mrb[0].mxu0
        %v678 = vadd.f32 0.0, %v677
        %v679 = vpop.f32.mrb[0].mxu0
        %v680 = vadd.f32 0.0, %v679
        %681 = vdwg.mxu0
        %682 = vmatprep.subr.mxu0 0.0
        %683 = vmatpush1.msra.mxu0 %v597
        %684 = vmatprep.subr.mxu0 0.0
        %685 = vmatpush1.msra.mxu0 %v600
        %686 = vmatprep.subr.mxu0 0.0
        %687 = vmatpush1.msra.mxu0 %v603
        %688 = vmatprep.subr.mxu0 0.0
        %689 = vmatpush1.msra.mxu0 %v606
        %690 = vmatprep.subr.mxu0 0.0
        %691 = vmatpush1.msra.mxu0 0.0
        %692 = vmatprep.subr.mxu0 0.0
        %693 = vmatpush1.msra.mxu0 0.0
        %694 = vmatprep.subr.mxu0 0.0
        %695 = vmatpush1.msra.mxu0 0.0
        %696 = vmatprep.subr.mxu0 0.0
        %697 = vmatpush1.msra.mxu0 0.0
        %698 = vmatprep.subr.mxu0 0.0
        %699 = vmatpush1.msra.mxu0 0.0
        %700 = vmatprep.subr.mxu0 0.0
        %701 = vmatpush1.msra.mxu0 0.0
        %702 = vmatprep.subr.mxu0 0.0
        %703 = vmatpush1.msra.mxu0 0.0
        %704 = vmatprep.subr.mxu0 0.0
        %705 = vmatpush1.msra.mxu0 0.0
        %706 = vmatprep.subr.mxu0 0.0
        %707 = vmatpush1.msra.mxu0 0.0
        %708 = vmatprep.subr.mxu0 0.0
        %709 = vmatpush1.msra.mxu0 0.0
        %710 = vmatprep.subr.mxu0 0.0
        %711 = vmatpush1.msra.mxu0 0.0
        %712 = vmatprep.subr.mxu0 0.0
        %713 = vmatpush1.msra.mxu0 0.0
        %714 = vmatprep.subr.mxu0 0.0
        %715 = vmatpush1.msra.mxu0 0.0
        %716 = vmatprep.subr.mxu0 0.0
        %717 = vmatpush1.msra.mxu0 0.0
        %718 = vmatprep.subr.mxu0 0.0
        %719 = vmatpush1.msra.mxu0 0.0
        %720 = vmatprep.subr.mxu0 0.0
        %721 = vmatpush1.msra.mxu0 0.0
        %722 = vmatprep.subr.mxu0 0.0
        %723 = vmatpush1.msra.mxu0 0.0
        %724 = vmatprep.subr.mxu0 0.0
        %725 = vmatpush1.msra.mxu0 0.0
        %726 = vmatprep.subr.mxu0 0.0
        %727 = vmatpush1.msra.mxu0 0.0
        %728 = vmatprep.subr.mxu0 0.0
        %729 = vmatpush1.msra.mxu0 0.0
        %730 = vmatprep.subr.mxu0 0.0
        %731 = vmatpush1.msra.mxu0 0.0
        %732 = vmatprep.subr.mxu0 0.0
        %733 = vmatpush1.msra.mxu0 0.0
        %734 = vmatprep.subr.mxu0 0.0
        %735 = vmatpush1.msra.mxu0 0.0
        %736 = vmatprep.subr.mxu0 0.0
        %737 = vmatpush1.msra.mxu0 0.0
        %738 = vmatprep.subr.mxu0 0.0
        %739 = vmatpush1.msra.mxu0 0.0
        %740 = vmatprep.subr.mxu0 0.0
        %741 = vmatpush1.msra.mxu0 0.0
        %742 = vmatprep.subr.mxu0 0.0
        %743 = vmatpush1.msra.mxu0 0.0
        %744 = vmatprep.subr.mxu0 0.0
        %745 = vmatpush1.msra.mxu0 0.0
        %746 = vmatprep.mubr.f32.mxu0 0.0
        %747 = vmatmul.mubr.f32.gmra.mrb[0].mxu0 %v609
        %v748 = vpop.f32.mrb[0].mxu0
        %v749 = vadd.f32 0.0, %v748
        %v750 = vpop.f32.mrb[0].mxu0
        %751 = vdwg.mxu0
        %v752 = vld [vmem:[#allocation7] sm:$0xff]
        %v753 = vld [vmem:[#allocation7 + $0x8] sm:$0xff]
        %v754 = vld [vmem:[#allocation7 + $0x10] sm:$0xff]
        %v755 = vld [vmem:[#allocation7 + $0x18] sm:$0xff]
        %v756 = vld [vmem:[#allocation7 + $0x20] sm:$0xff]
        %v757 = vld [vmem:[#allocation7 + $0x28] sm:$0xff]
        %v758 = vld [vmem:[#allocation7 + $0x30] sm:$0xff]
        %v759 = vld [vmem:[#allocation7 + $0x38] sm:$0xff]
        %v760 = vld [vmem:[#allocation7 + $0x40] sm:$0xff]
        %v761 = vld [vmem:[#allocation7 + $0x48] sm:$0xff]
        %v762 = vld [vmem:[#allocation7 + $0x50] sm:$0xff]
        %v763 = vld [vmem:[#allocation7 + $0x58] sm:$0xff]
        %v764 = vld [vmem:[#allocation7 + $0x60] sm:$0xff]
        %v765 = vld [vmem:[#allocation7 + $0x68] sm:$0xff]
        %v766 = vld [vmem:[#allocation7 + $0x70] sm:$0xff]
        %v767 = vld [vmem:[#allocation7 + $0x78] sm:$0xff]
        %v768 = vld [vmem:[#allocation7 + $0x80] sm:$0xff]
        %v769 = vld [vmem:[#allocation7 + $0x88] sm:$0xff]
        %v770 = vld [vmem:[#allocation7 + $0x90] sm:$0xff]
        %v771 = vld [vmem:[#allocation7 + $0x98] sm:$0xff]
        %v772 = vld [vmem:[#allocation7 + $0xa0] sm:$0xff]
        %v773 = vld [vmem:[#allocation7 + $0xa8] sm:$0xff]
        %v774 = vld [vmem:[#allocation7 + $0xb0] sm:$0xff]
        %v775 = vld [vmem:[#allocation7 + $0xb8] sm:$0xff]
        %v776 = vld [vmem:[#allocation7 + $0xc0] sm:$0xff]
        %v777 = vld [vmem:[#allocation7 + $0xc8] sm:$0xff]
        %v778 = vld [vmem:[#allocation7 + $0xd0] sm:$0xff]
        %v779 = vld [vmem:[#allocation7 + $0xd8] sm:$0xff]
        %v780 = vld [vmem:[#allocation7 + $0xe0] sm:$0xff]
        %v781 = vld [vmem:[#allocation7 + $0xe8] sm:$0xff]
        %v782 = vld [vmem:[#allocation7 + $0xf0] sm:$0xff]
        %v783 = vld [vmem:[#allocation7 + $0xf8] sm:$0xff]
        %v784 = vld [vmem:[#allocation7 + $0x100] sm:$0xff]
        %v785 = vld [vmem:[#allocation7 + $0x108] sm:$0xff]
        %v786 = vld [vmem:[#allocation7 + $0x110] sm:$0xff]
        %v787 = vld [vmem:[#allocation7 + $0x118] sm:$0xff]
        %v788 = vld [vmem:[#allocation7 + $0x120] sm:$0xff]
        %v789 = vld [vmem:[#allocation7 + $0x128] sm:$0xff]
        %v790 = vld [vmem:[#allocation7 + $0x130] sm:$0xff]
        %v791 = vld [vmem:[#allocation7 + $0x138] sm:$0xff]
        %v792 = vld [vmem:[#allocation7 + $0x140] sm:$0xff]
        %v793 = vld [vmem:[#allocation7 + $0x148] sm:$0xff]
        %v794 = vld [vmem:[#allocation7 + $0x150] sm:$0xff]
        %v795 = vld [vmem:[#allocation7 + $0x158] sm:$0xff]
        %v796 = vld [vmem:[#allocation7 + $0x160] sm:$0xff]
        %v797 = vld [vmem:[#allocation7 + $0x168] sm:$0xff]
        %v798 = vld [vmem:[#allocation7 + $0x170] sm:$0xff]
        %v799 = vld [vmem:[#allocation7 + $0x178] sm:$0xff]
        %v800 = vld [vmem:[#allocation7 + $0x180] sm:$0xff]
        %v801 = vld [vmem:[#allocation7 + $0x188] sm:$0xff]
        %v802 = vld [vmem:[#allocation7 + $0x190] sm:$0xff]
        %v803 = vld [vmem:[#allocation7 + $0x198] sm:$0xff]
        %v804 = vld [vmem:[#allocation7 + $0x1a0] sm:$0xff]
        %v805 = vld [vmem:[#allocation7 + $0x1a8] sm:$0xff]
        %v806 = vld [vmem:[#allocation7 + $0x1b0] sm:$0xff]
        %v807 = vld [vmem:[#allocation7 + $0x1b8] sm:$0xff]
        %v808 = vld [vmem:[#allocation7 + $0x1c0] sm:$0xff]
        %v809 = vld [vmem:[#allocation7 + $0x1c8] sm:$0xff]
        %v810 = vld [vmem:[#allocation7 + $0x1d0] sm:$0xff]
        %v811 = vld [vmem:[#allocation7 + $0x1d8] sm:$0xff]
        %v812 = vld [vmem:[#allocation7 + $0x1e0] sm:$0xff]
        %v813 = vld [vmem:[#allocation7 + $0x1e8] sm:$0xff]
        %v814 = vld [vmem:[#allocation7 + $0x1f0] sm:$0xff]
        %v815 = vld [vmem:[#allocation7 + $0x1f8] sm:$0xff]
        %v816 = vld [vmem:[#allocation7 + $0x200] sm:$0xff]
        %v817 = vld [vmem:[#allocation7 + $0x208] sm:$0xff]
        %v818 = vld [vmem:[#allocation7 + $0x210] sm:$0xff]
        %v819 = vld [vmem:[#allocation7 + $0x218] sm:$0xff]
        %v820 = vld [vmem:[#allocation7 + $0x220] sm:$0xff]
        %v821 = vld [vmem:[#allocation7 + $0x228] sm:$0xff]
        %v822 = vld [vmem:[#allocation7 + $0x230] sm:$0xff]
        %v823 = vld [vmem:[#allocation7 + $0x238] sm:$0xff]
        %v824 = vld [vmem:[#allocation7 + $0x240] sm:$0xff]
        %v825 = vld [vmem:[#allocation7 + $0x248] sm:$0xff]
        %v826 = vld [vmem:[#allocation7 + $0x250] sm:$0xff]
        %v827 = vld [vmem:[#allocation7 + $0x258] sm:$0xff]
        %v828 = vld [vmem:[#allocation7 + $0x260] sm:$0xff]
        %v829 = vld [vmem:[#allocation7 + $0x268] sm:$0xff]
        %v830 = vld [vmem:[#allocation7 + $0x270] sm:$0xff]
        %v831 = vld [vmem:[#allocation7 + $0x278] sm:$0xff]
        %v832 = vld [vmem:[#allocation7 + $0x280] sm:$0xff]
        %v833 = vld [vmem:[#allocation7 + $0x288] sm:$0xff]
        %v834 = vld [vmem:[#allocation7 + $0x290] sm:$0xff]
        %v835 = vld [vmem:[#allocation7 + $0x298] sm:$0xff]
        %v836 = vld [vmem:[#allocation7 + $0x2a0] sm:$0xff]
        %v837 = vld [vmem:[#allocation7 + $0x2a8] sm:$0xff]
        %v838 = vld [vmem:[#allocation7 + $0x2b0] sm:$0xff]
        %v839 = vld [vmem:[#allocation7 + $0x2b8] sm:$0xff]
        %v840 = vld [vmem:[#allocation7 + $0x2c0] sm:$0xff]
        %v841 = vld [vmem:[#allocation7 + $0x2c8] sm:$0xff]
        %v842 = vld [vmem:[#allocation7 + $0x2d0] sm:$0xff]
        %v843 = vld [vmem:[#allocation7 + $0x2d8] sm:$0xff]
        %v844 = vld [vmem:[#allocation7 + $0x2e0] sm:$0xff]
        %v845 = vld [vmem:[#allocation7 + $0x2e8] sm:$0xff]
        %v846 = vld [vmem:[#allocation7 + $0x2f0] sm:$0xff]
        %v847 = vld [vmem:[#allocation7 + $0x2f8] sm:$0xff]
        %v848 = vld [vmem:[#allocation7 + $0x300] sm:$0xff]
        %v849 = vld [vmem:[#allocation7 + $0x308] sm:$0xff]
        %v850 = vld [vmem:[#allocation7 + $0x310] sm:$0xff]
        %v851 = vld [vmem:[#allocation7 + $0x318] sm:$0xff]
        %v852 = vld [vmem:[#allocation7 + $0x320] sm:$0xff]
        %v853 = vld [vmem:[#allocation7 + $0x328] sm:$0xff]
        %v854 = vld [vmem:[#allocation7 + $0x330] sm:$0xff]
        %v855 = vld [vmem:[#allocation7 + $0x338] sm:$0xff]
        %v856 = vld [vmem:[#allocation7 + $0x340] sm:$0xff]
        %v857 = vld [vmem:[#allocation7 + $0x348] sm:$0xff]
        %v858 = vld [vmem:[#allocation7 + $0x350] sm:$0xff]
        %v859 = vld [vmem:[#allocation7 + $0x358] sm:$0xff]
        %v860 = vld [vmem:[#allocation7 + $0x360] sm:$0xff]
        %v861 = vld [vmem:[#allocation7 + $0x368] sm:$0xff]
        %v862 = vld [vmem:[#allocation7 + $0x370] sm:$0xff]
        %v863 = vld [vmem:[#allocation7 + $0x378] sm:$0xff]
        %v864 = vld [vmem:[#allocation7 + $0x380] sm:$0xff]
        %v865 = vld [vmem:[#allocation7 + $0x388] sm:$0xff]
        %v866 = vld [vmem:[#allocation7 + $0x390] sm:$0xff]
        %v867 = vld [vmem:[#allocation7 + $0x398] sm:$0xff]
        %v868 = vld [vmem:[#allocation7 + $0x3a0] sm:$0xff]
        %v869 = vld [vmem:[#allocation7 + $0x3a8] sm:$0xff]
        %v870 = vld [vmem:[#allocation7 + $0x3b0] sm:$0xff]
        %v871 = vld [vmem:[#allocation7 + $0x3b8] sm:$0xff]
        %v872 = vld [vmem:[#allocation7 + $0x3c0] sm:$0xff]
        %v873 = vld [vmem:[#allocation7 + $0x3c8] sm:$0xff]
        %v874 = vld [vmem:[#allocation7 + $0x3d0] sm:$0xff]
        %v875 = vld [vmem:[#allocation7 + $0x3d8] sm:$0xff]
        %v876 = vld [vmem:[#allocation7 + $0x3e0] sm:$0xff]
        %v877 = vld [vmem:[#allocation7 + $0x3e8] sm:$0xff]
        %v878 = vld [vmem:[#allocation7 + $0x3f0] sm:$0xff]
        %v879 = vld [vmem:[#allocation7 + $0x3f8] sm:$0xff]
        %v881 = vcombine.high %v678, %v678
        %v883 = vunpack.c.l.s4 1966171168
        %v884 = vunpack.c.0.s8 %v883
        %v885 = vlaneseq
        %v886 = vshrl.u32 %v885, 7
        %v887 = vsub.s32 %v884, %v886
        %v888 = vrot.slane %v678, %v887
        %v890 = vunpack.c.l.s4 1966171168
        %v891 = vunpack.c.0.s8 %v890
        %v892 = vlaneseq
        %v893 = vshrl.u32 %v892, 7
        %v894 = vsub.s32 %v891, %v893
        %v895 = vrot.slane %v881, %v894
        %v896 = vcombine.high %v888, %v888
        %v897 = vcombine.high %v895, %v895
        %v899 = vunpack.c.l.s4 1966171168
        %v900 = vunpack.c.0.s8 %v899
        %v901 = vlaneseq
        %v902 = vshrl.u32 %v901, 7
        %v903 = vsub.s32 %v900, %v902
        %v904 = vrot.slane %v888, %v903
        %v906 = vunpack.c.l.s4 1966171168
        %v907 = vunpack.c.0.s8 %v906
        %v908 = vlaneseq
        %v909 = vshrl.u32 %v908, 7
        %v910 = vsub.s32 %v907, %v909
        %v911 = vrot.slane %v895, %v910
        %v913 = vunpack.c.l.s4 1966171168
        %v914 = vunpack.c.0.s8 %v913
        %v915 = vlaneseq
        %v916 = vshrl.u32 %v915, 7
        %v917 = vsub.s32 %v914, %v916
        %v918 = vrot.slane %v896, %v917
        %v920 = vunpack.c.l.s4 1966171168
        %v921 = vunpack.c.0.s8 %v920
        %v922 = vlaneseq
        %v923 = vshrl.u32 %v922, 7
        %v924 = vsub.s32 %v921, %v923
        %v925 = vrot.slane %v897, %v924
        %v926 = vcombine.high %v904, %v904
        %v927 = vcombine.high %v911, %v911
        %v928 = vcombine.high %v918, %v918
        %v929 = vcombine.high %v925, %v925
        %v930 = vlaneseq
        %v931 = vshrl.u32 %v930, 7
        %v932 = vsub.s32 0, %v931
        %v933 = vrot.slane %v904, %v932
        %v934 = vlaneseq
        %v935 = vshrl.u32 %v934, 7
        %v936 = vsub.s32 0, %v935
        %v937 = vrot.slane %v918, %v936
        %v938 = vlaneseq
        %v939 = vshrl.u32 %v938, 7
        %v940 = vsub.s32 0, %v939
        %v941 = vrot.slane %v926, %v940
        %v942 = vlaneseq
        %v943 = vshrl.u32 %v942, 7
        %v944 = vsub.s32 0, %v943
        %v945 = vrot.slane %v928, %v944
        %v946 = vlaneseq
        %v947 = vshrl.u32 %v946, 7
        %v948 = vsub.s32 0, %v947
        %v949 = vrot.slane %v911, %v948
        %v950 = vlaneseq
        %v951 = vshrl.u32 %v950, 7
        %v952 = vsub.s32 0, %v951
        %v953 = vrot.slane %v925, %v952
        %v954 = vlaneseq
        %v955 = vshrl.u32 %v954, 7
        %v956 = vsub.s32 0, %v955
        %v957 = vrot.slane %v927, %v956
        %v958 = vlaneseq
        %v959 = vshrl.u32 %v958, 7
        %v960 = vsub.s32 0, %v959
        %v961 = vrot.slane %v929, %v960
        %v970 = vadd.f32 %v752, %v933
        %v971 = vadd.f32 %v753, %v933
        %v972 = vadd.f32 %v754, %v933
        %v973 = vadd.f32 %v755, %v933
        %v974 = vadd.f32 %v756, %v933
        %v975 = vadd.f32 %v757, %v933
        %v976 = vadd.f32 %v758, %v933
        %v977 = vadd.f32 %v759, %v933
        %v978 = vadd.f32 %v760, %v933
        %v979 = vadd.f32 %v761, %v933
        %v980 = vadd.f32 %v762, %v933
        %v981 = vadd.f32 %v763, %v933
        %v982 = vadd.f32 %v764, %v933
        %v983 = vadd.f32 %v765, %v933
        %v984 = vadd.f32 %v766, %v933
        %v985 = vadd.f32 %v767, %v933
        %v986 = vadd.f32 %v768, %v937
        %v987 = vadd.f32 %v769, %v937
        %v988 = vadd.f32 %v770, %v937
        %v989 = vadd.f32 %v771, %v937
        %v990 = vadd.f32 %v772, %v937
        %v991 = vadd.f32 %v773, %v937
        %v992 = vadd.f32 %v774, %v937
        %v993 = vadd.f32 %v775, %v937
        %v994 = vadd.f32 %v776, %v937
        %v995 = vadd.f32 %v777, %v937
        %v996 = vadd.f32 %v778, %v937
        %v997 = vadd.f32 %v779, %v937
        %v998 = vadd.f32 %v780, %v937
        %v999 = vadd.f32 %v781, %v937
        %v1000 = vadd.f32 %v782, %v937
        %v1001 = vadd.f32 %v783, %v937
        %v1002 = vadd.f32 %v784, %v941
        %v1003 = vadd.f32 %v785, %v941
        %v1004 = vadd.f32 %v786, %v941
        %v1005 = vadd.f32 %v787, %v941
        %v1006 = vadd.f32 %v788, %v941
        %v1007 = vadd.f32 %v789, %v941
        %v1008 = vadd.f32 %v790, %v941
        %v1009 = vadd.f32 %v791, %v941
        %v1010 = vadd.f32 %v792, %v941
        %v1011 = vadd.f32 %v793, %v941
        %v1012 = vadd.f32 %v794, %v941
        %v1013 = vadd.f32 %v795, %v941
        %v1014 = vadd.f32 %v796, %v941
        %v1015 = vadd.f32 %v797, %v941
        %v1016 = vadd.f32 %v798, %v941
        %v1017 = vadd.f32 %v799, %v941
        %v1018 = vadd.f32 %v800, %v945
        %v1019 = vadd.f32 %v801, %v945
        %v1020 = vadd.f32 %v802, %v945
        %v1021 = vadd.f32 %v803, %v945
        %v1022 = vadd.f32 %v804, %v945
        %v1023 = vadd.f32 %v805, %v945
        %v1024 = vadd.f32 %v806, %v945
        %v1025 = vadd.f32 %v807, %v945
        %v1026 = vadd.f32 %v808, %v945
        %v1027 = vadd.f32 %v809, %v945
        %v1028 = vadd.f32 %v810, %v945
        %v1029 = vadd.f32 %v811, %v945
        %v1030 = vadd.f32 %v812, %v945
        %v1031 = vadd.f32 %v813, %v945
        %v1032 = vadd.f32 %v814, %v945
        %v1033 = vadd.f32 %v815, %v945
        %v1034 = vadd.f32 %v816, %v949
        %v1035 = vadd.f32 %v817, %v949
        %v1036 = vadd.f32 %v818, %v949
        %v1037 = vadd.f32 %v819, %v949
        %v1038 = vadd.f32 %v820, %v949
        %v1039 = vadd.f32 %v821, %v949
        %v1040 = vadd.f32 %v822, %v949
        %v1041 = vadd.f32 %v823, %v949
        %v1042 = vadd.f32 %v824, %v949
        %v1043 = vadd.f32 %v825, %v949
        %v1044 = vadd.f32 %v826, %v949
        %v1045 = vadd.f32 %v827, %v949
        %v1046 = vadd.f32 %v828, %v949
        %v1047 = vadd.f32 %v829, %v949
        %v1048 = vadd.f32 %v830, %v949
        %v1049 = vadd.f32 %v831, %v949
        %v1050 = vadd.f32 %v832, %v953
        %v1051 = vadd.f32 %v833, %v953
        %v1052 = vadd.f32 %v834, %v953
        %v1053 = vadd.f32 %v835, %v953
        %v1054 = vadd.f32 %v836, %v953
        %v1055 = vadd.f32 %v837, %v953
        %v1056 = vadd.f32 %v838, %v953
        %v1057 = vadd.f32 %v839, %v953
        %v1058 = vadd.f32 %v840, %v953
        %v1059 = vadd.f32 %v841, %v953
        %v1060 = vadd.f32 %v842, %v953
        %v1061 = vadd.f32 %v843, %v953
        %v1062 = vadd.f32 %v844, %v953
        %v1063 = vadd.f32 %v845, %v953
        %v1064 = vadd.f32 %v846, %v953
        %v1065 = vadd.f32 %v847, %v953
        %v1066 = vadd.f32 %v848, %v957
        %v1067 = vadd.f32 %v849, %v957
        %v1068 = vadd.f32 %v850, %v957
        %v1069 = vadd.f32 %v851, %v957
        %v1070 = vadd.f32 %v852, %v957
        %v1071 = vadd.f32 %v853, %v957
        %v1072 = vadd.f32 %v854, %v957
        %v1073 = vadd.f32 %v855, %v957
        %v1074 = vadd.f32 %v856, %v957
        %v1075 = vadd.f32 %v857, %v957
        %v1076 = vadd.f32 %v858, %v957
        %v1077 = vadd.f32 %v859, %v957
        %v1078 = vadd.f32 %v860, %v957
        %v1079 = vadd.f32 %v861, %v957
        %v1080 = vadd.f32 %v862, %v957
        %v1081 = vadd.f32 %v863, %v957
        %v1082 = vadd.f32 %v864, %v961
        %v1083 = vadd.f32 %v865, %v961
        %v1084 = vadd.f32 %v866, %v961
        %v1085 = vadd.f32 %v867, %v961
        %v1086 = vadd.f32 %v868, %v961
        %v1087 = vadd.f32 %v869, %v961
        %v1088 = vadd.f32 %v870, %v961
        %v1089 = vadd.f32 %v871, %v961
        %v1090 = vadd.f32 %v872, %v961
        %v1091 = vadd.f32 %v873, %v961
        %v1092 = vadd.f32 %v874, %v961
        %v1093 = vadd.f32 %v875, %v961
        %v1094 = vadd.f32 %v876, %v961
        %v1095 = vadd.f32 %v877, %v961
        %v1096 = vadd.f32 %v878, %v961
        %v1097 = vadd.f32 %v879, %v961
        %v1098 = vtanh.pop %v970
        %v1099 = vtanh.pop %v971
        %v1100 = vtanh.pop %v972
        %v1101 = vtanh.pop %v973
        %v1102 = vtanh.pop %v974
        %v1103 = vtanh.pop %v975
        %v1104 = vtanh.pop %v976
        %v1105 = vtanh.pop %v977
        %v1106 = vtanh.pop %v978
        %v1107 = vtanh.pop %v979
        %v1108 = vtanh.pop %v980
        %v1109 = vtanh.pop %v981
        %v1110 = vtanh.pop %v982
        %v1111 = vtanh.pop %v983
        %v1112 = vtanh.pop %v984
        %v1113 = vtanh.pop %v985
        %v1114 = vtanh.pop %v986
        %v1115 = vtanh.pop %v987
        %v1116 = vtanh.pop %v988
        %v1117 = vtanh.pop %v989
        %v1118 = vtanh.pop %v990
        %v1119 = vtanh.pop %v991
        %v1120 = vtanh.pop %v992
        %v1121 = vtanh.pop %v993
        %v1122 = vtanh.pop %v994
        %v1123 = vtanh.pop %v995
        %v1124 = vtanh.pop %v996
        %v1125 = vtanh.pop %v997
        %v1126 = vtanh.pop %v998
        %v1127 = vtanh.pop %v999
        %v1128 = vtanh.pop %v1000
        %v1129 = vtanh.pop %v1001
        %v1130 = vtanh.pop %v1002
        %v1131 = vtanh.pop %v1003
        %v1132 = vtanh.pop %v1004
        %v1133 = vtanh.pop %v1005
        %v1134 = vtanh.pop %v1006
        %v1135 = vtanh.pop %v1007
        %v1136 = vtanh.pop %v1008
        %v1137 = vtanh.pop %v1009
        %v1138 = vtanh.pop %v1010
        %v1139 = vtanh.pop %v1011
        %v1140 = vtanh.pop %v1012
        %v1141 = vtanh.pop %v1013
        %v1142 = vtanh.pop %v1014
        %v1143 = vtanh.pop %v1015
        %v1144 = vtanh.pop %v1016
        %v1145 = vtanh.pop %v1017
        %v1146 = vtanh.pop %v1018
        %v1147 = vtanh.pop %v1019
        %v1148 = vtanh.pop %v1020
        %v1149 = vtanh.pop %v1021
        %v1150 = vtanh.pop %v1022
        %v1151 = vtanh.pop %v1023
        %v1152 = vtanh.pop %v1024
        %v1153 = vtanh.pop %v1025
        %v1154 = vtanh.pop %v1026
        %v1155 = vtanh.pop %v1027
        %v1156 = vtanh.pop %v1028
        %v1157 = vtanh.pop %v1029
        %v1158 = vtanh.pop %v1030
        %v1159 = vtanh.pop %v1031
        %v1160 = vtanh.pop %v1032
        %v1161 = vtanh.pop %v1033
        %v1162 = vtanh.pop %v1034
        %v1163 = vtanh.pop %v1035
        %v1164 = vtanh.pop %v1036
        %v1165 = vtanh.pop %v1037
        %v1166 = vtanh.pop %v1038
        %v1167 = vtanh.pop %v1039
        %v1168 = vtanh.pop %v1040
        %v1169 = vtanh.pop %v1041
        %v1170 = vtanh.pop %v1042
        %v1171 = vtanh.pop %v1043
        %v1172 = vtanh.pop %v1044
        %v1173 = vtanh.pop %v1045
        %v1174 = vtanh.pop %v1046
        %v1175 = vtanh.pop %v1047
        %v1176 = vtanh.pop %v1048
        %v1177 = vtanh.pop %v1049
        %v1178 = vtanh.pop %v1050
        %v1179 = vtanh.pop %v1051
        %v1180 = vtanh.pop %v1052
        %v1181 = vtanh.pop %v1053
        %v1182 = vtanh.pop %v1054
        %v1183 = vtanh.pop %v1055
        %v1184 = vtanh.pop %v1056
        %v1185 = vtanh.pop %v1057
        %v1186 = vtanh.pop %v1058
        %v1187 = vtanh.pop %v1059
        %v1188 = vtanh.pop %v1060
        %v1189 = vtanh.pop %v1061
        %v1190 = vtanh.pop %v1062
        %v1191 = vtanh.pop %v1063
        %v1192 = vtanh.pop %v1064
        %v1193 = vtanh.pop %v1065
        %v1194 = vtanh.pop %v1066
        %v1195 = vtanh.pop %v1067
        %v1196 = vtanh.pop %v1068
        %v1197 = vtanh.pop %v1069
        %v1198 = vtanh.pop %v1070
        %v1199 = vtanh.pop %v1071
        %v1200 = vtanh.pop %v1072
        %v1201 = vtanh.pop %v1073
        %v1202 = vtanh.pop %v1074
        %v1203 = vtanh.pop %v1075
        %v1204 = vtanh.pop %v1076
        %v1205 = vtanh.pop %v1077
        %v1206 = vtanh.pop %v1078
        %v1207 = vtanh.pop %v1079
        %v1208 = vtanh.pop %v1080
        %v1209 = vtanh.pop %v1081
        %v1210 = vtanh.pop %v1082
        %v1211 = vtanh.pop %v1083
        %v1212 = vtanh.pop %v1084
        %v1213 = vtanh.pop %v1085
        %v1214 = vtanh.pop %v1086
        %v1215 = vtanh.pop %v1087
        %v1216 = vtanh.pop %v1088
        %v1217 = vtanh.pop %v1089
        %v1218 = vtanh.pop %v1090
        %v1219 = vtanh.pop %v1091
        %v1220 = vtanh.pop %v1092
        %v1221 = vtanh.pop %v1093
        %v1222 = vtanh.pop %v1094
        %v1223 = vtanh.pop %v1095
        %v1224 = vtanh.pop %v1096
        %v1225 = vtanh.pop %v1097
        %v1226 = vld [vmem:[#allocation13] sm:$0x1]
        %v1228 = vlaneseq
        %v1229 = vshrl.u32 %v1228, 7
        %v1230 = vsub.s32 0, %v1229
        %v1231 = vrot.slane %v1226, %v1230
        %v1233 = vmul.f32 %v1098, %v1231
        %v1234 = vmul.f32 %v1099, %v1231
        %v1235 = vmul.f32 %v1100, %v1231
        %v1236 = vmul.f32 %v1101, %v1231
        %v1237 = vmul.f32 %v1102, %v1231
        %v1238 = vmul.f32 %v1103, %v1231
        %v1239 = vmul.f32 %v1104, %v1231
        %v1240 = vmul.f32 %v1105, %v1231
        %v1241 = vmul.f32 %v1106, %v1231
        %v1242 = vmul.f32 %v1107, %v1231
        %v1243 = vmul.f32 %v1108, %v1231
        %v1244 = vmul.f32 %v1109, %v1231
        %v1245 = vmul.f32 %v1110, %v1231
        %v1246 = vmul.f32 %v1111, %v1231
        %v1247 = vmul.f32 %v1112, %v1231
        %v1248 = vmul.f32 %v1113, %v1231
        %v1249 = vmul.f32 %v1114, %v1231
        %v1250 = vmul.f32 %v1115, %v1231
        %v1251 = vmul.f32 %v1116, %v1231
        %v1252 = vmul.f32 %v1117, %v1231
        %v1253 = vmul.f32 %v1118, %v1231
        %v1254 = vmul.f32 %v1119, %v1231
        %v1255 = vmul.f32 %v1120, %v1231
        %v1256 = vmul.f32 %v1121, %v1231
        %v1257 = vmul.f32 %v1122, %v1231
        %v1258 = vmul.f32 %v1123, %v1231
        %v1259 = vmul.f32 %v1124, %v1231
        %v1260 = vmul.f32 %v1125, %v1231
        %v1261 = vmul.f32 %v1126, %v1231
        %v1262 = vmul.f32 %v1127, %v1231
        %v1263 = vmul.f32 %v1128, %v1231
        %v1264 = vmul.f32 %v1129, %v1231
        %v1265 = vmul.f32 %v1130, %v1231
        %v1266 = vmul.f32 %v1131, %v1231
        %v1267 = vmul.f32 %v1132, %v1231
        %v1268 = vmul.f32 %v1133, %v1231
        %v1269 = vmul.f32 %v1134, %v1231
        %v1270 = vmul.f32 %v1135, %v1231
        %v1271 = vmul.f32 %v1136, %v1231
        %v1272 = vmul.f32 %v1137, %v1231
        %v1273 = vmul.f32 %v1138, %v1231
        %v1274 = vmul.f32 %v1139, %v1231
        %v1275 = vmul.f32 %v1140, %v1231
        %v1276 = vmul.f32 %v1141, %v1231
        %v1277 = vmul.f32 %v1142, %v1231
        %v1278 = vmul.f32 %v1143, %v1231
        %v1279 = vmul.f32 %v1144, %v1231
        %v1280 = vmul.f32 %v1145, %v1231
        %v1281 = vmul.f32 %v1146, %v1231
        %v1282 = vmul.f32 %v1147, %v1231
        %v1283 = vmul.f32 %v1148, %v1231
        %v1284 = vmul.f32 %v1149, %v1231
        %v1285 = vmul.f32 %v1150, %v1231
        %v1286 = vmul.f32 %v1151, %v1231
        %v1287 = vmul.f32 %v1152, %v1231
        %v1288 = vmul.f32 %v1153, %v1231
        %v1289 = vmul.f32 %v1154, %v1231
        %v1290 = vmul.f32 %v1155, %v1231
        %v1291 = vmul.f32 %v1156, %v1231
        %v1292 = vmul.f32 %v1157, %v1231
        %v1293 = vmul.f32 %v1158, %v1231
        %v1294 = vmul.f32 %v1159, %v1231
        %v1295 = vmul.f32 %v1160, %v1231
        %v1296 = vmul.f32 %v1161, %v1231
        %v1297 = vmul.f32 %v1162, %v1231
        %v1298 = vmul.f32 %v1163, %v1231
        %v1299 = vmul.f32 %v1164, %v1231
        %v1300 = vmul.f32 %v1165, %v1231
        %v1301 = vmul.f32 %v1166, %v1231
        %v1302 = vmul.f32 %v1167, %v1231
        %v1303 = vmul.f32 %v1168, %v1231
        %v1304 = vmul.f32 %v1169, %v1231
        %v1305 = vmul.f32 %v1170, %v1231
        %v1306 = vmul.f32 %v1171, %v1231
        %v1307 = vmul.f32 %v1172, %v1231
        %v1308 = vmul.f32 %v1173, %v1231
        %v1309 = vmul.f32 %v1174, %v1231
        %v1310 = vmul.f32 %v1175, %v1231
        %v1311 = vmul.f32 %v1176, %v1231
        %v1312 = vmul.f32 %v1177, %v1231
        %v1313 = vmul.f32 %v1178, %v1231
        %v1314 = vmul.f32 %v1179, %v1231
        %v1315 = vmul.f32 %v1180, %v1231
        %v1316 = vmul.f32 %v1181, %v1231
        %v1317 = vmul.f32 %v1182, %v1231
        %v1318 = vmul.f32 %v1183, %v1231
        %v1319 = vmul.f32 %v1184, %v1231
        %v1320 = vmul.f32 %v1185, %v1231
        %v1321 = vmul.f32 %v1186, %v1231
        %v1322 = vmul.f32 %v1187, %v1231
        %v1323 = vmul.f32 %v1188, %v1231
        %v1324 = vmul.f32 %v1189, %v1231
        %v1325 = vmul.f32 %v1190, %v1231
        %v1326 = vmul.f32 %v1191, %v1231
        %v1327 = vmul.f32 %v1192, %v1231
        %v1328 = vmul.f32 %v1193, %v1231
        %v1329 = vmul.f32 %v1194, %v1231
        %v1330 = vmul.f32 %v1195, %v1231
        %v1331 = vmul.f32 %v1196, %v1231
        %v1332 = vmul.f32 %v1197, %v1231
        %v1333 = vmul.f32 %v1198, %v1231
        %v1334 = vmul.f32 %v1199, %v1231
        %v1335 = vmul.f32 %v1200, %v1231
        %v1336 = vmul.f32 %v1201, %v1231
        %v1337 = vmul.f32 %v1202, %v1231
        %v1338 = vmul.f32 %v1203, %v1231
        %v1339 = vmul.f32 %v1204, %v1231
        %v1340 = vmul.f32 %v1205, %v1231
        %v1341 = vmul.f32 %v1206, %v1231
        %v1342 = vmul.f32 %v1207, %v1231
        %v1343 = vmul.f32 %v1208, %v1231
        %v1344 = vmul.f32 %v1209, %v1231
        %v1345 = vmul.f32 %v1210, %v1231
        %v1346 = vmul.f32 %v1211, %v1231
        %v1347 = vmul.f32 %v1212, %v1231
        %v1348 = vmul.f32 %v1213, %v1231
        %v1349 = vmul.f32 %v1214, %v1231
        %v1350 = vmul.f32 %v1215, %v1231
        %v1351 = vmul.f32 %v1216, %v1231
        %v1352 = vmul.f32 %v1217, %v1231
        %v1353 = vmul.f32 %v1218, %v1231
        %v1354 = vmul.f32 %v1219, %v1231
        %v1355 = vmul.f32 %v1220, %v1231
        %v1356 = vmul.f32 %v1221, %v1231
        %v1357 = vmul.f32 %v1222, %v1231
        %v1358 = vmul.f32 %v1223, %v1231
        %v1359 = vmul.f32 %v1224, %v1231
        %v1360 = vmul.f32 %v1225, %v1231
        %v1361 = vsel %vm607, %v1233, 0.0
        %1362 = vadd.xlane.f32.xlu0 %v1361
        %v1363 = vpop.xlane.xlu0 %1362
        %v1364 = vsel %vm607, %v1234, 0.0
        %1365 = vadd.xlane.f32.xlu0 %v1364
        %v1366 = vpop.xlane.xlu0 %1365
        %v1367 = vsel %vm607, %v1235, 0.0
        %1368 = vadd.xlane.f32.xlu0 %v1367
        %v1369 = vpop.xlane.xlu0 %1368
        %v1370 = vsel %vm607, %v1236, 0.0
        %1371 = vadd.xlane.f32.xlu0 %v1370
        %v1372 = vpop.xlane.xlu0 %1371
        %v1373 = vsel %vm607, %v1237, 0.0
        %1374 = vadd.xlane.f32.xlu0 %v1373
        %v1375 = vpop.xlane.xlu0 %1374
        %v1376 = vsel %vm607, %v1238, 0.0
        %1377 = vadd.xlane.f32.xlu0 %v1376
        %v1378 = vpop.xlane.xlu0 %1377
        %v1379 = vsel %vm607, %v1239, 0.0
        %1380 = vadd.xlane.f32.xlu0 %v1379
        %v1381 = vpop.xlane.xlu0 %1380
        %v1382 = vsel %vm607, %v1240, 0.0
        %1383 = vadd.xlane.f32.xlu0 %v1382
        %v1384 = vpop.xlane.xlu0 %1383
        %v1385 = vsel %vm607, %v1241, 0.0
        %1386 = vadd.xlane.f32.xlu0 %v1385
        %v1387 = vpop.xlane.xlu0 %1386
        %v1388 = vsel %vm607, %v1242, 0.0
        %1389 = vadd.xlane.f32.xlu0 %v1388
        %v1390 = vpop.xlane.xlu0 %1389
        %v1391 = vsel %vm607, %v1243, 0.0
        %1392 = vadd.xlane.f32.xlu0 %v1391
        %v1393 = vpop.xlane.xlu0 %1392
        %v1394 = vsel %vm607, %v1244, 0.0
        %1395 = vadd.xlane.f32.xlu0 %v1394
        %v1396 = vpop.xlane.xlu0 %1395
        %v1397 = vsel %vm607, %v1245, 0.0
        %1398 = vadd.xlane.f32.xlu0 %v1397
        %v1399 = vpop.xlane.xlu0 %1398
        %v1400 = vsel %vm607, %v1246, 0.0
        %1401 = vadd.xlane.f32.xlu0 %v1400
        %v1402 = vpop.xlane.xlu0 %1401
        %v1403 = vsel %vm607, %v1247, 0.0
        %1404 = vadd.xlane.f32.xlu0 %v1403
        %v1405 = vpop.xlane.xlu0 %1404
        %v1406 = vsel %vm607, %v1248, 0.0
        %1407 = vadd.xlane.f32.xlu0 %v1406
        %v1408 = vpop.xlane.xlu0 %1407
        %v1409 = vsel %vm607, %v1249, 0.0
        %1410 = vadd.xlane.f32.xlu0 %v1409
        %v1411 = vpop.xlane.xlu0 %1410
        %v1412 = vsel %vm607, %v1250, 0.0
        %1413 = vadd.xlane.f32.xlu0 %v1412
        %v1414 = vpop.xlane.xlu0 %1413
        %v1415 = vsel %vm607, %v1251, 0.0
        %1416 = vadd.xlane.f32.xlu0 %v1415
        %v1417 = vpop.xlane.xlu0 %1416
        %v1418 = vsel %vm607, %v1252, 0.0
        %1419 = vadd.xlane.f32.xlu0 %v1418
        %v1420 = vpop.xlane.xlu0 %1419
        %v1421 = vsel %vm607, %v1253, 0.0
        %1422 = vadd.xlane.f32.xlu0 %v1421
        %v1423 = vpop.xlane.xlu0 %1422
        %v1424 = vsel %vm607, %v1254, 0.0
        %1425 = vadd.xlane.f32.xlu0 %v1424
        %v1426 = vpop.xlane.xlu0 %1425
        %v1427 = vsel %vm607, %v1255, 0.0
        %1428 = vadd.xlane.f32.xlu0 %v1427
        %v1429 = vpop.xlane.xlu0 %1428
        %v1430 = vsel %vm607, %v1256, 0.0
        %1431 = vadd.xlane.f32.xlu0 %v1430
        %v1432 = vpop.xlane.xlu0 %1431
        %v1433 = vsel %vm607, %v1257, 0.0
        %1434 = vadd.xlane.f32.xlu0 %v1433
        %v1435 = vpop.xlane.xlu0 %1434
        %v1436 = vsel %vm607, %v1258, 0.0
        %1437 = vadd.xlane.f32.xlu0 %v1436
        %v1438 = vpop.xlane.xlu0 %1437
        %v1439 = vsel %vm607, %v1259, 0.0
        %1440 = vadd.xlane.f32.xlu0 %v1439
        %v1441 = vpop.xlane.xlu0 %1440
        %v1442 = vsel %vm607, %v1260, 0.0
        %1443 = vadd.xlane.f32.xlu0 %v1442
        %v1444 = vpop.xlane.xlu0 %1443
        %v1445 = vsel %vm607, %v1261, 0.0
        %1446 = vadd.xlane.f32.xlu0 %v1445
        %v1447 = vpop.xlane.xlu0 %1446
        %v1448 = vsel %vm607, %v1262, 0.0
        %1449 = vadd.xlane.f32.xlu0 %v1448
        %v1450 = vpop.xlane.xlu0 %1449
        %v1451 = vsel %vm607, %v1263, 0.0
        %1452 = vadd.xlane.f32.xlu0 %v1451
        %v1453 = vpop.xlane.xlu0 %1452
        %v1454 = vsel %vm607, %v1264, 0.0
        %1455 = vadd.xlane.f32.xlu0 %v1454
        %v1456 = vpop.xlane.xlu0 %1455
        %v1457 = vsel %vm607, %v1265, 0.0
        %1458 = vadd.xlane.f32.xlu0 %v1457
        %v1459 = vpop.xlane.xlu0 %1458
        %v1460 = vsel %vm607, %v1266, 0.0
        %1461 = vadd.xlane.f32.xlu0 %v1460
        %v1462 = vpop.xlane.xlu0 %1461
        %v1463 = vsel %vm607, %v1267, 0.0
        %1464 = vadd.xlane.f32.xlu0 %v1463
        %v1465 = vpop.xlane.xlu0 %1464
        %v1466 = vsel %vm607, %v1268, 0.0
        %1467 = vadd.xlane.f32.xlu0 %v1466
        %v1468 = vpop.xlane.xlu0 %1467
        %v1469 = vsel %vm607, %v1269, 0.0
        %1470 = vadd.xlane.f32.xlu0 %v1469
        %v1471 = vpop.xlane.xlu0 %1470
        %v1472 = vsel %vm607, %v1270, 0.0
        %1473 = vadd.xlane.f32.xlu0 %v1472
        %v1474 = vpop.xlane.xlu0 %1473
        %v1475 = vsel %vm607, %v1271, 0.0
        %1476 = vadd.xlane.f32.xlu0 %v1475
        %v1477 = vpop.xlane.xlu0 %1476
        %v1478 = vsel %vm607, %v1272, 0.0
        %1479 = vadd.xlane.f32.xlu0 %v1478
        %v1480 = vpop.xlane.xlu0 %1479
        %v1481 = vsel %vm607, %v1273, 0.0
        %1482 = vadd.xlane.f32.xlu0 %v1481
        %v1483 = vpop.xlane.xlu0 %1482
        %v1484 = vsel %vm607, %v1274, 0.0
        %1485 = vadd.xlane.f32.xlu0 %v1484
        %v1486 = vpop.xlane.xlu0 %1485
        %v1487 = vsel %vm607, %v1275, 0.0
        %1488 = vadd.xlane.f32.xlu0 %v1487
        %v1489 = vpop.xlane.xlu0 %1488
        %v1490 = vsel %vm607, %v1276, 0.0
        %1491 = vadd.xlane.f32.xlu0 %v1490
        %v1492 = vpop.xlane.xlu0 %1491
        %v1493 = vsel %vm607, %v1277, 0.0
        %1494 = vadd.xlane.f32.xlu0 %v1493
        %v1495 = vpop.xlane.xlu0 %1494
        %v1496 = vsel %vm607, %v1278, 0.0
        %1497 = vadd.xlane.f32.xlu0 %v1496
        %v1498 = vpop.xlane.xlu0 %1497
        %v1499 = vsel %vm607, %v1279, 0.0
        %1500 = vadd.xlane.f32.xlu0 %v1499
        %v1501 = vpop.xlane.xlu0 %1500
        %v1502 = vsel %vm607, %v1280, 0.0
        %1503 = vadd.xlane.f32.xlu0 %v1502
        %v1504 = vpop.xlane.xlu0 %1503
        %v1505 = vsel %vm607, %v1281, 0.0
        %1506 = vadd.xlane.f32.xlu0 %v1505
        %v1507 = vpop.xlane.xlu0 %1506
        %v1508 = vsel %vm607, %v1282, 0.0
        %1509 = vadd.xlane.f32.xlu0 %v1508
        %v1510 = vpop.xlane.xlu0 %1509
        %v1511 = vsel %vm607, %v1283, 0.0
        %1512 = vadd.xlane.f32.xlu0 %v1511
        %v1513 = vpop.xlane.xlu0 %1512
        %v1514 = vsel %vm607, %v1284, 0.0
        %1515 = vadd.xlane.f32.xlu0 %v1514
        %v1516 = vpop.xlane.xlu0 %1515
        %v1517 = vsel %vm607, %v1285, 0.0
        %1518 = vadd.xlane.f32.xlu0 %v1517
        %v1519 = vpop.xlane.xlu0 %1518
        %v1520 = vsel %vm607, %v1286, 0.0
        %1521 = vadd.xlane.f32.xlu0 %v1520
        %v1522 = vpop.xlane.xlu0 %1521
        %v1523 = vsel %vm607, %v1287, 0.0
        %1524 = vadd.xlane.f32.xlu0 %v1523
        %v1525 = vpop.xlane.xlu0 %1524
        %v1526 = vsel %vm607, %v1288, 0.0
        %1527 = vadd.xlane.f32.xlu0 %v1526
        %v1528 = vpop.xlane.xlu0 %1527
        %v1529 = vsel %vm607, %v1289, 0.0
        %1530 = vadd.xlane.f32.xlu0 %v1529
        %v1531 = vpop.xlane.xlu0 %1530
        %v1532 = vsel %vm607, %v1290, 0.0
        %1533 = vadd.xlane.f32.xlu0 %v1532
        %v1534 = vpop.xlane.xlu0 %1533
        %v1535 = vsel %vm607, %v1291, 0.0
        %1536 = vadd.xlane.f32.xlu0 %v1535
        %v1537 = vpop.xlane.xlu0 %1536
        %v1538 = vsel %vm607, %v1292, 0.0
        %1539 = vadd.xlane.f32.xlu0 %v1538
        %v1540 = vpop.xlane.xlu0 %1539
        %v1541 = vsel %vm607, %v1293, 0.0
        %1542 = vadd.xlane.f32.xlu0 %v1541
        %v1543 = vpop.xlane.xlu0 %1542
        %v1544 = vsel %vm607, %v1294, 0.0
        %1545 = vadd.xlane.f32.xlu0 %v1544
        %v1546 = vpop.xlane.xlu0 %1545
        %v1547 = vsel %vm607, %v1295, 0.0
        %1548 = vadd.xlane.f32.xlu0 %v1547
        %v1549 = vpop.xlane.xlu0 %1548
        %v1550 = vsel %vm607, %v1296, 0.0
        %1551 = vadd.xlane.f32.xlu0 %v1550
        %v1552 = vpop.xlane.xlu0 %1551
        %v1553 = vsel %vm607, %v1297, 0.0
        %1554 = vadd.xlane.f32.xlu0 %v1553
        %v1555 = vpop.xlane.xlu0 %1554
        %v1556 = vsel %vm607, %v1298, 0.0
        %1557 = vadd.xlane.f32.xlu0 %v1556
        %v1558 = vpop.xlane.xlu0 %1557
        %v1559 = vsel %vm607, %v1299, 0.0
        %1560 = vadd.xlane.f32.xlu0 %v1559
        %v1561 = vpop.xlane.xlu0 %1560
        %v1562 = vsel %vm607, %v1300, 0.0
        %1563 = vadd.xlane.f32.xlu0 %v1562
        %v1564 = vpop.xlane.xlu0 %1563
        %v1565 = vsel %vm607, %v1301, 0.0
        %1566 = vadd.xlane.f32.xlu0 %v1565
        %v1567 = vpop.xlane.xlu0 %1566
        %v1568 = vsel %vm607, %v1302, 0.0
        %1569 = vadd.xlane.f32.xlu0 %v1568
        %v1570 = vpop.xlane.xlu0 %1569
        %v1571 = vsel %vm607, %v1303, 0.0
        %1572 = vadd.xlane.f32.xlu0 %v1571
        %v1573 = vpop.xlane.xlu0 %1572
        %v1574 = vsel %vm607, %v1304, 0.0
        %1575 = vadd.xlane.f32.xlu0 %v1574
        %v1576 = vpop.xlane.xlu0 %1575
        %v1577 = vsel %vm607, %v1305, 0.0
        %1578 = vadd.xlane.f32.xlu0 %v1577
        %v1579 = vpop.xlane.xlu0 %1578
        %v1580 = vsel %vm607, %v1306, 0.0
        %1581 = vadd.xlane.f32.xlu0 %v1580
        %v1582 = vpop.xlane.xlu0 %1581
        %v1583 = vsel %vm607, %v1307, 0.0
        %1584 = vadd.xlane.f32.xlu0 %v1583
        %v1585 = vpop.xlane.xlu0 %1584
        %v1586 = vsel %vm607, %v1308, 0.0
        %1587 = vadd.xlane.f32.xlu0 %v1586
        %v1588 = vpop.xlane.xlu0 %1587
        %v1589 = vsel %vm607, %v1309, 0.0
        %1590 = vadd.xlane.f32.xlu0 %v1589
        %v1591 = vpop.xlane.xlu0 %1590
        %v1592 = vsel %vm607, %v1310, 0.0
        %1593 = vadd.xlane.f32.xlu0 %v1592
        %v1594 = vpop.xlane.xlu0 %1593
        %v1595 = vsel %vm607, %v1311, 0.0
        %1596 = vadd.xlane.f32.xlu0 %v1595
        %v1597 = vpop.xlane.xlu0 %1596
        %v1598 = vsel %vm607, %v1312, 0.0
        %1599 = vadd.xlane.f32.xlu0 %v1598
        %v1600 = vpop.xlane.xlu0 %1599
        %v1601 = vsel %vm607, %v1313, 0.0
        %1602 = vadd.xlane.f32.xlu0 %v1601
        %v1603 = vpop.xlane.xlu0 %1602
        %v1604 = vsel %vm607, %v1314, 0.0
        %1605 = vadd.xlane.f32.xlu0 %v1604
        %v1606 = vpop.xlane.xlu0 %1605
        %v1607 = vsel %vm607, %v1315, 0.0
        %1608 = vadd.xlane.f32.xlu0 %v1607
        %v1609 = vpop.xlane.xlu0 %1608
        %v1610 = vsel %vm607, %v1316, 0.0
        %1611 = vadd.xlane.f32.xlu0 %v1610
        %v1612 = vpop.xlane.xlu0 %1611
        %v1613 = vsel %vm607, %v1317, 0.0
        %1614 = vadd.xlane.f32.xlu0 %v1613
        %v1615 = vpop.xlane.xlu0 %1614
        %v1616 = vsel %vm607, %v1318, 0.0
        %1617 = vadd.xlane.f32.xlu0 %v1616
        %v1618 = vpop.xlane.xlu0 %1617
        %v1619 = vsel %vm607, %v1319, 0.0
        %1620 = vadd.xlane.f32.xlu0 %v1619
        %v1621 = vpop.xlane.xlu0 %1620
        %v1622 = vsel %vm607, %v1320, 0.0
        %1623 = vadd.xlane.f32.xlu0 %v1622
        %v1624 = vpop.xlane.xlu0 %1623
        %v1625 = vsel %vm607, %v1321, 0.0
        %1626 = vadd.xlane.f32.xlu0 %v1625
        %v1627 = vpop.xlane.xlu0 %1626
        %v1628 = vsel %vm607, %v1322, 0.0
        %1629 = vadd.xlane.f32.xlu0 %v1628
        %v1630 = vpop.xlane.xlu0 %1629
        %v1631 = vsel %vm607, %v1323, 0.0
        %1632 = vadd.xlane.f32.xlu0 %v1631
        %v1633 = vpop.xlane.xlu0 %1632
        %v1634 = vsel %vm607, %v1324, 0.0
        %1635 = vadd.xlane.f32.xlu0 %v1634
        %v1636 = vpop.xlane.xlu0 %1635
        %v1637 = vsel %vm607, %v1325, 0.0
        %1638 = vadd.xlane.f32.xlu0 %v1637
        %v1639 = vpop.xlane.xlu0 %1638
        %v1640 = vsel %vm607, %v1326, 0.0
        %1641 = vadd.xlane.f32.xlu0 %v1640
        %v1642 = vpop.xlane.xlu0 %1641
        %v1643 = vsel %vm607, %v1327, 0.0
        %1644 = vadd.xlane.f32.xlu0 %v1643
        %v1645 = vpop.xlane.xlu0 %1644
        %v1646 = vsel %vm607, %v1328, 0.0
        %1647 = vadd.xlane.f32.xlu0 %v1646
        %v1648 = vpop.xlane.xlu0 %1647
        %v1649 = vsel %vm607, %v1329, 0.0
        %1650 = vadd.xlane.f32.xlu0 %v1649
        %v1651 = vpop.xlane.xlu0 %1650
        %v1652 = vsel %vm607, %v1330, 0.0
        %1653 = vadd.xlane.f32.xlu0 %v1652
        %v1654 = vpop.xlane.xlu0 %1653
        %v1655 = vsel %vm607, %v1331, 0.0
        %1656 = vadd.xlane.f32.xlu0 %v1655
        %v1657 = vpop.xlane.xlu0 %1656
        %v1658 = vsel %vm607, %v1332, 0.0
        %1659 = vadd.xlane.f32.xlu0 %v1658
        %v1660 = vpop.xlane.xlu0 %1659
        %v1661 = vsel %vm607, %v1333, 0.0
        %1662 = vadd.xlane.f32.xlu0 %v1661
        %v1663 = vpop.xlane.xlu0 %1662
        %v1664 = vsel %vm607, %v1334, 0.0
        %1665 = vadd.xlane.f32.xlu0 %v1664
        %v1666 = vpop.xlane.xlu0 %1665
        %v1667 = vsel %vm607, %v1335, 0.0
        %1668 = vadd.xlane.f32.xlu0 %v1667
        %v1669 = vpop.xlane.xlu0 %1668
        %v1670 = vsel %vm607, %v1336, 0.0
        %1671 = vadd.xlane.f32.xlu0 %v1670
        %v1672 = vpop.xlane.xlu0 %1671
        %v1673 = vsel %vm607, %v1337, 0.0
        %1674 = vadd.xlane.f32.xlu0 %v1673
        %v1675 = vpop.xlane.xlu0 %1674
        %v1676 = vsel %vm607, %v1338, 0.0
        %1677 = vadd.xlane.f32.xlu0 %v1676
        %v1678 = vpop.xlane.xlu0 %1677
        %v1679 = vsel %vm607, %v1339, 0.0
        %1680 = vadd.xlane.f32.xlu0 %v1679
        %v1681 = vpop.xlane.xlu0 %1680
        %v1682 = vsel %vm607, %v1340, 0.0
        %1683 = vadd.xlane.f32.xlu0 %v1682
        %v1684 = vpop.xlane.xlu0 %1683
        %v1685 = vsel %vm607, %v1341, 0.0
        %1686 = vadd.xlane.f32.xlu0 %v1685
        %v1687 = vpop.xlane.xlu0 %1686
        %v1688 = vsel %vm607, %v1342, 0.0
        %1689 = vadd.xlane.f32.xlu0 %v1688
        %v1690 = vpop.xlane.xlu0 %1689
        %v1691 = vsel %vm607, %v1343, 0.0
        %1692 = vadd.xlane.f32.xlu0 %v1691
        %v1693 = vpop.xlane.xlu0 %1692
        %v1694 = vsel %vm607, %v1344, 0.0
        %1695 = vadd.xlane.f32.xlu0 %v1694
        %v1696 = vpop.xlane.xlu0 %1695
        %v1697 = vsel %vm607, %v1345, 0.0
        %1698 = vadd.xlane.f32.xlu0 %v1697
        %v1699 = vpop.xlane.xlu0 %1698
        %v1700 = vsel %vm607, %v1346, 0.0
        %1701 = vadd.xlane.f32.xlu0 %v1700
        %v1702 = vpop.xlane.xlu0 %1701
        %v1703 = vsel %vm607, %v1347, 0.0
        %1704 = vadd.xlane.f32.xlu0 %v1703
        %v1705 = vpop.xlane.xlu0 %1704
        %v1706 = vsel %vm607, %v1348, 0.0
        %1707 = vadd.xlane.f32.xlu0 %v1706
        %v1708 = vpop.xlane.xlu0 %1707
        %v1709 = vsel %vm607, %v1349, 0.0
        %1710 = vadd.xlane.f32.xlu0 %v1709
        %v1711 = vpop.xlane.xlu0 %1710
        %v1712 = vsel %vm607, %v1350, 0.0
        %1713 = vadd.xlane.f32.xlu0 %v1712
        %v1714 = vpop.xlane.xlu0 %1713
        %v1715 = vsel %vm607, %v1351, 0.0
        %1716 = vadd.xlane.f32.xlu0 %v1715
        %v1717 = vpop.xlane.xlu0 %1716
        %v1718 = vsel %vm607, %v1352, 0.0
        %1719 = vadd.xlane.f32.xlu0 %v1718
        %v1720 = vpop.xlane.xlu0 %1719
        %v1721 = vsel %vm607, %v1353, 0.0
        %1722 = vadd.xlane.f32.xlu0 %v1721
        %v1723 = vpop.xlane.xlu0 %1722
        %v1724 = vsel %vm607, %v1354, 0.0
        %1725 = vadd.xlane.f32.xlu0 %v1724
        %v1726 = vpop.xlane.xlu0 %1725
        %v1727 = vsel %vm607, %v1355, 0.0
        %1728 = vadd.xlane.f32.xlu0 %v1727
        %v1729 = vpop.xlane.xlu0 %1728
        %v1730 = vsel %vm607, %v1356, 0.0
        %1731 = vadd.xlane.f32.xlu0 %v1730
        %v1732 = vpop.xlane.xlu0 %1731
        %v1733 = vsel %vm607, %v1357, 0.0
        %1734 = vadd.xlane.f32.xlu0 %v1733
        %v1735 = vpop.xlane.xlu0 %1734
        %v1736 = vsel %vm607, %v1358, 0.0
        %1737 = vadd.xlane.f32.xlu0 %v1736
        %v1738 = vpop.xlane.xlu0 %1737
        %v1739 = vsel %vm607, %v1359, 0.0
        %1740 = vadd.xlane.f32.xlu0 %v1739
        %v1741 = vpop.xlane.xlu0 %1740
        %v1742 = vsel %vm607, %v1360, 0.0
        %1743 = vadd.xlane.f32.xlu0 %v1742
        %v1744 = vpop.xlane.xlu0 %1743
        %v1745 = vld [vmem:[#allocation14] sm:$0x1]
        %v1747 = vlaneseq
        %v1748 = vshrl.u32 %v1747, 7
        %v1749 = vsub.s32 0, %v1748
        %v1750 = vrot.slane %v1745, %v1749
        %1752 = vbcast.lane.b32.xlu0 %v1750, 256
        %v1753 = vpop.permute.xlu0 %1752
        %s1755 = sor.u32 256, 8
        %1756 = vbcast.lane.b32.xlu0 %v1750, %s1755
        %v1757 = vpop.permute.xlu0 %1756
        %s1759 = sor.u32 256, 16
        %1760 = vbcast.lane.b32.xlu0 %v1750, %s1759
        %v1761 = vpop.permute.xlu0 %1760
        %s1763 = sor.u32 256, 24
        %1764 = vbcast.lane.b32.xlu0 %v1750, %s1763
        %v1765 = vpop.permute.xlu0 %1764
        %s1767 = sor.u32 256, 32
        %1768 = vbcast.lane.b32.xlu0 %v1750, %s1767
        %v1769 = vpop.permute.xlu0 %1768
        %s1771 = sor.u32 256, 40
        %1772 = vbcast.lane.b32.xlu0 %v1750, %s1771
        %v1773 = vpop.permute.xlu0 %1772
        %s1775 = sor.u32 256, 48
        %1776 = vbcast.lane.b32.xlu0 %v1750, %s1775
        %v1777 = vpop.permute.xlu0 %1776
        %s1779 = sor.u32 256, 56
        %1780 = vbcast.lane.b32.xlu0 %v1750, %s1779
        %v1781 = vpop.permute.xlu0 %1780
        %s1783 = sor.u32 256, 64
        %1784 = vbcast.lane.b32.xlu0 %v1750, %s1783
        %v1785 = vpop.permute.xlu0 %1784
        %s1787 = sor.u32 256, 72
        %1788 = vbcast.lane.b32.xlu0 %v1750, %s1787
        %v1789 = vpop.permute.xlu0 %1788
        %s1791 = sor.u32 256, 80
        %1792 = vbcast.lane.b32.xlu0 %v1750, %s1791
        %v1793 = vpop.permute.xlu0 %1792
        %s1795 = sor.u32 256, 88
        %1796 = vbcast.lane.b32.xlu0 %v1750, %s1795
        %v1797 = vpop.permute.xlu0 %1796
        %s1799 = sor.u32 256, 96
        %1800 = vbcast.lane.b32.xlu0 %v1750, %s1799
        %v1801 = vpop.permute.xlu0 %1800
        %s1803 = sor.u32 256, 104
        %1804 = vbcast.lane.b32.xlu0 %v1750, %s1803
        %v1805 = vpop.permute.xlu0 %1804
        %s1807 = sor.u32 256, 112
        %1808 = vbcast.lane.b32.xlu0 %v1750, %s1807
        %v1809 = vpop.permute.xlu0 %1808
        %s1811 = sor.u32 256, 120
        %1812 = vbcast.lane.b32.xlu0 %v1750, %s1811
        %v1813 = vpop.permute.xlu0 %1812
        %v1830 = vadd.f32 %v1363, %v1753
        %v1831 = vadd.f32 %v1366, %v1757
        %v1832 = vadd.f32 %v1369, %v1761
        %v1833 = vadd.f32 %v1372, %v1765
        %v1834 = vadd.f32 %v1375, %v1769
        %v1835 = vadd.f32 %v1378, %v1773
        %v1836 = vadd.f32 %v1381, %v1777
        %v1837 = vadd.f32 %v1384, %v1781
        %v1838 = vadd.f32 %v1387, %v1785
        %v1839 = vadd.f32 %v1390, %v1789
        %v1840 = vadd.f32 %v1393, %v1793
        %v1841 = vadd.f32 %v1396, %v1797
        %v1842 = vadd.f32 %v1399, %v1801
        %v1843 = vadd.f32 %v1402, %v1805
        %v1844 = vadd.f32 %v1405, %v1809
        %v1845 = vadd.f32 %v1408, %v1813
        %v1846 = vadd.f32 %v1411, %v1753
        %v1847 = vadd.f32 %v1414, %v1757
        %v1848 = vadd.f32 %v1417, %v1761
        %v1849 = vadd.f32 %v1420, %v1765
        %v1850 = vadd.f32 %v1423, %v1769
        %v1851 = vadd.f32 %v1426, %v1773
        %v1852 = vadd.f32 %v1429, %v1777
        %v1853 = vadd.f32 %v1432, %v1781
        %v1854 = vadd.f32 %v1435, %v1785
        %v1855 = vadd.f32 %v1438, %v1789
        %v1856 = vadd.f32 %v1441, %v1793
        %v1857 = vadd.f32 %v1444, %v1797
        %v1858 = vadd.f32 %v1447, %v1801
        %v1859 = vadd.f32 %v1450, %v1805
        %v1860 = vadd.f32 %v1453, %v1809
        %v1861 = vadd.f32 %v1456, %v1813
        %v1862 = vadd.f32 %v1459, %v1753
        %v1863 = vadd.f32 %v1462, %v1757
        %v1864 = vadd.f32 %v1465, %v1761
        %v1865 = vadd.f32 %v1468, %v1765
        %v1866 = vadd.f32 %v1471, %v1769
        %v1867 = vadd.f32 %v1474, %v1773
        %v1868 = vadd.f32 %v1477, %v1777
        %v1869 = vadd.f32 %v1480, %v1781
        %v1870 = vadd.f32 %v1483, %v1785
        %v1871 = vadd.f32 %v1486, %v1789
        %v1872 = vadd.f32 %v1489, %v1793
        %v1873 = vadd.f32 %v1492, %v1797
        %v1874 = vadd.f32 %v1495, %v1801
        %v1875 = vadd.f32 %v1498, %v1805
        %v1876 = vadd.f32 %v1501, %v1809
        %v1877 = vadd.f32 %v1504, %v1813
        %v1878 = vadd.f32 %v1507, %v1753
        %v1879 = vadd.f32 %v1510, %v1757
        %v1880 = vadd.f32 %v1513, %v1761
        %v1881 = vadd.f32 %v1516, %v1765
        %v1882 = vadd.f32 %v1519, %v1769
        %v1883 = vadd.f32 %v1522, %v1773
        %v1884 = vadd.f32 %v1525, %v1777
        %v1885 = vadd.f32 %v1528, %v1781
        %v1886 = vadd.f32 %v1531, %v1785
        %v1887 = vadd.f32 %v1534, %v1789
        %v1888 = vadd.f32 %v1537, %v1793
        %v1889 = vadd.f32 %v1540, %v1797
        %v1890 = vadd.f32 %v1543, %v1801
        %v1891 = vadd.f32 %v1546, %v1805
        %v1892 = vadd.f32 %v1549, %v1809
        %v1893 = vadd.f32 %v1552, %v1813
        %v1894 = vadd.f32 %v1555, %v1753
        %v1895 = vadd.f32 %v1558, %v1757
        %v1896 = vadd.f32 %v1561, %v1761
        %v1897 = vadd.f32 %v1564, %v1765
        %v1898 = vadd.f32 %v1567, %v1769
        %v1899 = vadd.f32 %v1570, %v1773
        %v1900 = vadd.f32 %v1573, %v1777
        %v1901 = vadd.f32 %v1576, %v1781
        %v1902 = vadd.f32 %v1579, %v1785
        %v1903 = vadd.f32 %v1582, %v1789
        %v1904 = vadd.f32 %v1585, %v1793
        %v1905 = vadd.f32 %v1588, %v1797
        %v1906 = vadd.f32 %v1591, %v1801
        %v1907 = vadd.f32 %v1594, %v1805
        %v1908 = vadd.f32 %v1597, %v1809
        %v1909 = vadd.f32 %v1600, %v1813
        %v1910 = vadd.f32 %v1603, %v1753
        %v1911 = vadd.f32 %v1606, %v1757
        %v1912 = vadd.f32 %v1609, %v1761
        %v1913 = vadd.f32 %v1612, %v1765
        %v1914 = vadd.f32 %v1615, %v1769
        %v1915 = vadd.f32 %v1618, %v1773
        %v1916 = vadd.f32 %v1621, %v1777
        %v1917 = vadd.f32 %v1624, %v1781
        %v1918 = vadd.f32 %v1627, %v1785
        %v1919 = vadd.f32 %v1630, %v1789
        %v1920 = vadd.f32 %v1633, %v1793
        %v1921 = vadd.f32 %v1636, %v1797
        %v1922 = vadd.f32 %v1639, %v1801
        %v1923 = vadd.f32 %v1642, %v1805
        %v1924 = vadd.f32 %v1645, %v1809
        %v1925 = vadd.f32 %v1648, %v1813
        %v1926 = vadd.f32 %v1651, %v1753
        %v1927 = vadd.f32 %v1654, %v1757
        %v1928 = vadd.f32 %v1657, %v1761
        %v1929 = vadd.f32 %v1660, %v1765
        %v1930 = vadd.f32 %v1663, %v1769
        %v1931 = vadd.f32 %v1666, %v1773
        %v1932 = vadd.f32 %v1669, %v1777
        %v1933 = vadd.f32 %v1672, %v1781
        %v1934 = vadd.f32 %v1675, %v1785
        %v1935 = vadd.f32 %v1678, %v1789
        %v1936 = vadd.f32 %v1681, %v1793
        %v1937 = vadd.f32 %v1684, %v1797
        %v1938 = vadd.f32 %v1687, %v1801
        %v1939 = vadd.f32 %v1690, %v1805
        %v1940 = vadd.f32 %v1693, %v1809
        %v1941 = vadd.f32 %v1696, %v1813
        %v1942 = vadd.f32 %v1699, %v1753
        %v1943 = vadd.f32 %v1702, %v1757
        %v1944 = vadd.f32 %v1705, %v1761
        %v1945 = vadd.f32 %v1708, %v1765
        %v1946 = vadd.f32 %v1711, %v1769
        %v1947 = vadd.f32 %v1714, %v1773
        %v1948 = vadd.f32 %v1717, %v1777
        %v1949 = vadd.f32 %v1720, %v1781
        %v1950 = vadd.f32 %v1723, %v1785
        %v1951 = vadd.f32 %v1726, %v1789
        %v1952 = vadd.f32 %v1729, %v1793
        %v1953 = vadd.f32 %v1732, %v1797
        %v1954 = vadd.f32 %v1735, %v1801
        %v1955 = vadd.f32 %v1738, %v1805
        %v1956 = vadd.f32 %v1741, %v1809
        %v1957 = vadd.f32 %v1744, %v1813
        %2086 = vset.pattern.permute.xlu0 0
        %2087 = vperm.xlu0 %2086, %v1830
        %v2088 = vpop.permute.xlu0 %2087
        %2089 = vset.pattern.permute.xlu0 0
        %2090 = vperm.xlu0 %2089, %v1831
        %v2091 = vpop.permute.xlu0 %2090
        %2092 = vset.pattern.permute.xlu0 0
        %2093 = vperm.xlu0 %2092, %v1832
        %v2094 = vpop.permute.xlu0 %2093
        %2095 = vset.pattern.permute.xlu0 0
        %2096 = vperm.xlu0 %2095, %v1833
        %v2097 = vpop.permute.xlu0 %2096
        %2098 = vset.pattern.permute.xlu0 0
        %2099 = vperm.xlu0 %2098, %v1834
        %v2100 = vpop.permute.xlu0 %2099
        %2101 = vset.pattern.permute.xlu0 0
        %2102 = vperm.xlu0 %2101, %v1835
        %v2103 = vpop.permute.xlu0 %2102
        %2104 = vset.pattern.permute.xlu0 0
        %2105 = vperm.xlu0 %2104, %v1836
        %v2106 = vpop.permute.xlu0 %2105
        %2107 = vset.pattern.permute.xlu0 0
        %2108 = vperm.xlu0 %2107, %v1837
        %v2109 = vpop.permute.xlu0 %2108
        %2110 = vset.pattern.permute.xlu0 0
        %2111 = vperm.xlu0 %2110, %v1838
        %v2112 = vpop.permute.xlu0 %2111
        %2113 = vset.pattern.permute.xlu0 0
        %2114 = vperm.xlu0 %2113, %v1839
        %v2115 = vpop.permute.xlu0 %2114
        %2116 = vset.pattern.permute.xlu0 0
        %2117 = vperm.xlu0 %2116, %v1840
        %v2118 = vpop.permute.xlu0 %2117
        %2119 = vset.pattern.permute.xlu0 0
        %2120 = vperm.xlu0 %2119, %v1841
        %v2121 = vpop.permute.xlu0 %2120
        %2122 = vset.pattern.permute.xlu0 0
        %2123 = vperm.xlu0 %2122, %v1842
        %v2124 = vpop.permute.xlu0 %2123
        %2125 = vset.pattern.permute.xlu0 0
        %2126 = vperm.xlu0 %2125, %v1843
        %v2127 = vpop.permute.xlu0 %2126
        %2128 = vset.pattern.permute.xlu0 0
        %2129 = vperm.xlu0 %2128, %v1844
        %v2130 = vpop.permute.xlu0 %2129
        %2131 = vset.pattern.permute.xlu0 0
        %2132 = vperm.xlu0 %2131, %v1845
        %v2133 = vpop.permute.xlu0 %2132
        %2134 = vset.pattern.permute.xlu0 0
        %2135 = vperm.xlu0 %2134, %v1846
        %v2136 = vpop.permute.xlu0 %2135
        %2137 = vset.pattern.permute.xlu0 0
        %2138 = vperm.xlu0 %2137, %v1847
        %v2139 = vpop.permute.xlu0 %2138
        %2140 = vset.pattern.permute.xlu0 0
        %2141 = vperm.xlu0 %2140, %v1848
        %v2142 = vpop.permute.xlu0 %2141
        %2143 = vset.pattern.permute.xlu0 0
        %2144 = vperm.xlu0 %2143, %v1849
        %v2145 = vpop.permute.xlu0 %2144
        %2146 = vset.pattern.permute.xlu0 0
        %2147 = vperm.xlu0 %2146, %v1850
        %v2148 = vpop.permute.xlu0 %2147
        %2149 = vset.pattern.permute.xlu0 0
        %2150 = vperm.xlu0 %2149, %v1851
        %v2151 = vpop.permute.xlu0 %2150
        %2152 = vset.pattern.permute.xlu0 0
        %2153 = vperm.xlu0 %2152, %v1852
        %v2154 = vpop.permute.xlu0 %2153
        %2155 = vset.pattern.permute.xlu0 0
        %2156 = vperm.xlu0 %2155, %v1853
        %v2157 = vpop.permute.xlu0 %2156
        %2158 = vset.pattern.permute.xlu0 0
        %2159 = vperm.xlu0 %2158, %v1854
        %v2160 = vpop.permute.xlu0 %2159
        %2161 = vset.pattern.permute.xlu0 0
        %2162 = vperm.xlu0 %2161, %v1855
        %v2163 = vpop.permute.xlu0 %2162
        %2164 = vset.pattern.permute.xlu0 0
        %2165 = vperm.xlu0 %2164, %v1856
        %v2166 = vpop.permute.xlu0 %2165
        %2167 = vset.pattern.permute.xlu0 0
        %2168 = vperm.xlu0 %2167, %v1857
        %v2169 = vpop.permute.xlu0 %2168
        %2170 = vset.pattern.permute.xlu0 0
        %2171 = vperm.xlu0 %2170, %v1858
        %v2172 = vpop.permute.xlu0 %2171
        %2173 = vset.pattern.permute.xlu0 0
        %2174 = vperm.xlu0 %2173, %v1859
        %v2175 = vpop.permute.xlu0 %2174
        %2176 = vset.pattern.permute.xlu0 0
        %2177 = vperm.xlu0 %2176, %v1860
        %v2178 = vpop.permute.xlu0 %2177
        %2179 = vset.pattern.permute.xlu0 0
        %2180 = vperm.xlu0 %2179, %v1861
        %v2181 = vpop.permute.xlu0 %2180
        %2182 = vset.pattern.permute.xlu0 0
        %2183 = vperm.xlu0 %2182, %v1862
        %v2184 = vpop.permute.xlu0 %2183
        %2185 = vset.pattern.permute.xlu0 0
        %2186 = vperm.xlu0 %2185, %v1863
        %v2187 = vpop.permute.xlu0 %2186
        %2188 = vset.pattern.permute.xlu0 0
        %2189 = vperm.xlu0 %2188, %v1864
        %v2190 = vpop.permute.xlu0 %2189
        %2191 = vset.pattern.permute.xlu0 0
        %2192 = vperm.xlu0 %2191, %v1865
        %v2193 = vpop.permute.xlu0 %2192
        %2194 = vset.pattern.permute.xlu0 0
        %2195 = vperm.xlu0 %2194, %v1866
        %v2196 = vpop.permute.xlu0 %2195
        %2197 = vset.pattern.permute.xlu0 0
        %2198 = vperm.xlu0 %2197, %v1867
        %v2199 = vpop.permute.xlu0 %2198
        %2200 = vset.pattern.permute.xlu0 0
        %2201 = vperm.xlu0 %2200, %v1868
        %v2202 = vpop.permute.xlu0 %2201
        %2203 = vset.pattern.permute.xlu0 0
        %2204 = vperm.xlu0 %2203, %v1869
        %v2205 = vpop.permute.xlu0 %2204
        %2206 = vset.pattern.permute.xlu0 0
        %2207 = vperm.xlu0 %2206, %v1870
        %v2208 = vpop.permute.xlu0 %2207
        %2209 = vset.pattern.permute.xlu0 0
        %2210 = vperm.xlu0 %2209, %v1871
        %v2211 = vpop.permute.xlu0 %2210
        %2212 = vset.pattern.permute.xlu0 0
        %2213 = vperm.xlu0 %2212, %v1872
        %v2214 = vpop.permute.xlu0 %2213
        %2215 = vset.pattern.permute.xlu0 0
        %2216 = vperm.xlu0 %2215, %v1873
        %v2217 = vpop.permute.xlu0 %2216
        %2218 = vset.pattern.permute.xlu0 0
        %2219 = vperm.xlu0 %2218, %v1874
        %v2220 = vpop.permute.xlu0 %2219
        %2221 = vset.pattern.permute.xlu0 0
        %2222 = vperm.xlu0 %2221, %v1875
        %v2223 = vpop.permute.xlu0 %2222
        %2224 = vset.pattern.permute.xlu0 0
        %2225 = vperm.xlu0 %2224, %v1876
        %v2226 = vpop.permute.xlu0 %2225
        %2227 = vset.pattern.permute.xlu0 0
        %2228 = vperm.xlu0 %2227, %v1877
        %v2229 = vpop.permute.xlu0 %2228
        %2230 = vset.pattern.permute.xlu0 0
        %2231 = vperm.xlu0 %2230, %v1878
        %v2232 = vpop.permute.xlu0 %2231
        %2233 = vset.pattern.permute.xlu0 0
        %2234 = vperm.xlu0 %2233, %v1879
        %v2235 = vpop.permute.xlu0 %2234
        %2236 = vset.pattern.permute.xlu0 0
        %2237 = vperm.xlu0 %2236, %v1880
        %v2238 = vpop.permute.xlu0 %2237
        %2239 = vset.pattern.permute.xlu0 0
        %2240 = vperm.xlu0 %2239, %v1881
        %v2241 = vpop.permute.xlu0 %2240
        %2242 = vset.pattern.permute.xlu0 0
        %2243 = vperm.xlu0 %2242, %v1882
        %v2244 = vpop.permute.xlu0 %2243
        %2245 = vset.pattern.permute.xlu0 0
        %2246 = vperm.xlu0 %2245, %v1883
        %v2247 = vpop.permute.xlu0 %2246
        %2248 = vset.pattern.permute.xlu0 0
        %2249 = vperm.xlu0 %2248, %v1884
        %v2250 = vpop.permute.xlu0 %2249
        %2251 = vset.pattern.permute.xlu0 0
        %2252 = vperm.xlu0 %2251, %v1885
        %v2253 = vpop.permute.xlu0 %2252
        %2254 = vset.pattern.permute.xlu0 0
        %2255 = vperm.xlu0 %2254, %v1886
        %v2256 = vpop.permute.xlu0 %2255
        %2257 = vset.pattern.permute.xlu0 0
        %2258 = vperm.xlu0 %2257, %v1887
        %v2259 = vpop.permute.xlu0 %2258
        %2260 = vset.pattern.permute.xlu0 0
        %2261 = vperm.xlu0 %2260, %v1888
        %v2262 = vpop.permute.xlu0 %2261
        %2263 = vset.pattern.permute.xlu0 0
        %2264 = vperm.xlu0 %2263, %v1889
        %v2265 = vpop.permute.xlu0 %2264
        %2266 = vset.pattern.permute.xlu0 0
        %2267 = vperm.xlu0 %2266, %v1890
        %v2268 = vpop.permute.xlu0 %2267
        %2269 = vset.pattern.permute.xlu0 0
        %2270 = vperm.xlu0 %2269, %v1891
        %v2271 = vpop.permute.xlu0 %2270
        %2272 = vset.pattern.permute.xlu0 0
        %2273 = vperm.xlu0 %2272, %v1892
        %v2274 = vpop.permute.xlu0 %2273
        %2275 = vset.pattern.permute.xlu0 0
        %2276 = vperm.xlu0 %2275, %v1893
        %v2277 = vpop.permute.xlu0 %2276
        %2278 = vset.pattern.permute.xlu0 0
        %2279 = vperm.xlu0 %2278, %v1894
        %v2280 = vpop.permute.xlu0 %2279
        %2281 = vset.pattern.permute.xlu0 0
        %2282 = vperm.xlu0 %2281, %v1895
        %v2283 = vpop.permute.xlu0 %2282
        %2284 = vset.pattern.permute.xlu0 0
        %2285 = vperm.xlu0 %2284, %v1896
        %v2286 = vpop.permute.xlu0 %2285
        %2287 = vset.pattern.permute.xlu0 0
        %2288 = vperm.xlu0 %2287, %v1897
        %v2289 = vpop.permute.xlu0 %2288
        %2290 = vset.pattern.permute.xlu0 0
        %2291 = vperm.xlu0 %2290, %v1898
        %v2292 = vpop.permute.xlu0 %2291
        %2293 = vset.pattern.permute.xlu0 0
        %2294 = vperm.xlu0 %2293, %v1899
        %v2295 = vpop.permute.xlu0 %2294
        %2296 = vset.pattern.permute.xlu0 0
        %2297 = vperm.xlu0 %2296, %v1900
        %v2298 = vpop.permute.xlu0 %2297
        %2299 = vset.pattern.permute.xlu0 0
        %2300 = vperm.xlu0 %2299, %v1901
        %v2301 = vpop.permute.xlu0 %2300
        %2302 = vset.pattern.permute.xlu0 0
        %2303 = vperm.xlu0 %2302, %v1902
        %v2304 = vpop.permute.xlu0 %2303
        %2305 = vset.pattern.permute.xlu0 0
        %2306 = vperm.xlu0 %2305, %v1903
        %v2307 = vpop.permute.xlu0 %2306
        %2308 = vset.pattern.permute.xlu0 0
        %2309 = vperm.xlu0 %2308, %v1904
        %v2310 = vpop.permute.xlu0 %2309
        %2311 = vset.pattern.permute.xlu0 0
        %2312 = vperm.xlu0 %2311, %v1905
        %v2313 = vpop.permute.xlu0 %2312
        %2314 = vset.pattern.permute.xlu0 0
        %2315 = vperm.xlu0 %2314, %v1906
        %v2316 = vpop.permute.xlu0 %2315
        %2317 = vset.pattern.permute.xlu0 0
        %2318 = vperm.xlu0 %2317, %v1907
        %v2319 = vpop.permute.xlu0 %2318
        %2320 = vset.pattern.permute.xlu0 0
        %2321 = vperm.xlu0 %2320, %v1908
        %v2322 = vpop.permute.xlu0 %2321
        %2323 = vset.pattern.permute.xlu0 0
        %2324 = vperm.xlu0 %2323, %v1909
        %v2325 = vpop.permute.xlu0 %2324
        %2326 = vset.pattern.permute.xlu0 0
        %2327 = vperm.xlu0 %2326, %v1910
        %v2328 = vpop.permute.xlu0 %2327
        %2329 = vset.pattern.permute.xlu0 0
        %2330 = vperm.xlu0 %2329, %v1911
        %v2331 = vpop.permute.xlu0 %2330
        %2332 = vset.pattern.permute.xlu0 0
        %2333 = vperm.xlu0 %2332, %v1912
        %v2334 = vpop.permute.xlu0 %2333
        %2335 = vset.pattern.permute.xlu0 0
        %2336 = vperm.xlu0 %2335, %v1913
        %v2337 = vpop.permute.xlu0 %2336
        %2338 = vset.pattern.permute.xlu0 0
        %2339 = vperm.xlu0 %2338, %v1914
        %v2340 = vpop.permute.xlu0 %2339
        %2341 = vset.pattern.permute.xlu0 0
        %2342 = vperm.xlu0 %2341, %v1915
        %v2343 = vpop.permute.xlu0 %2342
        %2344 = vset.pattern.permute.xlu0 0
        %2345 = vperm.xlu0 %2344, %v1916
        %v2346 = vpop.permute.xlu0 %2345
        %2347 = vset.pattern.permute.xlu0 0
        %2348 = vperm.xlu0 %2347, %v1917
        %v2349 = vpop.permute.xlu0 %2348
        %2350 = vset.pattern.permute.xlu0 0
        %2351 = vperm.xlu0 %2350, %v1918
        %v2352 = vpop.permute.xlu0 %2351
        %2353 = vset.pattern.permute.xlu0 0
        %2354 = vperm.xlu0 %2353, %v1919
        %v2355 = vpop.permute.xlu0 %2354
        %2356 = vset.pattern.permute.xlu0 0
        %2357 = vperm.xlu0 %2356, %v1920
        %v2358 = vpop.permute.xlu0 %2357
        %2359 = vset.pattern.permute.xlu0 0
        %2360 = vperm.xlu0 %2359, %v1921
        %v2361 = vpop.permute.xlu0 %2360
        %2362 = vset.pattern.permute.xlu0 0
        %2363 = vperm.xlu0 %2362, %v1922
        %v2364 = vpop.permute.xlu0 %2363
        %2365 = vset.pattern.permute.xlu0 0
        %2366 = vperm.xlu0 %2365, %v1923
        %v2367 = vpop.permute.xlu0 %2366
        %2368 = vset.pattern.permute.xlu0 0
        %2369 = vperm.xlu0 %2368, %v1924
        %v2370 = vpop.permute.xlu0 %2369
        %2371 = vset.pattern.permute.xlu0 0
        %2372 = vperm.xlu0 %2371, %v1925
        %v2373 = vpop.permute.xlu0 %2372
        %2374 = vset.pattern.permute.xlu0 0
        %2375 = vperm.xlu0 %2374, %v1926
        %v2376 = vpop.permute.xlu0 %2375
        %2377 = vset.pattern.permute.xlu0 0
        %2378 = vperm.xlu0 %2377, %v1927
        %v2379 = vpop.permute.xlu0 %2378
        %2380 = vset.pattern.permute.xlu0 0
        %2381 = vperm.xlu0 %2380, %v1928
        %v2382 = vpop.permute.xlu0 %2381
        %2383 = vset.pattern.permute.xlu0 0
        %2384 = vperm.xlu0 %2383, %v1929
        %v2385 = vpop.permute.xlu0 %2384
        %2386 = vset.pattern.permute.xlu0 0
        %2387 = vperm.xlu0 %2386, %v1930
        %v2388 = vpop.permute.xlu0 %2387
        %2389 = vset.pattern.permute.xlu0 0
        %2390 = vperm.xlu0 %2389, %v1931
        %v2391 = vpop.permute.xlu0 %2390
        %2392 = vset.pattern.permute.xlu0 0
        %2393 = vperm.xlu0 %2392, %v1932
        %v2394 = vpop.permute.xlu0 %2393
        %2395 = vset.pattern.permute.xlu0 0
        %2396 = vperm.xlu0 %2395, %v1933
        %v2397 = vpop.permute.xlu0 %2396
        %2398 = vset.pattern.permute.xlu0 0
        %2399 = vperm.xlu0 %2398, %v1934
        %v2400 = vpop.permute.xlu0 %2399
        %2401 = vset.pattern.permute.xlu0 0
        %2402 = vperm.xlu0 %2401, %v1935
        %v2403 = vpop.permute.xlu0 %2402
        %2404 = vset.pattern.permute.xlu0 0
        %2405 = vperm.xlu0 %2404, %v1936
        %v2406 = vpop.permute.xlu0 %2405
        %2407 = vset.pattern.permute.xlu0 0
        %2408 = vperm.xlu0 %2407, %v1937
        %v2409 = vpop.permute.xlu0 %2408
        %2410 = vset.pattern.permute.xlu0 0
        %2411 = vperm.xlu0 %2410, %v1938
        %v2412 = vpop.permute.xlu0 %2411
        %2413 = vset.pattern.permute.xlu0 0
        %2414 = vperm.xlu0 %2413, %v1939
        %v2415 = vpop.permute.xlu0 %2414
        %2416 = vset.pattern.permute.xlu0 0
        %2417 = vperm.xlu0 %2416, %v1940
        %v2418 = vpop.permute.xlu0 %2417
        %2419 = vset.pattern.permute.xlu0 0
        %2420 = vperm.xlu0 %2419, %v1941
        %v2421 = vpop.permute.xlu0 %2420
        %2422 = vset.pattern.permute.xlu0 0
        %2423 = vperm.xlu0 %2422, %v1942
        %v2424 = vpop.permute.xlu0 %2423
        %2425 = vset.pattern.permute.xlu0 0
        %2426 = vperm.xlu0 %2425, %v1943
        %v2427 = vpop.permute.xlu0 %2426
        %2428 = vset.pattern.permute.xlu0 0
        %2429 = vperm.xlu0 %2428, %v1944
        %v2430 = vpop.permute.xlu0 %2429
        %2431 = vset.pattern.permute.xlu0 0
        %2432 = vperm.xlu0 %2431, %v1945
        %v2433 = vpop.permute.xlu0 %2432
        %2434 = vset.pattern.permute.xlu0 0
        %2435 = vperm.xlu0 %2434, %v1946
        %v2436 = vpop.permute.xlu0 %2435
        %2437 = vset.pattern.permute.xlu0 0
        %2438 = vperm.xlu0 %2437, %v1947
        %v2439 = vpop.permute.xlu0 %2438
        %2440 = vset.pattern.permute.xlu0 0
        %2441 = vperm.xlu0 %2440, %v1948
        %v2442 = vpop.permute.xlu0 %2441
        %2443 = vset.pattern.permute.xlu0 0
        %2444 = vperm.xlu0 %2443, %v1949
        %v2445 = vpop.permute.xlu0 %2444
        %2446 = vset.pattern.permute.xlu0 0
        %2447 = vperm.xlu0 %2446, %v1950
        %v2448 = vpop.permute.xlu0 %2447
        %2449 = vset.pattern.permute.xlu0 0
        %2450 = vperm.xlu0 %2449, %v1951
        %v2451 = vpop.permute.xlu0 %2450
        %2452 = vset.pattern.permute.xlu0 0
        %2453 = vperm.xlu0 %2452, %v1952
        %v2454 = vpop.permute.xlu0 %2453
        %2455 = vset.pattern.permute.xlu0 0
        %2456 = vperm.xlu0 %2455, %v1953
        %v2457 = vpop.permute.xlu0 %2456
        %2458 = vset.pattern.permute.xlu0 0
        %2459 = vperm.xlu0 %2458, %v1954
        %v2460 = vpop.permute.xlu0 %2459
        %2461 = vset.pattern.permute.xlu0 0
        %2462 = vperm.xlu0 %2461, %v1955
        %v2463 = vpop.permute.xlu0 %2462
        %2464 = vset.pattern.permute.xlu0 0
        %2465 = vperm.xlu0 %2464, %v1956
        %v2466 = vpop.permute.xlu0 %2465
        %2467 = vset.pattern.permute.xlu0 0
        %2468 = vperm.xlu0 %2467, %v1957
        %v2469 = vpop.permute.xlu0 %2468
        %v2470 = vlaneseq
        %v2471 = vand.u32 %v2470, 127
        %v2472 = vlaneseq
        %v2473 = vshrl.u32 %v2472, 7
        %v2474 = vsub.s32 %v2471, %v2473
        %v2475 = vrot.slane %v2088, %v2474
        %v2476 = vadd.s32 %v2471, 4294967288
        %v2477 = vlaneseq
        %v2478 = vshrl.u32 %v2477, 7
        %v2479 = vsub.s32 %v2476, %v2478
        %v2480 = vrot.slane %v2091, %v2479
        %vm2481 = vcmask 130112
        %v2482 = vsel %vm2481, %v2480, %v2475
        %v2483 = vadd.s32 %v2471, 4294967280
        %v2484 = vlaneseq
        %v2485 = vshrl.u32 %v2484, 7
        %v2486 = vsub.s32 %v2483, %v2485
        %v2487 = vrot.slane %v2094, %v2486
        %vm2488 = vcmask 195712
        %v2489 = vsel %vm2488, %v2487, %v2482
        %v2490 = vadd.s32 %v2471, 4294967272
        %v2491 = vlaneseq
        %v2492 = vshrl.u32 %v2491, 7
        %v2493 = vsub.s32 %v2490, %v2492
        %v2494 = vrot.slane %v2097, %v2493
        %vm2495 = vcmask 261312
        %v2496 = vsel %vm2495, %v2494, %v2489
        %v2497 = vadd.s32 %v2471, 4294967264
        %v2498 = vlaneseq
        %v2499 = vshrl.u32 %v2498, 7
        %v2500 = vsub.s32 %v2497, %v2499
        %v2501 = vrot.slane %v2100, %v2500
        %vm2502 = vcmask 326912
        %v2503 = vsel %vm2502, %v2501, %v2496
        %v2504 = vadd.s32 %v2471, 4294967256
        %v2505 = vlaneseq
        %v2506 = vshrl.u32 %v2505, 7
        %v2507 = vsub.s32 %v2504, %v2506
        %v2508 = vrot.slane %v2103, %v2507
        %vm2509 = vcmask 392512
        %v2510 = vsel %vm2509, %v2508, %v2503
        %v2511 = vadd.s32 %v2471, 4294967248
        %v2512 = vlaneseq
        %v2513 = vshrl.u32 %v2512, 7
        %v2514 = vsub.s32 %v2511, %v2513
        %v2515 = vrot.slane %v2106, %v2514
        %vm2516 = vcmask 458112
        %v2517 = vsel %vm2516, %v2515, %v2510
        %v2518 = vadd.s32 %v2471, 4294967240
        %v2519 = vlaneseq
        %v2520 = vshrl.u32 %v2519, 7
        %v2521 = vsub.s32 %v2518, %v2520
        %v2522 = vrot.slane %v2109, %v2521
        %vm2523 = vcmask 523712
        %v2524 = vsel %vm2523, %v2522, %v2517
        %v2525 = vadd.s32 %v2471, 4294967232
        %v2526 = vlaneseq
        %v2527 = vshrl.u32 %v2526, 7
        %v2528 = vsub.s32 %v2525, %v2527
        %v2529 = vrot.slane %v2112, %v2528
        %vm2530 = vcmask 589312
        %v2531 = vsel %vm2530, %v2529, %v2524
        %v2532 = vadd.s32 %v2471, 4294967224
        %v2533 = vlaneseq
        %v2534 = vshrl.u32 %v2533, 7
        %v2535 = vsub.s32 %v2532, %v2534
        %v2536 = vrot.slane %v2115, %v2535
        %vm2537 = vcmask 654912
        %v2538 = vsel %vm2537, %v2536, %v2531
        %v2539 = vadd.s32 %v2471, 4294967216
        %v2540 = vlaneseq
        %v2541 = vshrl.u32 %v2540, 7
        %v2542 = vsub.s32 %v2539, %v2541
        %v2543 = vrot.slane %v2118, %v2542
        %vm2544 = vcmask 720512
        %v2545 = vsel %vm2544, %v2543, %v2538
        %v2546 = vadd.s32 %v2471, 4294967208
        %v2547 = vlaneseq
        %v2548 = vshrl.u32 %v2547, 7
        %v2549 = vsub.s32 %v2546, %v2548
        %v2550 = vrot.slane %v2121, %v2549
        %vm2551 = vcmask 786112
        %v2552 = vsel %vm2551, %v2550, %v2545
        %v2553 = vadd.s32 %v2471, 4294967200
        %v2554 = vlaneseq
        %v2555 = vshrl.u32 %v2554, 7
        %v2556 = vsub.s32 %v2553, %v2555
        %v2557 = vrot.slane %v2124, %v2556
        %vm2558 = vcmask 851712
        %v2559 = vsel %vm2558, %v2557, %v2552
        %v2560 = vadd.s32 %v2471, 4294967192
        %v2561 = vlaneseq
        %v2562 = vshrl.u32 %v2561, 7
        %v2563 = vsub.s32 %v2560, %v2562
        %v2564 = vrot.slane %v2127, %v2563
        %vm2565 = vcmask 917312
        %v2566 = vsel %vm2565, %v2564, %v2559
        %v2567 = vadd.s32 %v2471, 4294967184
        %v2568 = vlaneseq
        %v2569 = vshrl.u32 %v2568, 7
        %v2570 = vsub.s32 %v2567, %v2569
        %v2571 = vrot.slane %v2130, %v2570
        %vm2572 = vcmask 982912
        %v2573 = vsel %vm2572, %v2571, %v2566
        %v2574 = vadd.s32 %v2471, 4294967176
        %v2575 = vlaneseq
        %v2576 = vshrl.u32 %v2575, 7
        %v2577 = vsub.s32 %v2574, %v2576
        %v2578 = vrot.slane %v2133, %v2577
        %vm2579 = vcmask 1048512
        %v2580 = vsel %vm2579, %v2578, %v2573
        %v2581 = vlaneseq
        %v2582 = vshrl.u32 %v2581, 7
        %v2583 = vsub.s32 %v2471, %v2582
        %v2584 = vrot.slane %v2136, %v2583
        %v2585 = vlaneseq
        %v2586 = vshrl.u32 %v2585, 7
        %v2587 = vsub.s32 %v2476, %v2586
        %v2588 = vrot.slane %v2139, %v2587
        %v2589 = vsel %vm2481, %v2588, %v2584
        %v2590 = vlaneseq
        %v2591 = vshrl.u32 %v2590, 7
        %v2592 = vsub.s32 %v2483, %v2591
        %v2593 = vrot.slane %v2142, %v2592
        %v2594 = vsel %vm2488, %v2593, %v2589
        %v2595 = vlaneseq
        %v2596 = vshrl.u32 %v2595, 7
        %v2597 = vsub.s32 %v2490, %v2596
        %v2598 = vrot.slane %v2145, %v2597
        %v2599 = vsel %vm2495, %v2598, %v2594
        %v2600 = vlaneseq
        %v2601 = vshrl.u32 %v2600, 7
        %v2602 = vsub.s32 %v2497, %v2601
        %v2603 = vrot.slane %v2148, %v2602
        %v2604 = vsel %vm2502, %v2603, %v2599
        %v2605 = vlaneseq
        %v2606 = vshrl.u32 %v2605, 7
        %v2607 = vsub.s32 %v2504, %v2606
        %v2608 = vrot.slane %v2151, %v2607
        %v2609 = vsel %vm2509, %v2608, %v2604
        %v2610 = vlaneseq
        %v2611 = vshrl.u32 %v2610, 7
        %v2612 = vsub.s32 %v2511, %v2611
        %v2613 = vrot.slane %v2154, %v2612
        %v2614 = vsel %vm2516, %v2613, %v2609
        %v2615 = vlaneseq
        %v2616 = vshrl.u32 %v2615, 7
        %v2617 = vsub.s32 %v2518, %v2616
        %v2618 = vrot.slane %v2157, %v2617
        %v2619 = vsel %vm2523, %v2618, %v2614
        %v2620 = vlaneseq
        %v2621 = vshrl.u32 %v2620, 7
        %v2622 = vsub.s32 %v2525, %v2621
        %v2623 = vrot.slane %v2160, %v2622
        %v2624 = vsel %vm2530, %v2623, %v2619
        %v2625 = vlaneseq
        %v2626 = vshrl.u32 %v2625, 7
        %v2627 = vsub.s32 %v2532, %v2626
        %v2628 = vrot.slane %v2163, %v2627
        %v2629 = vsel %vm2537, %v2628, %v2624
        %v2630 = vlaneseq
        %v2631 = vshrl.u32 %v2630, 7
        %v2632 = vsub.s32 %v2539, %v2631
        %v2633 = vrot.slane %v2166, %v2632
        %v2634 = vsel %vm2544, %v2633, %v2629
        %v2635 = vlaneseq
        %v2636 = vshrl.u32 %v2635, 7
        %v2637 = vsub.s32 %v2546, %v2636
        %v2638 = vrot.slane %v2169, %v2637
        %v2639 = vsel %vm2551, %v2638, %v2634
        %v2640 = vlaneseq
        %v2641 = vshrl.u32 %v2640, 7
        %v2642 = vsub.s32 %v2553, %v2641
        %v2643 = vrot.slane %v2172, %v2642
        %v2644 = vsel %vm2558, %v2643, %v2639
        %v2645 = vlaneseq
        %v2646 = vshrl.u32 %v2645, 7
        %v2647 = vsub.s32 %v2560, %v2646
        %v2648 = vrot.slane %v2175, %v2647
        %v2649 = vsel %vm2565, %v2648, %v2644
        %v2650 = vlaneseq
        %v2651 = vshrl.u32 %v2650, 7
        %v2652 = vsub.s32 %v2567, %v2651
        %v2653 = vrot.slane %v2178, %v2652
        %v2654 = vsel %vm2572, %v2653, %v2649
        %v2655 = vlaneseq
        %v2656 = vshrl.u32 %v2655, 7
        %v2657 = vsub.s32 %v2574, %v2656
        %v2658 = vrot.slane %v2181, %v2657
        %v2659 = vsel %vm2579, %v2658, %v2654
        %v2660 = vlaneseq
        %v2661 = vshrl.u32 %v2660, 7
        %v2662 = vsub.s32 %v2471, %v2661
        %v2663 = vrot.slane %v2184, %v2662
        %v2664 = vlaneseq
        %v2665 = vshrl.u32 %v2664, 7
        %v2666 = vsub.s32 %v2476, %v2665
        %v2667 = vrot.slane %v2187, %v2666
        %v2668 = vsel %vm2481, %v2667, %v2663
        %v2669 = vlaneseq
        %v2670 = vshrl.u32 %v2669, 7
        %v2671 = vsub.s32 %v2483, %v2670
        %v2672 = vrot.slane %v2190, %v2671
        %v2673 = vsel %vm2488, %v2672, %v2668
        %v2674 = vlaneseq
        %v2675 = vshrl.u32 %v2674, 7
        %v2676 = vsub.s32 %v2490, %v2675
        %v2677 = vrot.slane %v2193, %v2676
        %v2678 = vsel %vm2495, %v2677, %v2673
        %v2679 = vlaneseq
        %v2680 = vshrl.u32 %v2679, 7
        %v2681 = vsub.s32 %v2497, %v2680
        %v2682 = vrot.slane %v2196, %v2681
        %v2683 = vsel %vm2502, %v2682, %v2678
        %v2684 = vlaneseq
        %v2685 = vshrl.u32 %v2684, 7
        %v2686 = vsub.s32 %v2504, %v2685
        %v2687 = vrot.slane %v2199, %v2686
        %v2688 = vsel %vm2509, %v2687, %v2683
        %v2689 = vlaneseq
        %v2690 = vshrl.u32 %v2689, 7
        %v2691 = vsub.s32 %v2511, %v2690
        %v2692 = vrot.slane %v2202, %v2691
        %v2693 = vsel %vm2516, %v2692, %v2688
        %v2694 = vlaneseq
        %v2695 = vshrl.u32 %v2694, 7
        %v2696 = vsub.s32 %v2518, %v2695
        %v2697 = vrot.slane %v2205, %v2696
        %v2698 = vsel %vm2523, %v2697, %v2693
        %v2699 = vlaneseq
        %v2700 = vshrl.u32 %v2699, 7
        %v2701 = vsub.s32 %v2525, %v2700
        %v2702 = vrot.slane %v2208, %v2701
        %v2703 = vsel %vm2530, %v2702, %v2698
        %v2704 = vlaneseq
        %v2705 = vshrl.u32 %v2704, 7
        %v2706 = vsub.s32 %v2532, %v2705
        %v2707 = vrot.slane %v2211, %v2706
        %v2708 = vsel %vm2537, %v2707, %v2703
        %v2709 = vlaneseq
        %v2710 = vshrl.u32 %v2709, 7
        %v2711 = vsub.s32 %v2539, %v2710
        %v2712 = vrot.slane %v2214, %v2711
        %v2713 = vsel %vm2544, %v2712, %v2708
        %v2714 = vlaneseq
        %v2715 = vshrl.u32 %v2714, 7
        %v2716 = vsub.s32 %v2546, %v2715
        %v2717 = vrot.slane %v2217, %v2716
        %v2718 = vsel %vm2551, %v2717, %v2713
        %v2719 = vlaneseq
        %v2720 = vshrl.u32 %v2719, 7
        %v2721 = vsub.s32 %v2553, %v2720
        %v2722 = vrot.slane %v2220, %v2721
        %v2723 = vsel %vm2558, %v2722, %v2718
        %v2724 = vlaneseq
        %v2725 = vshrl.u32 %v2724, 7
        %v2726 = vsub.s32 %v2560, %v2725
        %v2727 = vrot.slane %v2223, %v2726
        %v2728 = vsel %vm2565, %v2727, %v2723
        %v2729 = vlaneseq
        %v2730 = vshrl.u32 %v2729, 7
        %v2731 = vsub.s32 %v2567, %v2730
        %v2732 = vrot.slane %v2226, %v2731
        %v2733 = vsel %vm2572, %v2732, %v2728
        %v2734 = vlaneseq
        %v2735 = vshrl.u32 %v2734, 7
        %v2736 = vsub.s32 %v2574, %v2735
        %v2737 = vrot.slane %v2229, %v2736
        %v2738 = vsel %vm2579, %v2737, %v2733
        %v2739 = vlaneseq
        %v2740 = vshrl.u32 %v2739, 7
        %v2741 = vsub.s32 %v2471, %v2740
        %v2742 = vrot.slane %v2232, %v2741
        %v2743 = vlaneseq
        %v2744 = vshrl.u32 %v2743, 7
        %v2745 = vsub.s32 %v2476, %v2744
        %v2746 = vrot.slane %v2235, %v2745
        %v2747 = vsel %vm2481, %v2746, %v2742
        %v2748 = vlaneseq
        %v2749 = vshrl.u32 %v2748, 7
        %v2750 = vsub.s32 %v2483, %v2749
        %v2751 = vrot.slane %v2238, %v2750
        %v2752 = vsel %vm2488, %v2751, %v2747
        %v2753 = vlaneseq
        %v2754 = vshrl.u32 %v2753, 7
        %v2755 = vsub.s32 %v2490, %v2754
        %v2756 = vrot.slane %v2241, %v2755
        %v2757 = vsel %vm2495, %v2756, %v2752
        %v2758 = vlaneseq
        %v2759 = vshrl.u32 %v2758, 7
        %v2760 = vsub.s32 %v2497, %v2759
        %v2761 = vrot.slane %v2244, %v2760
        %v2762 = vsel %vm2502, %v2761, %v2757
        %v2763 = vlaneseq
        %v2764 = vshrl.u32 %v2763, 7
        %v2765 = vsub.s32 %v2504, %v2764
        %v2766 = vrot.slane %v2247, %v2765
        %v2767 = vsel %vm2509, %v2766, %v2762
        %v2768 = vlaneseq
        %v2769 = vshrl.u32 %v2768, 7
        %v2770 = vsub.s32 %v2511, %v2769
        %v2771 = vrot.slane %v2250, %v2770
        %v2772 = vsel %vm2516, %v2771, %v2767
        %v2773 = vlaneseq
        %v2774 = vshrl.u32 %v2773, 7
        %v2775 = vsub.s32 %v2518, %v2774
        %v2776 = vrot.slane %v2253, %v2775
        %v2777 = vsel %vm2523, %v2776, %v2772
        %v2778 = vlaneseq
        %v2779 = vshrl.u32 %v2778, 7
        %v2780 = vsub.s32 %v2525, %v2779
        %v2781 = vrot.slane %v2256, %v2780
        %v2782 = vsel %vm2530, %v2781, %v2777
        %v2783 = vlaneseq
        %v2784 = vshrl.u32 %v2783, 7
        %v2785 = vsub.s32 %v2532, %v2784
        %v2786 = vrot.slane %v2259, %v2785
        %v2787 = vsel %vm2537, %v2786, %v2782
        %v2788 = vlaneseq
        %v2789 = vshrl.u32 %v2788, 7
        %v2790 = vsub.s32 %v2539, %v2789
        %v2791 = vrot.slane %v2262, %v2790
        %v2792 = vsel %vm2544, %v2791, %v2787
        %v2793 = vlaneseq
        %v2794 = vshrl.u32 %v2793, 7
        %v2795 = vsub.s32 %v2546, %v2794
        %v2796 = vrot.slane %v2265, %v2795
        %v2797 = vsel %vm2551, %v2796, %v2792
        %v2798 = vlaneseq
        %v2799 = vshrl.u32 %v2798, 7
        %v2800 = vsub.s32 %v2553, %v2799
        %v2801 = vrot.slane %v2268, %v2800
        %v2802 = vsel %vm2558, %v2801, %v2797
        %v2803 = vlaneseq
        %v2804 = vshrl.u32 %v2803, 7
        %v2805 = vsub.s32 %v2560, %v2804
        %v2806 = vrot.slane %v2271, %v2805
        %v2807 = vsel %vm2565, %v2806, %v2802
        %v2808 = vlaneseq
        %v2809 = vshrl.u32 %v2808, 7
        %v2810 = vsub.s32 %v2567, %v2809
        %v2811 = vrot.slane %v2274, %v2810
        %v2812 = vsel %vm2572, %v2811, %v2807
        %v2813 = vlaneseq
        %v2814 = vshrl.u32 %v2813, 7
        %v2815 = vsub.s32 %v2574, %v2814
        %v2816 = vrot.slane %v2277, %v2815
        %v2817 = vsel %vm2579, %v2816, %v2812
        %v2818 = vlaneseq
        %v2819 = vshrl.u32 %v2818, 7
        %v2820 = vsub.s32 %v2471, %v2819
        %v2821 = vrot.slane %v2280, %v2820
        %v2822 = vlaneseq
        %v2823 = vshrl.u32 %v2822, 7
        %v2824 = vsub.s32 %v2476, %v2823
        %v2825 = vrot.slane %v2283, %v2824
        %v2826 = vsel %vm2481, %v2825, %v2821
        %v2827 = vlaneseq
        %v2828 = vshrl.u32 %v2827, 7
        %v2829 = vsub.s32 %v2483, %v2828
        %v2830 = vrot.slane %v2286, %v2829
        %v2831 = vsel %vm2488, %v2830, %v2826
        %v2832 = vlaneseq
        %v2833 = vshrl.u32 %v2832, 7
        %v2834 = vsub.s32 %v2490, %v2833
        %v2835 = vrot.slane %v2289, %v2834
        %v2836 = vsel %vm2495, %v2835, %v2831
        %v2837 = vlaneseq
        %v2838 = vshrl.u32 %v2837, 7
        %v2839 = vsub.s32 %v2497, %v2838
        %v2840 = vrot.slane %v2292, %v2839
        %v2841 = vsel %vm2502, %v2840, %v2836
        %v2842 = vlaneseq
        %v2843 = vshrl.u32 %v2842, 7
        %v2844 = vsub.s32 %v2504, %v2843
        %v2845 = vrot.slane %v2295, %v2844
        %v2846 = vsel %vm2509, %v2845, %v2841
        %v2847 = vlaneseq
        %v2848 = vshrl.u32 %v2847, 7
        %v2849 = vsub.s32 %v2511, %v2848
        %v2850 = vrot.slane %v2298, %v2849
        %v2851 = vsel %vm2516, %v2850, %v2846
        %v2852 = vlaneseq
        %v2853 = vshrl.u32 %v2852, 7
        %v2854 = vsub.s32 %v2518, %v2853
        %v2855 = vrot.slane %v2301, %v2854
        %v2856 = vsel %vm2523, %v2855, %v2851
        %v2857 = vlaneseq
        %v2858 = vshrl.u32 %v2857, 7
        %v2859 = vsub.s32 %v2525, %v2858
        %v2860 = vrot.slane %v2304, %v2859
        %v2861 = vsel %vm2530, %v2860, %v2856
        %v2862 = vlaneseq
        %v2863 = vshrl.u32 %v2862, 7
        %v2864 = vsub.s32 %v2532, %v2863
        %v2865 = vrot.slane %v2307, %v2864
        %v2866 = vsel %vm2537, %v2865, %v2861
        %v2867 = vlaneseq
        %v2868 = vshrl.u32 %v2867, 7
        %v2869 = vsub.s32 %v2539, %v2868
        %v2870 = vrot.slane %v2310, %v2869
        %v2871 = vsel %vm2544, %v2870, %v2866
        %v2872 = vlaneseq
        %v2873 = vshrl.u32 %v2872, 7
        %v2874 = vsub.s32 %v2546, %v2873
        %v2875 = vrot.slane %v2313, %v2874
        %v2876 = vsel %vm2551, %v2875, %v2871
        %v2877 = vlaneseq
        %v2878 = vshrl.u32 %v2877, 7
        %v2879 = vsub.s32 %v2553, %v2878
        %v2880 = vrot.slane %v2316, %v2879
        %v2881 = vsel %vm2558, %v2880, %v2876
        %v2882 = vlaneseq
        %v2883 = vshrl.u32 %v2882, 7
        %v2884 = vsub.s32 %v2560, %v2883
        %v2885 = vrot.slane %v2319, %v2884
        %v2886 = vsel %vm2565, %v2885, %v2881
        %v2887 = vlaneseq
        %v2888 = vshrl.u32 %v2887, 7
        %v2889 = vsub.s32 %v2567, %v2888
        %v2890 = vrot.slane %v2322, %v2889
        %v2891 = vsel %vm2572, %v2890, %v2886
        %v2892 = vlaneseq
        %v2893 = vshrl.u32 %v2892, 7
        %v2894 = vsub.s32 %v2574, %v2893
        %v2895 = vrot.slane %v2325, %v2894
        %v2896 = vsel %vm2579, %v2895, %v2891
        %v2897 = vlaneseq
        %v2898 = vshrl.u32 %v2897, 7
        %v2899 = vsub.s32 %v2471, %v2898
        %v2900 = vrot.slane %v2328, %v2899
        %v2901 = vlaneseq
        %v2902 = vshrl.u32 %v2901, 7
        %v2903 = vsub.s32 %v2476, %v2902
        %v2904 = vrot.slane %v2331, %v2903
        %v2905 = vsel %vm2481, %v2904, %v2900
        %v2906 = vlaneseq
        %v2907 = vshrl.u32 %v2906, 7
        %v2908 = vsub.s32 %v2483, %v2907
        %v2909 = vrot.slane %v2334, %v2908
        %v2910 = vsel %vm2488, %v2909, %v2905
        %v2911 = vlaneseq
        %v2912 = vshrl.u32 %v2911, 7
        %v2913 = vsub.s32 %v2490, %v2912
        %v2914 = vrot.slane %v2337, %v2913
        %v2915 = vsel %vm2495, %v2914, %v2910
        %v2916 = vlaneseq
        %v2917 = vshrl.u32 %v2916, 7
        %v2918 = vsub.s32 %v2497, %v2917
        %v2919 = vrot.slane %v2340, %v2918
        %v2920 = vsel %vm2502, %v2919, %v2915
        %v2921 = vlaneseq
        %v2922 = vshrl.u32 %v2921, 7
        %v2923 = vsub.s32 %v2504, %v2922
        %v2924 = vrot.slane %v2343, %v2923
        %v2925 = vsel %vm2509, %v2924, %v2920
        %v2926 = vlaneseq
        %v2927 = vshrl.u32 %v2926, 7
        %v2928 = vsub.s32 %v2511, %v2927
        %v2929 = vrot.slane %v2346, %v2928
        %v2930 = vsel %vm2516, %v2929, %v2925
        %v2931 = vlaneseq
        %v2932 = vshrl.u32 %v2931, 7
        %v2933 = vsub.s32 %v2518, %v2932
        %v2934 = vrot.slane %v2349, %v2933
        %v2935 = vsel %vm2523, %v2934, %v2930
        %v2936 = vlaneseq
        %v2937 = vshrl.u32 %v2936, 7
        %v2938 = vsub.s32 %v2525, %v2937
        %v2939 = vrot.slane %v2352, %v2938
        %v2940 = vsel %vm2530, %v2939, %v2935
        %v2941 = vlaneseq
        %v2942 = vshrl.u32 %v2941, 7
        %v2943 = vsub.s32 %v2532, %v2942
        %v2944 = vrot.slane %v2355, %v2943
        %v2945 = vsel %vm2537, %v2944, %v2940
        %v2946 = vlaneseq
        %v2947 = vshrl.u32 %v2946, 7
        %v2948 = vsub.s32 %v2539, %v2947
        %v2949 = vrot.slane %v2358, %v2948
        %v2950 = vsel %vm2544, %v2949, %v2945
        %v2951 = vlaneseq
        %v2952 = vshrl.u32 %v2951, 7
        %v2953 = vsub.s32 %v2546, %v2952
        %v2954 = vrot.slane %v2361, %v2953
        %v2955 = vsel %vm2551, %v2954, %v2950
        %v2956 = vlaneseq
        %v2957 = vshrl.u32 %v2956, 7
        %v2958 = vsub.s32 %v2553, %v2957
        %v2959 = vrot.slane %v2364, %v2958
        %v2960 = vsel %vm2558, %v2959, %v2955
        %v2961 = vlaneseq
        %v2962 = vshrl.u32 %v2961, 7
        %v2963 = vsub.s32 %v2560, %v2962
        %v2964 = vrot.slane %v2367, %v2963
        %v2965 = vsel %vm2565, %v2964, %v2960
        %v2966 = vlaneseq
        %v2967 = vshrl.u32 %v2966, 7
        %v2968 = vsub.s32 %v2567, %v2967
        %v2969 = vrot.slane %v2370, %v2968
        %v2970 = vsel %vm2572, %v2969, %v2965
        %v2971 = vlaneseq
        %v2972 = vshrl.u32 %v2971, 7
        %v2973 = vsub.s32 %v2574, %v2972
        %v2974 = vrot.slane %v2373, %v2973
        %v2975 = vsel %vm2579, %v2974, %v2970
        %v2976 = vlaneseq
        %v2977 = vshrl.u32 %v2976, 7
        %v2978 = vsub.s32 %v2471, %v2977
        %v2979 = vrot.slane %v2376, %v2978
        %v2980 = vlaneseq
        %v2981 = vshrl.u32 %v2980, 7
        %v2982 = vsub.s32 %v2476, %v2981
        %v2983 = vrot.slane %v2379, %v2982
        %v2984 = vsel %vm2481, %v2983, %v2979
        %v2985 = vlaneseq
        %v2986 = vshrl.u32 %v2985, 7
        %v2987 = vsub.s32 %v2483, %v2986
        %v2988 = vrot.slane %v2382, %v2987
        %v2989 = vsel %vm2488, %v2988, %v2984
        %v2990 = vlaneseq
        %v2991 = vshrl.u32 %v2990, 7
        %v2992 = vsub.s32 %v2490, %v2991
        %v2993 = vrot.slane %v2385, %v2992
        %v2994 = vsel %vm2495, %v2993, %v2989
        %v2995 = vlaneseq
        %v2996 = vshrl.u32 %v2995, 7
        %v2997 = vsub.s32 %v2497, %v2996
        %v2998 = vrot.slane %v2388, %v2997
        %v2999 = vsel %vm2502, %v2998, %v2994
        %v3000 = vlaneseq
        %v3001 = vshrl.u32 %v3000, 7
        %v3002 = vsub.s32 %v2504, %v3001
        %v3003 = vrot.slane %v2391, %v3002
        %v3004 = vsel %vm2509, %v3003, %v2999
        %v3005 = vlaneseq
        %v3006 = vshrl.u32 %v3005, 7
        %v3007 = vsub.s32 %v2511, %v3006
        %v3008 = vrot.slane %v2394, %v3007
        %v3009 = vsel %vm2516, %v3008, %v3004
        %v3010 = vlaneseq
        %v3011 = vshrl.u32 %v3010, 7
        %v3012 = vsub.s32 %v2518, %v3011
        %v3013 = vrot.slane %v2397, %v3012
        %v3014 = vsel %vm2523, %v3013, %v3009
        %v3015 = vlaneseq
        %v3016 = vshrl.u32 %v3015, 7
        %v3017 = vsub.s32 %v2525, %v3016
        %v3018 = vrot.slane %v2400, %v3017
        %v3019 = vsel %vm2530, %v3018, %v3014
        %v3020 = vlaneseq
        %v3021 = vshrl.u32 %v3020, 7
        %v3022 = vsub.s32 %v2532, %v3021
        %v3023 = vrot.slane %v2403, %v3022
        %v3024 = vsel %vm2537, %v3023, %v3019
        %v3025 = vlaneseq
        %v3026 = vshrl.u32 %v3025, 7
        %v3027 = vsub.s32 %v2539, %v3026
        %v3028 = vrot.slane %v2406, %v3027
        %v3029 = vsel %vm2544, %v3028, %v3024
        %v3030 = vlaneseq
        %v3031 = vshrl.u32 %v3030, 7
        %v3032 = vsub.s32 %v2546, %v3031
        %v3033 = vrot.slane %v2409, %v3032
        %v3034 = vsel %vm2551, %v3033, %v3029
        %v3035 = vlaneseq
        %v3036 = vshrl.u32 %v3035, 7
        %v3037 = vsub.s32 %v2553, %v3036
        %v3038 = vrot.slane %v2412, %v3037
        %v3039 = vsel %vm2558, %v3038, %v3034
        %v3040 = vlaneseq
        %v3041 = vshrl.u32 %v3040, 7
        %v3042 = vsub.s32 %v2560, %v3041
        %v3043 = vrot.slane %v2415, %v3042
        %v3044 = vsel %vm2565, %v3043, %v3039
        %v3045 = vlaneseq
        %v3046 = vshrl.u32 %v3045, 7
        %v3047 = vsub.s32 %v2567, %v3046
        %v3048 = vrot.slane %v2418, %v3047
        %v3049 = vsel %vm2572, %v3048, %v3044
        %v3050 = vlaneseq
        %v3051 = vshrl.u32 %v3050, 7
        %v3052 = vsub.s32 %v2574, %v3051
        %v3053 = vrot.slane %v2421, %v3052
        %v3054 = vsel %vm2579, %v3053, %v3049
        %v3055 = vlaneseq
        %v3056 = vshrl.u32 %v3055, 7
        %v3057 = vsub.s32 %v2471, %v3056
        %v3058 = vrot.slane %v2424, %v3057
        %v3059 = vlaneseq
        %v3060 = vshrl.u32 %v3059, 7
        %v3061 = vsub.s32 %v2476, %v3060
        %v3062 = vrot.slane %v2427, %v3061
        %v3063 = vsel %vm2481, %v3062, %v3058
        %v3064 = vlaneseq
        %v3065 = vshrl.u32 %v3064, 7
        %v3066 = vsub.s32 %v2483, %v3065
        %v3067 = vrot.slane %v2430, %v3066
        %v3068 = vsel %vm2488, %v3067, %v3063
        %v3069 = vlaneseq
        %v3070 = vshrl.u32 %v3069, 7
        %v3071 = vsub.s32 %v2490, %v3070
        %v3072 = vrot.slane %v2433, %v3071
        %v3073 = vsel %vm2495, %v3072, %v3068
        %v3074 = vlaneseq
        %v3075 = vshrl.u32 %v3074, 7
        %v3076 = vsub.s32 %v2497, %v3075
        %v3077 = vrot.slane %v2436, %v3076
        %v3078 = vsel %vm2502, %v3077, %v3073
        %v3079 = vlaneseq
        %v3080 = vshrl.u32 %v3079, 7
        %v3081 = vsub.s32 %v2504, %v3080
        %v3082 = vrot.slane %v2439, %v3081
        %v3083 = vsel %vm2509, %v3082, %v3078
        %v3084 = vlaneseq
        %v3085 = vshrl.u32 %v3084, 7
        %v3086 = vsub.s32 %v2511, %v3085
        %v3087 = vrot.slane %v2442, %v3086
        %v3088 = vsel %vm2516, %v3087, %v3083
        %v3089 = vlaneseq
        %v3090 = vshrl.u32 %v3089, 7
        %v3091 = vsub.s32 %v2518, %v3090
        %v3092 = vrot.slane %v2445, %v3091
        %v3093 = vsel %vm2523, %v3092, %v3088
        %v3094 = vlaneseq
        %v3095 = vshrl.u32 %v3094, 7
        %v3096 = vsub.s32 %v2525, %v3095
        %v3097 = vrot.slane %v2448, %v3096
        %v3098 = vsel %vm2530, %v3097, %v3093
        %v3099 = vlaneseq
        %v3100 = vshrl.u32 %v3099, 7
        %v3101 = vsub.s32 %v2532, %v3100
        %v3102 = vrot.slane %v2451, %v3101
        %v3103 = vsel %vm2537, %v3102, %v3098
        %v3104 = vlaneseq
        %v3105 = vshrl.u32 %v3104, 7
        %v3106 = vsub.s32 %v2539, %v3105
        %v3107 = vrot.slane %v2454, %v3106
        %v3108 = vsel %vm2544, %v3107, %v3103
        %v3109 = vlaneseq
        %v3110 = vshrl.u32 %v3109, 7
        %v3111 = vsub.s32 %v2546, %v3110
        %v3112 = vrot.slane %v2457, %v3111
        %v3113 = vsel %vm2551, %v3112, %v3108
        %v3114 = vlaneseq
        %v3115 = vshrl.u32 %v3114, 7
        %v3116 = vsub.s32 %v2553, %v3115
        %v3117 = vrot.slane %v2460, %v3116
        %v3118 = vsel %vm2558, %v3117, %v3113
        %v3119 = vlaneseq
        %v3120 = vshrl.u32 %v3119, 7
        %v3121 = vsub.s32 %v2560, %v3120
        %v3122 = vrot.slane %v2463, %v3121
        %v3123 = vsel %vm2565, %v3122, %v3118
        %v3124 = vlaneseq
        %v3125 = vshrl.u32 %v3124, 7
        %v3126 = vsub.s32 %v2567, %v3125
        %v3127 = vrot.slane %v2466, %v3126
        %v3128 = vsel %vm2572, %v3127, %v3123
        %v3129 = vlaneseq
        %v3130 = vshrl.u32 %v3129, 7
        %v3131 = vsub.s32 %v2574, %v3130
        %v3132 = vrot.slane %v2469, %v3131
        %v3133 = vsel %vm2579, %v3132, %v3128
        %vm3134 = vcmask 1041409
        %v3135 = vsel %vm3134, %v2659, %v2580
        %vm3136 = vcmask 1042434
        %v3137 = vsel %vm3136, %v2738, %v3135
        %vm3138 = vcmask 1043459
        %v3139 = vsel %vm3138, %v2817, %v3137
        %vm3140 = vcmask 1044484
        %v3141 = vsel %vm3140, %v2896, %v3139
        %vm3142 = vcmask 1045509
        %v3143 = vsel %vm3142, %v2975, %v3141
        %vm3144 = vcmask 1046534
        %v3145 = vsel %vm3144, %v3054, %v3143
        %vm3146 = vcmask 1047559
        %v3147 = vsel %vm3146, %v3133, %v3145
        %3149 = vmax.xlane.f32.xlu0 %v3147
        %v3150 = vpop.xlane.xlu0 %3149
        %v3152 = vlaneseq
        %v3153 = vshrl.u32 %v3152, 7
        %v3154 = vsub.s32 0, %v3153
        %v3155 = vrot.slane %v3150, %v3154
        %v3156 = vlaneseq
        %v3157 = vshrl.u32 %v3156, 7
        %v3158 = vsub.s32 1, %v3157
        %v3159 = vrot.slane %v3150, %v3158
        %v3160 = vlaneseq
        %v3161 = vshrl.u32 %v3160, 7
        %v3162 = vsub.s32 2, %v3161
        %v3163 = vrot.slane %v3150, %v3162
        %v3164 = vlaneseq
        %v3165 = vshrl.u32 %v3164, 7
        %v3166 = vsub.s32 3, %v3165
        %v3167 = vrot.slane %v3150, %v3166
        %v3168 = vlaneseq
        %v3169 = vshrl.u32 %v3168, 7
        %v3170 = vsub.s32 4, %v3169
        %v3171 = vrot.slane %v3150, %v3170
        %v3172 = vlaneseq
        %v3173 = vshrl.u32 %v3172, 7
        %v3174 = vsub.s32 5, %v3173
        %v3175 = vrot.slane %v3150, %v3174
        %v3176 = vlaneseq
        %v3177 = vshrl.u32 %v3176, 7
        %v3178 = vsub.s32 6, %v3177
        %v3179 = vrot.slane %v3150, %v3178
        %v3180 = vlaneseq
        %v3181 = vshrl.u32 %v3180, 7
        %v3182 = vsub.s32 7, %v3181
        %v3183 = vrot.slane %v3150, %v3182
        %v3192 = vsub.f32 %v1830, %v3155
        %v3193 = vsub.f32 %v1831, %v3155
        %v3194 = vsub.f32 %v1832, %v3155
        %v3195 = vsub.f32 %v1833, %v3155
        %v3196 = vsub.f32 %v1834, %v3155
        %v3197 = vsub.f32 %v1835, %v3155
        %v3198 = vsub.f32 %v1836, %v3155
        %v3199 = vsub.f32 %v1837, %v3155
        %v3200 = vsub.f32 %v1838, %v3155
        %v3201 = vsub.f32 %v1839, %v3155
        %v3202 = vsub.f32 %v1840, %v3155
        %v3203 = vsub.f32 %v1841, %v3155
        %v3204 = vsub.f32 %v1842, %v3155
        %v3205 = vsub.f32 %v1843, %v3155
        %v3206 = vsub.f32 %v1844, %v3155
        %v3207 = vsub.f32 %v1845, %v3155
        %v3208 = vsub.f32 %v1846, %v3159
        %v3209 = vsub.f32 %v1847, %v3159
        %v3210 = vsub.f32 %v1848, %v3159
        %v3211 = vsub.f32 %v1849, %v3159
        %v3212 = vsub.f32 %v1850, %v3159
        %v3213 = vsub.f32 %v1851, %v3159
        %v3214 = vsub.f32 %v1852, %v3159
        %v3215 = vsub.f32 %v1853, %v3159
        %v3216 = vsub.f32 %v1854, %v3159
        %v3217 = vsub.f32 %v1855, %v3159
        %v3218 = vsub.f32 %v1856, %v3159
        %v3219 = vsub.f32 %v1857, %v3159
        %v3220 = vsub.f32 %v1858, %v3159
        %v3221 = vsub.f32 %v1859, %v3159
        %v3222 = vsub.f32 %v1860, %v3159
        %v3223 = vsub.f32 %v1861, %v3159
        %v3224 = vsub.f32 %v1862, %v3163
        %v3225 = vsub.f32 %v1863, %v3163
        %v3226 = vsub.f32 %v1864, %v3163
        %v3227 = vsub.f32 %v1865, %v3163
        %v3228 = vsub.f32 %v1866, %v3163
        %v3229 = vsub.f32 %v1867, %v3163
        %v3230 = vsub.f32 %v1868, %v3163
        %v3231 = vsub.f32 %v1869, %v3163
        %v3232 = vsub.f32 %v1870, %v3163
        %v3233 = vsub.f32 %v1871, %v3163
        %v3234 = vsub.f32 %v1872, %v3163
        %v3235 = vsub.f32 %v1873, %v3163
        %v3236 = vsub.f32 %v1874, %v3163
        %v3237 = vsub.f32 %v1875, %v3163
        %v3238 = vsub.f32 %v1876, %v3163
        %v3239 = vsub.f32 %v1877, %v3163
        %v3240 = vsub.f32 %v1878, %v3167
        %v3241 = vsub.f32 %v1879, %v3167
        %v3242 = vsub.f32 %v1880, %v3167
        %v3243 = vsub.f32 %v1881, %v3167
        %v3244 = vsub.f32 %v1882, %v3167
        %v3245 = vsub.f32 %v1883, %v3167
        %v3246 = vsub.f32 %v1884, %v3167
        %v3247 = vsub.f32 %v1885, %v3167
        %v3248 = vsub.f32 %v1886, %v3167
        %v3249 = vsub.f32 %v1887, %v3167
        %v3250 = vsub.f32 %v1888, %v3167
        %v3251 = vsub.f32 %v1889, %v3167
        %v3252 = vsub.f32 %v1890, %v3167
        %v3253 = vsub.f32 %v1891, %v3167
        %v3254 = vsub.f32 %v1892, %v3167
        %v3255 = vsub.f32 %v1893, %v3167
        %v3256 = vsub.f32 %v1894, %v3171
        %v3257 = vsub.f32 %v1895, %v3171
        %v3258 = vsub.f32 %v1896, %v3171
        %v3259 = vsub.f32 %v1897, %v3171
        %v3260 = vsub.f32 %v1898, %v3171
        %v3261 = vsub.f32 %v1899, %v3171
        %v3262 = vsub.f32 %v1900, %v3171
        %v3263 = vsub.f32 %v1901, %v3171
        %v3264 = vsub.f32 %v1902, %v3171
        %v3265 = vsub.f32 %v1903, %v3171
        %v3266 = vsub.f32 %v1904, %v3171
        %v3267 = vsub.f32 %v1905, %v3171
        %v3268 = vsub.f32 %v1906, %v3171
        %v3269 = vsub.f32 %v1907, %v3171
        %v3270 = vsub.f32 %v1908, %v3171
        %v3271 = vsub.f32 %v1909, %v3171
        %v3272 = vsub.f32 %v1910, %v3175
        %v3273 = vsub.f32 %v1911, %v3175
        %v3274 = vsub.f32 %v1912, %v3175
        %v3275 = vsub.f32 %v1913, %v3175
        %v3276 = vsub.f32 %v1914, %v3175
        %v3277 = vsub.f32 %v1915, %v3175
        %v3278 = vsub.f32 %v1916, %v3175
        %v3279 = vsub.f32 %v1917, %v3175
        %v3280 = vsub.f32 %v1918, %v3175
        %v3281 = vsub.f32 %v1919, %v3175
        %v3282 = vsub.f32 %v1920, %v3175
        %v3283 = vsub.f32 %v1921, %v3175
        %v3284 = vsub.f32 %v1922, %v3175
        %v3285 = vsub.f32 %v1923, %v3175
        %v3286 = vsub.f32 %v1924, %v3175
        %v3287 = vsub.f32 %v1925, %v3175
        %v3288 = vsub.f32 %v1926, %v3179
        %v3289 = vsub.f32 %v1927, %v3179
        %v3290 = vsub.f32 %v1928, %v3179
        %v3291 = vsub.f32 %v1929, %v3179
        %v3292 = vsub.f32 %v1930, %v3179
        %v3293 = vsub.f32 %v1931, %v3179
        %v3294 = vsub.f32 %v1932, %v3179
        %v3295 = vsub.f32 %v1933, %v3179
        %v3296 = vsub.f32 %v1934, %v3179
        %v3297 = vsub.f32 %v1935, %v3179
        %v3298 = vsub.f32 %v1936, %v3179
        %v3299 = vsub.f32 %v1937, %v3179
        %v3300 = vsub.f32 %v1938, %v3179
        %v3301 = vsub.f32 %v1939, %v3179
        %v3302 = vsub.f32 %v1940, %v3179
        %v3303 = vsub.f32 %v1941, %v3179
        %v3304 = vsub.f32 %v1942, %v3183
        %v3305 = vsub.f32 %v1943, %v3183
        %v3306 = vsub.f32 %v1944, %v3183
        %v3307 = vsub.f32 %v1945, %v3183
        %v3308 = vsub.f32 %v1946, %v3183
        %v3309 = vsub.f32 %v1947, %v3183
        %v3310 = vsub.f32 %v1948, %v3183
        %v3311 = vsub.f32 %v1949, %v3183
        %v3312 = vsub.f32 %v1950, %v3183
        %v3313 = vsub.f32 %v1951, %v3183
        %v3314 = vsub.f32 %v1952, %v3183
        %v3315 = vsub.f32 %v1953, %v3183
        %v3316 = vsub.f32 %v1954, %v3183
        %v3317 = vsub.f32 %v1955, %v3183
        %v3318 = vsub.f32 %v1956, %v3183
        %v3319 = vsub.f32 %v1957, %v3183
        %v3320 = vmul.f32 %v3192, 1.442695
        %v3321 = vpow.pop %v3320
        %v3322 = vmul.f32 %v3193, 1.442695
        %v3323 = vpow.pop %v3322
        %v3324 = vmul.f32 %v3194, 1.442695
        %v3325 = vpow.pop %v3324
        %v3326 = vmul.f32 %v3195, 1.442695
        %v3327 = vpow.pop %v3326
        %v3328 = vmul.f32 %v3196, 1.442695
        %v3329 = vpow.pop %v3328
        %v3330 = vmul.f32 %v3197, 1.442695
        %v3331 = vpow.pop %v3330
        %v3332 = vmul.f32 %v3198, 1.442695
        %v3333 = vpow.pop %v3332
        %v3334 = vmul.f32 %v3199, 1.442695
        %v3335 = vpow.pop %v3334
        %v3336 = vmul.f32 %v3200, 1.442695
        %v3337 = vpow.pop %v3336
        %v3338 = vmul.f32 %v3201, 1.442695
        %v3339 = vpow.pop %v3338
        %v3340 = vmul.f32 %v3202, 1.442695
        %v3341 = vpow.pop %v3340
        %v3342 = vmul.f32 %v3203, 1.442695
        %v3343 = vpow.pop %v3342
        %v3344 = vmul.f32 %v3204, 1.442695
        %v3345 = vpow.pop %v3344
        %v3346 = vmul.f32 %v3205, 1.442695
        %v3347 = vpow.pop %v3346
        %v3348 = vmul.f32 %v3206, 1.442695
        %v3349 = vpow.pop %v3348
        %v3350 = vmul.f32 %v3207, 1.442695
        %v3351 = vpow.pop %v3350
        %v3352 = vmul.f32 %v3208, 1.442695
        %v3353 = vpow.pop %v3352
        %v3354 = vmul.f32 %v3209, 1.442695
        %v3355 = vpow.pop %v3354
        %v3356 = vmul.f32 %v3210, 1.442695
        %v3357 = vpow.pop %v3356
        %v3358 = vmul.f32 %v3211, 1.442695
        %v3359 = vpow.pop %v3358
        %v3360 = vmul.f32 %v3212, 1.442695
        %v3361 = vpow.pop %v3360
        %v3362 = vmul.f32 %v3213, 1.442695
        %v3363 = vpow.pop %v3362
        %v3364 = vmul.f32 %v3214, 1.442695
        %v3365 = vpow.pop %v3364
        %v3366 = vmul.f32 %v3215, 1.442695
        %v3367 = vpow.pop %v3366
        %v3368 = vmul.f32 %v3216, 1.442695
        %v3369 = vpow.pop %v3368
        %v3370 = vmul.f32 %v3217, 1.442695
        %v3371 = vpow.pop %v3370
        %v3372 = vmul.f32 %v3218, 1.442695
        %v3373 = vpow.pop %v3372
        %v3374 = vmul.f32 %v3219, 1.442695
        %v3375 = vpow.pop %v3374
        %v3376 = vmul.f32 %v3220, 1.442695
        %v3377 = vpow.pop %v3376
        %v3378 = vmul.f32 %v3221, 1.442695
        %v3379 = vpow.pop %v3378
        %v3380 = vmul.f32 %v3222, 1.442695
        %v3381 = vpow.pop %v3380
        %v3382 = vmul.f32 %v3223, 1.442695
        %v3383 = vpow.pop %v3382
        %v3384 = vmul.f32 %v3224, 1.442695
        %v3385 = vpow.pop %v3384
        %v3386 = vmul.f32 %v3225, 1.442695
        %v3387 = vpow.pop %v3386
        %v3388 = vmul.f32 %v3226, 1.442695
        %v3389 = vpow.pop %v3388
        %v3390 = vmul.f32 %v3227, 1.442695
        %v3391 = vpow.pop %v3390
        %v3392 = vmul.f32 %v3228, 1.442695
        %v3393 = vpow.pop %v3392
        %v3394 = vmul.f32 %v3229, 1.442695
        %v3395 = vpow.pop %v3394
        %v3396 = vmul.f32 %v3230, 1.442695
        %v3397 = vpow.pop %v3396
        %v3398 = vmul.f32 %v3231, 1.442695
        %v3399 = vpow.pop %v3398
        %v3400 = vmul.f32 %v3232, 1.442695
        %v3401 = vpow.pop %v3400
        %v3402 = vmul.f32 %v3233, 1.442695
        %v3403 = vpow.pop %v3402
        %v3404 = vmul.f32 %v3234, 1.442695
        %v3405 = vpow.pop %v3404
        %v3406 = vmul.f32 %v3235, 1.442695
        %v3407 = vpow.pop %v3406
        %v3408 = vmul.f32 %v3236, 1.442695
        %v3409 = vpow.pop %v3408
        %v3410 = vmul.f32 %v3237, 1.442695
        %v3411 = vpow.pop %v3410
        %v3412 = vmul.f32 %v3238, 1.442695
        %v3413 = vpow.pop %v3412
        %v3414 = vmul.f32 %v3239, 1.442695
        %v3415 = vpow.pop %v3414
        %v3416 = vmul.f32 %v3240, 1.442695
        %v3417 = vpow.pop %v3416
        %v3418 = vmul.f32 %v3241, 1.442695
        %v3419 = vpow.pop %v3418
        %v3420 = vmul.f32 %v3242, 1.442695
        %v3421 = vpow.pop %v3420
        %v3422 = vmul.f32 %v3243, 1.442695
        %v3423 = vpow.pop %v3422
        %v3424 = vmul.f32 %v3244, 1.442695
        %v3425 = vpow.pop %v3424
        %v3426 = vmul.f32 %v3245, 1.442695
        %v3427 = vpow.pop %v3426
        %v3428 = vmul.f32 %v3246, 1.442695
        %v3429 = vpow.pop %v3428
        %v3430 = vmul.f32 %v3247, 1.442695
        %v3431 = vpow.pop %v3430
        %v3432 = vmul.f32 %v3248, 1.442695
        %v3433 = vpow.pop %v3432
        %v3434 = vmul.f32 %v3249, 1.442695
        %v3435 = vpow.pop %v3434
        %v3436 = vmul.f32 %v3250, 1.442695
        %v3437 = vpow.pop %v3436
        %v3438 = vmul.f32 %v3251, 1.442695
        %v3439 = vpow.pop %v3438
        %v3440 = vmul.f32 %v3252, 1.442695
        %v3441 = vpow.pop %v3440
        %v3442 = vmul.f32 %v3253, 1.442695
        %v3443 = vpow.pop %v3442
        %v3444 = vmul.f32 %v3254, 1.442695
        %v3445 = vpow.pop %v3444
        %v3446 = vmul.f32 %v3255, 1.442695
        %v3447 = vpow.pop %v3446
        %v3448 = vmul.f32 %v3256, 1.442695
        %v3449 = vpow.pop %v3448
        %v3450 = vmul.f32 %v3257, 1.442695
        %v3451 = vpow.pop %v3450
        %v3452 = vmul.f32 %v3258, 1.442695
        %v3453 = vpow.pop %v3452
        %v3454 = vmul.f32 %v3259, 1.442695
        %v3455 = vpow.pop %v3454
        %v3456 = vmul.f32 %v3260, 1.442695
        %v3457 = vpow.pop %v3456
        %v3458 = vmul.f32 %v3261, 1.442695
        %v3459 = vpow.pop %v3458
        %v3460 = vmul.f32 %v3262, 1.442695
        %v3461 = vpow.pop %v3460
        %v3462 = vmul.f32 %v3263, 1.442695
        %v3463 = vpow.pop %v3462
        %v3464 = vmul.f32 %v3264, 1.442695
        %v3465 = vpow.pop %v3464
        %v3466 = vmul.f32 %v3265, 1.442695
        %v3467 = vpow.pop %v3466
        %v3468 = vmul.f32 %v3266, 1.442695
        %v3469 = vpow.pop %v3468
        %v3470 = vmul.f32 %v3267, 1.442695
        %v3471 = vpow.pop %v3470
        %v3472 = vmul.f32 %v3268, 1.442695
        %v3473 = vpow.pop %v3472
        %v3474 = vmul.f32 %v3269, 1.442695
        %v3475 = vpow.pop %v3474
        %v3476 = vmul.f32 %v3270, 1.442695
        %v3477 = vpow.pop %v3476
        %v3478 = vmul.f32 %v3271, 1.442695
        %v3479 = vpow.pop %v3478
        %v3480 = vmul.f32 %v3272, 1.442695
        %v3481 = vpow.pop %v3480
        %v3482 = vmul.f32 %v3273, 1.442695
        %v3483 = vpow.pop %v3482
        %v3484 = vmul.f32 %v3274, 1.442695
        %v3485 = vpow.pop %v3484
        %v3486 = vmul.f32 %v3275, 1.442695
        %v3487 = vpow.pop %v3486
        %v3488 = vmul.f32 %v3276, 1.442695
        %v3489 = vpow.pop %v3488
        %v3490 = vmul.f32 %v3277, 1.442695
        %v3491 = vpow.pop %v3490
        %v3492 = vmul.f32 %v3278, 1.442695
        %v3493 = vpow.pop %v3492
        %v3494 = vmul.f32 %v3279, 1.442695
        %v3495 = vpow.pop %v3494
        %v3496 = vmul.f32 %v3280, 1.442695
        %v3497 = vpow.pop %v3496
        %v3498 = vmul.f32 %v3281, 1.442695
        %v3499 = vpow.pop %v3498
        %v3500 = vmul.f32 %v3282, 1.442695
        %v3501 = vpow.pop %v3500
        %v3502 = vmul.f32 %v3283, 1.442695
        %v3503 = vpow.pop %v3502
        %v3504 = vmul.f32 %v3284, 1.442695
        %v3505 = vpow.pop %v3504
        %v3506 = vmul.f32 %v3285, 1.442695
        %v3507 = vpow.pop %v3506
        %v3508 = vmul.f32 %v3286, 1.442695
        %v3509 = vpow.pop %v3508
        %v3510 = vmul.f32 %v3287, 1.442695
        %v3511 = vpow.pop %v3510
        %v3512 = vmul.f32 %v3288, 1.442695
        %v3513 = vpow.pop %v3512
        %v3514 = vmul.f32 %v3289, 1.442695
        %v3515 = vpow.pop %v3514
        %v3516 = vmul.f32 %v3290, 1.442695
        %v3517 = vpow.pop %v3516
        %v3518 = vmul.f32 %v3291, 1.442695
        %v3519 = vpow.pop %v3518
        %v3520 = vmul.f32 %v3292, 1.442695
        %v3521 = vpow.pop %v3520
        %v3522 = vmul.f32 %v3293, 1.442695
        %v3523 = vpow.pop %v3522
        %v3524 = vmul.f32 %v3294, 1.442695
        %v3525 = vpow.pop %v3524
        %v3526 = vmul.f32 %v3295, 1.442695
        %v3527 = vpow.pop %v3526
        %v3528 = vmul.f32 %v3296, 1.442695
        %v3529 = vpow.pop %v3528
        %v3530 = vmul.f32 %v3297, 1.442695
        %v3531 = vpow.pop %v3530
        %v3532 = vmul.f32 %v3298, 1.442695
        %v3533 = vpow.pop %v3532
        %v3534 = vmul.f32 %v3299, 1.442695
        %v3535 = vpow.pop %v3534
        %v3536 = vmul.f32 %v3300, 1.442695
        %v3537 = vpow.pop %v3536
        %v3538 = vmul.f32 %v3301, 1.442695
        %v3539 = vpow.pop %v3538
        %v3540 = vmul.f32 %v3302, 1.442695
        %v3541 = vpow.pop %v3540
        %v3542 = vmul.f32 %v3303, 1.442695
        %v3543 = vpow.pop %v3542
        %v3544 = vmul.f32 %v3304, 1.442695
        %v3545 = vpow.pop %v3544
        %v3546 = vmul.f32 %v3305, 1.442695
        %v3547 = vpow.pop %v3546
        %v3548 = vmul.f32 %v3306, 1.442695
        %v3549 = vpow.pop %v3548
        %v3550 = vmul.f32 %v3307, 1.442695
        %v3551 = vpow.pop %v3550
        %v3552 = vmul.f32 %v3308, 1.442695
        %v3553 = vpow.pop %v3552
        %v3554 = vmul.f32 %v3309, 1.442695
        %v3555 = vpow.pop %v3554
        %v3556 = vmul.f32 %v3310, 1.442695
        %v3557 = vpow.pop %v3556
        %v3558 = vmul.f32 %v3311, 1.442695
        %v3559 = vpow.pop %v3558
        %v3560 = vmul.f32 %v3312, 1.442695
        %v3561 = vpow.pop %v3560
        %v3562 = vmul.f32 %v3313, 1.442695
        %v3563 = vpow.pop %v3562
        %v3564 = vmul.f32 %v3314, 1.442695
        %v3565 = vpow.pop %v3564
        %v3566 = vmul.f32 %v3315, 1.442695
        %v3567 = vpow.pop %v3566
        %v3568 = vmul.f32 %v3316, 1.442695
        %v3569 = vpow.pop %v3568
        %v3570 = vmul.f32 %v3317, 1.442695
        %v3571 = vpow.pop %v3570
        %v3572 = vmul.f32 %v3318, 1.442695
        %v3573 = vpow.pop %v3572
        %v3574 = vmul.f32 %v3319, 1.442695
        %v3575 = vpow.pop %v3574
        %3704 = vset.pattern.permute.xlu0 0
        %3705 = vperm.xlu0 %3704, %v3321
        %v3706 = vpop.permute.xlu0 %3705
        %3707 = vset.pattern.permute.xlu0 0
        %3708 = vperm.xlu0 %3707, %v3323
        %v3709 = vpop.permute.xlu0 %3708
        %3710 = vset.pattern.permute.xlu0 0
        %3711 = vperm.xlu0 %3710, %v3325
        %v3712 = vpop.permute.xlu0 %3711
        %3713 = vset.pattern.permute.xlu0 0
        %3714 = vperm.xlu0 %3713, %v3327
        %v3715 = vpop.permute.xlu0 %3714
        %3716 = vset.pattern.permute.xlu0 0
        %3717 = vperm.xlu0 %3716, %v3329
        %v3718 = vpop.permute.xlu0 %3717
        %3719 = vset.pattern.permute.xlu0 0
        %3720 = vperm.xlu0 %3719, %v3331
        %v3721 = vpop.permute.xlu0 %3720
        %3722 = vset.pattern.permute.xlu0 0
        %3723 = vperm.xlu0 %3722, %v3333
        %v3724 = vpop.permute.xlu0 %3723
        %3725 = vset.pattern.permute.xlu0 0
        %3726 = vperm.xlu0 %3725, %v3335
        %v3727 = vpop.permute.xlu0 %3726
        %3728 = vset.pattern.permute.xlu0 0
        %3729 = vperm.xlu0 %3728, %v3337
        %v3730 = vpop.permute.xlu0 %3729
        %3731 = vset.pattern.permute.xlu0 0
        %3732 = vperm.xlu0 %3731, %v3339
        %v3733 = vpop.permute.xlu0 %3732
        %3734 = vset.pattern.permute.xlu0 0
        %3735 = vperm.xlu0 %3734, %v3341
        %v3736 = vpop.permute.xlu0 %3735
        %3737 = vset.pattern.permute.xlu0 0
        %3738 = vperm.xlu0 %3737, %v3343
        %v3739 = vpop.permute.xlu0 %3738
        %3740 = vset.pattern.permute.xlu0 0
        %3741 = vperm.xlu0 %3740, %v3345
        %v3742 = vpop.permute.xlu0 %3741
        %3743 = vset.pattern.permute.xlu0 0
        %3744 = vperm.xlu0 %3743, %v3347
        %v3745 = vpop.permute.xlu0 %3744
        %3746 = vset.pattern.permute.xlu0 0
        %3747 = vperm.xlu0 %3746, %v3349
        %v3748 = vpop.permute.xlu0 %3747
        %3749 = vset.pattern.permute.xlu0 0
        %3750 = vperm.xlu0 %3749, %v3351
        %v3751 = vpop.permute.xlu0 %3750
        %3752 = vset.pattern.permute.xlu0 0
        %3753 = vperm.xlu0 %3752, %v3353
        %v3754 = vpop.permute.xlu0 %3753
        %3755 = vset.pattern.permute.xlu0 0
        %3756 = vperm.xlu0 %3755, %v3355
        %v3757 = vpop.permute.xlu0 %3756
        %3758 = vset.pattern.permute.xlu0 0
        %3759 = vperm.xlu0 %3758, %v3357
        %v3760 = vpop.permute.xlu0 %3759
        %3761 = vset.pattern.permute.xlu0 0
        %3762 = vperm.xlu0 %3761, %v3359
        %v3763 = vpop.permute.xlu0 %3762
        %3764 = vset.pattern.permute.xlu0 0
        %3765 = vperm.xlu0 %3764, %v3361
        %v3766 = vpop.permute.xlu0 %3765
        %3767 = vset.pattern.permute.xlu0 0
        %3768 = vperm.xlu0 %3767, %v3363
        %v3769 = vpop.permute.xlu0 %3768
        %3770 = vset.pattern.permute.xlu0 0
        %3771 = vperm.xlu0 %3770, %v3365
        %v3772 = vpop.permute.xlu0 %3771
        %3773 = vset.pattern.permute.xlu0 0
        %3774 = vperm.xlu0 %3773, %v3367
        %v3775 = vpop.permute.xlu0 %3774
        %3776 = vset.pattern.permute.xlu0 0
        %3777 = vperm.xlu0 %3776, %v3369
        %v3778 = vpop.permute.xlu0 %3777
        %3779 = vset.pattern.permute.xlu0 0
        %3780 = vperm.xlu0 %3779, %v3371
        %v3781 = vpop.permute.xlu0 %3780
        %3782 = vset.pattern.permute.xlu0 0
        %3783 = vperm.xlu0 %3782, %v3373
        %v3784 = vpop.permute.xlu0 %3783
        %3785 = vset.pattern.permute.xlu0 0
        %3786 = vperm.xlu0 %3785, %v3375
        %v3787 = vpop.permute.xlu0 %3786
        %3788 = vset.pattern.permute.xlu0 0
        %3789 = vperm.xlu0 %3788, %v3377
        %v3790 = vpop.permute.xlu0 %3789
        %3791 = vset.pattern.permute.xlu0 0
        %3792 = vperm.xlu0 %3791, %v3379
        %v3793 = vpop.permute.xlu0 %3792
        %3794 = vset.pattern.permute.xlu0 0
        %3795 = vperm.xlu0 %3794, %v3381
        %v3796 = vpop.permute.xlu0 %3795
        %3797 = vset.pattern.permute.xlu0 0
        %3798 = vperm.xlu0 %3797, %v3383
        %v3799 = vpop.permute.xlu0 %3798
        %3800 = vset.pattern.permute.xlu0 0
        %3801 = vperm.xlu0 %3800, %v3385
        %v3802 = vpop.permute.xlu0 %3801
        %3803 = vset.pattern.permute.xlu0 0
        %3804 = vperm.xlu0 %3803, %v3387
        %v3805 = vpop.permute.xlu0 %3804
        %3806 = vset.pattern.permute.xlu0 0
        %3807 = vperm.xlu0 %3806, %v3389
        %v3808 = vpop.permute.xlu0 %3807
        %3809 = vset.pattern.permute.xlu0 0
        %3810 = vperm.xlu0 %3809, %v3391
        %v3811 = vpop.permute.xlu0 %3810
        %3812 = vset.pattern.permute.xlu0 0
        %3813 = vperm.xlu0 %3812, %v3393
        %v3814 = vpop.permute.xlu0 %3813
        %3815 = vset.pattern.permute.xlu0 0
        %3816 = vperm.xlu0 %3815, %v3395
        %v3817 = vpop.permute.xlu0 %3816
        %3818 = vset.pattern.permute.xlu0 0
        %3819 = vperm.xlu0 %3818, %v3397
        %v3820 = vpop.permute.xlu0 %3819
        %3821 = vset.pattern.permute.xlu0 0
        %3822 = vperm.xlu0 %3821, %v3399
        %v3823 = vpop.permute.xlu0 %3822
        %3824 = vset.pattern.permute.xlu0 0
        %3825 = vperm.xlu0 %3824, %v3401
        %v3826 = vpop.permute.xlu0 %3825
        %3827 = vset.pattern.permute.xlu0 0
        %3828 = vperm.xlu0 %3827, %v3403
        %v3829 = vpop.permute.xlu0 %3828
        %3830 = vset.pattern.permute.xlu0 0
        %3831 = vperm.xlu0 %3830, %v3405
        %v3832 = vpop.permute.xlu0 %3831
        %3833 = vset.pattern.permute.xlu0 0
        %3834 = vperm.xlu0 %3833, %v3407
        %v3835 = vpop.permute.xlu0 %3834
        %3836 = vset.pattern.permute.xlu0 0
        %3837 = vperm.xlu0 %3836, %v3409
        %v3838 = vpop.permute.xlu0 %3837
        %3839 = vset.pattern.permute.xlu0 0
        %3840 = vperm.xlu0 %3839, %v3411
        %v3841 = vpop.permute.xlu0 %3840
        %3842 = vset.pattern.permute.xlu0 0
        %3843 = vperm.xlu0 %3842, %v3413
        %v3844 = vpop.permute.xlu0 %3843
        %3845 = vset.pattern.permute.xlu0 0
        %3846 = vperm.xlu0 %3845, %v3415
        %v3847 = vpop.permute.xlu0 %3846
        %3848 = vset.pattern.permute.xlu0 0
        %3849 = vperm.xlu0 %3848, %v3417
        %v3850 = vpop.permute.xlu0 %3849
        %3851 = vset.pattern.permute.xlu0 0
        %3852 = vperm.xlu0 %3851, %v3419
        %v3853 = vpop.permute.xlu0 %3852
        %3854 = vset.pattern.permute.xlu0 0
        %3855 = vperm.xlu0 %3854, %v3421
        %v3856 = vpop.permute.xlu0 %3855
        %3857 = vset.pattern.permute.xlu0 0
        %3858 = vperm.xlu0 %3857, %v3423
        %v3859 = vpop.permute.xlu0 %3858
        %3860 = vset.pattern.permute.xlu0 0
        %3861 = vperm.xlu0 %3860, %v3425
        %v3862 = vpop.permute.xlu0 %3861
        %3863 = vset.pattern.permute.xlu0 0
        %3864 = vperm.xlu0 %3863, %v3427
        %v3865 = vpop.permute.xlu0 %3864
        %3866 = vset.pattern.permute.xlu0 0
        %3867 = vperm.xlu0 %3866, %v3429
        %v3868 = vpop.permute.xlu0 %3867
        %3869 = vset.pattern.permute.xlu0 0
        %3870 = vperm.xlu0 %3869, %v3431
        %v3871 = vpop.permute.xlu0 %3870
        %3872 = vset.pattern.permute.xlu0 0
        %3873 = vperm.xlu0 %3872, %v3433
        %v3874 = vpop.permute.xlu0 %3873
        %3875 = vset.pattern.permute.xlu0 0
        %3876 = vperm.xlu0 %3875, %v3435
        %v3877 = vpop.permute.xlu0 %3876
        %3878 = vset.pattern.permute.xlu0 0
        %3879 = vperm.xlu0 %3878, %v3437
        %v3880 = vpop.permute.xlu0 %3879
        %3881 = vset.pattern.permute.xlu0 0
        %3882 = vperm.xlu0 %3881, %v3439
        %v3883 = vpop.permute.xlu0 %3882
        %3884 = vset.pattern.permute.xlu0 0
        %3885 = vperm.xlu0 %3884, %v3441
        %v3886 = vpop.permute.xlu0 %3885
        %3887 = vset.pattern.permute.xlu0 0
        %3888 = vperm.xlu0 %3887, %v3443
        %v3889 = vpop.permute.xlu0 %3888
        %3890 = vset.pattern.permute.xlu0 0
        %3891 = vperm.xlu0 %3890, %v3445
        %v3892 = vpop.permute.xlu0 %3891
        %3893 = vset.pattern.permute.xlu0 0
        %3894 = vperm.xlu0 %3893, %v3447
        %v3895 = vpop.permute.xlu0 %3894
        %3896 = vset.pattern.permute.xlu0 0
        %3897 = vperm.xlu0 %3896, %v3449
        %v3898 = vpop.permute.xlu0 %3897
        %3899 = vset.pattern.permute.xlu0 0
        %3900 = vperm.xlu0 %3899, %v3451
        %v3901 = vpop.permute.xlu0 %3900
        %3902 = vset.pattern.permute.xlu0 0
        %3903 = vperm.xlu0 %3902, %v3453
        %v3904 = vpop.permute.xlu0 %3903
        %3905 = vset.pattern.permute.xlu0 0
        %3906 = vperm.xlu0 %3905, %v3455
        %v3907 = vpop.permute.xlu0 %3906
        %3908 = vset.pattern.permute.xlu0 0
        %3909 = vperm.xlu0 %3908, %v3457
        %v3910 = vpop.permute.xlu0 %3909
        %3911 = vset.pattern.permute.xlu0 0
        %3912 = vperm.xlu0 %3911, %v3459
        %v3913 = vpop.permute.xlu0 %3912
        %3914 = vset.pattern.permute.xlu0 0
        %3915 = vperm.xlu0 %3914, %v3461
        %v3916 = vpop.permute.xlu0 %3915
        %3917 = vset.pattern.permute.xlu0 0
        %3918 = vperm.xlu0 %3917, %v3463
        %v3919 = vpop.permute.xlu0 %3918
        %3920 = vset.pattern.permute.xlu0 0
        %3921 = vperm.xlu0 %3920, %v3465
        %v3922 = vpop.permute.xlu0 %3921
        %3923 = vset.pattern.permute.xlu0 0
        %3924 = vperm.xlu0 %3923, %v3467
        %v3925 = vpop.permute.xlu0 %3924
        %3926 = vset.pattern.permute.xlu0 0
        %3927 = vperm.xlu0 %3926, %v3469
        %v3928 = vpop.permute.xlu0 %3927
        %3929 = vset.pattern.permute.xlu0 0
        %3930 = vperm.xlu0 %3929, %v3471
        %v3931 = vpop.permute.xlu0 %3930
        %3932 = vset.pattern.permute.xlu0 0
        %3933 = vperm.xlu0 %3932, %v3473
        %v3934 = vpop.permute.xlu0 %3933
        %3935 = vset.pattern.permute.xlu0 0
        %3936 = vperm.xlu0 %3935, %v3475
        %v3937 = vpop.permute.xlu0 %3936
        %3938 = vset.pattern.permute.xlu0 0
        %3939 = vperm.xlu0 %3938, %v3477
        %v3940 = vpop.permute.xlu0 %3939
        %3941 = vset.pattern.permute.xlu0 0
        %3942 = vperm.xlu0 %3941, %v3479
        %v3943 = vpop.permute.xlu0 %3942
        %3944 = vset.pattern.permute.xlu0 0
        %3945 = vperm.xlu0 %3944, %v3481
        %v3946 = vpop.permute.xlu0 %3945
        %3947 = vset.pattern.permute.xlu0 0
        %3948 = vperm.xlu0 %3947, %v3483
        %v3949 = vpop.permute.xlu0 %3948
        %3950 = vset.pattern.permute.xlu0 0
        %3951 = vperm.xlu0 %3950, %v3485
        %v3952 = vpop.permute.xlu0 %3951
        %3953 = vset.pattern.permute.xlu0 0
        %3954 = vperm.xlu0 %3953, %v3487
        %v3955 = vpop.permute.xlu0 %3954
        %3956 = vset.pattern.permute.xlu0 0
        %3957 = vperm.xlu0 %3956, %v3489
        %v3958 = vpop.permute.xlu0 %3957
        %3959 = vset.pattern.permute.xlu0 0
        %3960 = vperm.xlu0 %3959, %v3491
        %v3961 = vpop.permute.xlu0 %3960
        %3962 = vset.pattern.permute.xlu0 0
        %3963 = vperm.xlu0 %3962, %v3493
        %v3964 = vpop.permute.xlu0 %3963
        %3965 = vset.pattern.permute.xlu0 0
        %3966 = vperm.xlu0 %3965, %v3495
        %v3967 = vpop.permute.xlu0 %3966
        %3968 = vset.pattern.permute.xlu0 0
        %3969 = vperm.xlu0 %3968, %v3497
        %v3970 = vpop.permute.xlu0 %3969
        %3971 = vset.pattern.permute.xlu0 0
        %3972 = vperm.xlu0 %3971, %v3499
        %v3973 = vpop.permute.xlu0 %3972
        %3974 = vset.pattern.permute.xlu0 0
        %3975 = vperm.xlu0 %3974, %v3501
        %v3976 = vpop.permute.xlu0 %3975
        %3977 = vset.pattern.permute.xlu0 0
        %3978 = vperm.xlu0 %3977, %v3503
        %v3979 = vpop.permute.xlu0 %3978
        %3980 = vset.pattern.permute.xlu0 0
        %3981 = vperm.xlu0 %3980, %v3505
        %v3982 = vpop.permute.xlu0 %3981
        %3983 = vset.pattern.permute.xlu0 0
        %3984 = vperm.xlu0 %3983, %v3507
        %v3985 = vpop.permute.xlu0 %3984
        %3986 = vset.pattern.permute.xlu0 0
        %3987 = vperm.xlu0 %3986, %v3509
        %v3988 = vpop.permute.xlu0 %3987
        %3989 = vset.pattern.permute.xlu0 0
        %3990 = vperm.xlu0 %3989, %v3511
        %v3991 = vpop.permute.xlu0 %3990
        %3992 = vset.pattern.permute.xlu0 0
        %3993 = vperm.xlu0 %3992, %v3513
        %v3994 = vpop.permute.xlu0 %3993
        %3995 = vset.pattern.permute.xlu0 0
        %3996 = vperm.xlu0 %3995, %v3515
        %v3997 = vpop.permute.xlu0 %3996
        %3998 = vset.pattern.permute.xlu0 0
        %3999 = vperm.xlu0 %3998, %v3517
        %v4000 = vpop.permute.xlu0 %3999
        %4001 = vset.pattern.permute.xlu0 0
        %4002 = vperm.xlu0 %4001, %v3519
        %v4003 = vpop.permute.xlu0 %4002
        %4004 = vset.pattern.permute.xlu0 0
        %4005 = vperm.xlu0 %4004, %v3521
        %v4006 = vpop.permute.xlu0 %4005
        %4007 = vset.pattern.permute.xlu0 0
        %4008 = vperm.xlu0 %4007, %v3523
        %v4009 = vpop.permute.xlu0 %4008
        %4010 = vset.pattern.permute.xlu0 0
        %4011 = vperm.xlu0 %4010, %v3525
        %v4012 = vpop.permute.xlu0 %4011
        %4013 = vset.pattern.permute.xlu0 0
        %4014 = vperm.xlu0 %4013, %v3527
        %v4015 = vpop.permute.xlu0 %4014
        %4016 = vset.pattern.permute.xlu0 0
        %4017 = vperm.xlu0 %4016, %v3529
        %v4018 = vpop.permute.xlu0 %4017
        %4019 = vset.pattern.permute.xlu0 0
        %4020 = vperm.xlu0 %4019, %v3531
        %v4021 = vpop.permute.xlu0 %4020
        %4022 = vset.pattern.permute.xlu0 0
        %4023 = vperm.xlu0 %4022, %v3533
        %v4024 = vpop.permute.xlu0 %4023
        %4025 = vset.pattern.permute.xlu0 0
        %4026 = vperm.xlu0 %4025, %v3535
        %v4027 = vpop.permute.xlu0 %4026
        %4028 = vset.pattern.permute.xlu0 0
        %4029 = vperm.xlu0 %4028, %v3537
        %v4030 = vpop.permute.xlu0 %4029
        %4031 = vset.pattern.permute.xlu0 0
        %4032 = vperm.xlu0 %4031, %v3539
        %v4033 = vpop.permute.xlu0 %4032
        %4034 = vset.pattern.permute.xlu0 0
        %4035 = vperm.xlu0 %4034, %v3541
        %v4036 = vpop.permute.xlu0 %4035
        %4037 = vset.pattern.permute.xlu0 0
        %4038 = vperm.xlu0 %4037, %v3543
        %v4039 = vpop.permute.xlu0 %4038
        %4040 = vset.pattern.permute.xlu0 0
        %4041 = vperm.xlu0 %4040, %v3545
        %v4042 = vpop.permute.xlu0 %4041
        %4043 = vset.pattern.permute.xlu0 0
        %4044 = vperm.xlu0 %4043, %v3547
        %v4045 = vpop.permute.xlu0 %4044
        %4046 = vset.pattern.permute.xlu0 0
        %4047 = vperm.xlu0 %4046, %v3549
        %v4048 = vpop.permute.xlu0 %4047
        %4049 = vset.pattern.permute.xlu0 0
        %4050 = vperm.xlu0 %4049, %v3551
        %v4051 = vpop.permute.xlu0 %4050
        %4052 = vset.pattern.permute.xlu0 0
        %4053 = vperm.xlu0 %4052, %v3553
        %v4054 = vpop.permute.xlu0 %4053
        %4055 = vset.pattern.permute.xlu0 0
        %4056 = vperm.xlu0 %4055, %v3555
        %v4057 = vpop.permute.xlu0 %4056
        %4058 = vset.pattern.permute.xlu0 0
        %4059 = vperm.xlu0 %4058, %v3557
        %v4060 = vpop.permute.xlu0 %4059
        %4061 = vset.pattern.permute.xlu0 0
        %4062 = vperm.xlu0 %4061, %v3559
        %v4063 = vpop.permute.xlu0 %4062
        %4064 = vset.pattern.permute.xlu0 0
        %4065 = vperm.xlu0 %4064, %v3561
        %v4066 = vpop.permute.xlu0 %4065
        %4067 = vset.pattern.permute.xlu0 0
        %4068 = vperm.xlu0 %4067, %v3563
        %v4069 = vpop.permute.xlu0 %4068
        %4070 = vset.pattern.permute.xlu0 0
        %4071 = vperm.xlu0 %4070, %v3565
        %v4072 = vpop.permute.xlu0 %4071
        %4073 = vset.pattern.permute.xlu0 0
        %4074 = vperm.xlu0 %4073, %v3567
        %v4075 = vpop.permute.xlu0 %4074
        %4076 = vset.pattern.permute.xlu0 0
        %4077 = vperm.xlu0 %4076, %v3569
        %v4078 = vpop.permute.xlu0 %4077
        %4079 = vset.pattern.permute.xlu0 0
        %4080 = vperm.xlu0 %4079, %v3571
        %v4081 = vpop.permute.xlu0 %4080
        %4082 = vset.pattern.permute.xlu0 0
        %4083 = vperm.xlu0 %4082, %v3573
        %v4084 = vpop.permute.xlu0 %4083
        %4085 = vset.pattern.permute.xlu0 0
        %4086 = vperm.xlu0 %4085, %v3575
        %v4087 = vpop.permute.xlu0 %4086
        %v4088 = vlaneseq
        %v4089 = vshrl.u32 %v4088, 7
        %v4090 = vsub.s32 %v2471, %v4089
        %v4091 = vrot.slane %v3706, %v4090
        %v4092 = vlaneseq
        %v4093 = vshrl.u32 %v4092, 7
        %v4094 = vsub.s32 %v2476, %v4093
        %v4095 = vrot.slane %v3709, %v4094
        %v4096 = vsel %vm2481, %v4095, %v4091
        %v4097 = vlaneseq
        %v4098 = vshrl.u32 %v4097, 7
        %v4099 = vsub.s32 %v2483, %v4098
        %v4100 = vrot.slane %v3712, %v4099
        %v4101 = vsel %vm2488, %v4100, %v4096
        %v4102 = vlaneseq
        %v4103 = vshrl.u32 %v4102, 7
        %v4104 = vsub.s32 %v2490, %v4103
        %v4105 = vrot.slane %v3715, %v4104
        %v4106 = vsel %vm2495, %v4105, %v4101
        %v4107 = vlaneseq
        %v4108 = vshrl.u32 %v4107, 7
        %v4109 = vsub.s32 %v2497, %v4108
        %v4110 = vrot.slane %v3718, %v4109
        %v4111 = vsel %vm2502, %v4110, %v4106
        %v4112 = vlaneseq
        %v4113 = vshrl.u32 %v4112, 7
        %v4114 = vsub.s32 %v2504, %v4113
        %v4115 = vrot.slane %v3721, %v4114
        %v4116 = vsel %vm2509, %v4115, %v4111
        %v4117 = vlaneseq
        %v4118 = vshrl.u32 %v4117, 7
        %v4119 = vsub.s32 %v2511, %v4118
        %v4120 = vrot.slane %v3724, %v4119
        %v4121 = vsel %vm2516, %v4120, %v4116
        %v4122 = vlaneseq
        %v4123 = vshrl.u32 %v4122, 7
        %v4124 = vsub.s32 %v2518, %v4123
        %v4125 = vrot.slane %v3727, %v4124
        %v4126 = vsel %vm2523, %v4125, %v4121
        %v4127 = vlaneseq
        %v4128 = vshrl.u32 %v4127, 7
        %v4129 = vsub.s32 %v2525, %v4128
        %v4130 = vrot.slane %v3730, %v4129
        %v4131 = vsel %vm2530, %v4130, %v4126
        %v4132 = vlaneseq
        %v4133 = vshrl.u32 %v4132, 7
        %v4134 = vsub.s32 %v2532, %v4133
        %v4135 = vrot.slane %v3733, %v4134
        %v4136 = vsel %vm2537, %v4135, %v4131
        %v4137 = vlaneseq
        %v4138 = vshrl.u32 %v4137, 7
        %v4139 = vsub.s32 %v2539, %v4138
        %v4140 = vrot.slane %v3736, %v4139
        %v4141 = vsel %vm2544, %v4140, %v4136
        %v4142 = vlaneseq
        %v4143 = vshrl.u32 %v4142, 7
        %v4144 = vsub.s32 %v2546, %v4143
        %v4145 = vrot.slane %v3739, %v4144
        %v4146 = vsel %vm2551, %v4145, %v4141
        %v4147 = vlaneseq
        %v4148 = vshrl.u32 %v4147, 7
        %v4149 = vsub.s32 %v2553, %v4148
        %v4150 = vrot.slane %v3742, %v4149
        %v4151 = vsel %vm2558, %v4150, %v4146
        %v4152 = vlaneseq
        %v4153 = vshrl.u32 %v4152, 7
        %v4154 = vsub.s32 %v2560, %v4153
        %v4155 = vrot.slane %v3745, %v4154
        %v4156 = vsel %vm2565, %v4155, %v4151
        %v4157 = vlaneseq
        %v4158 = vshrl.u32 %v4157, 7
        %v4159 = vsub.s32 %v2567, %v4158
        %v4160 = vrot.slane %v3748, %v4159
        %v4161 = vsel %vm2572, %v4160, %v4156
        %v4162 = vlaneseq
        %v4163 = vshrl.u32 %v4162, 7
        %v4164 = vsub.s32 %v2574, %v4163
        %v4165 = vrot.slane %v3751, %v4164
        %v4166 = vsel %vm2579, %v4165, %v4161
        %v4167 = vlaneseq
        %v4168 = vshrl.u32 %v4167, 7
        %v4169 = vsub.s32 %v2471, %v4168
        %v4170 = vrot.slane %v3754, %v4169
        %v4171 = vlaneseq
        %v4172 = vshrl.u32 %v4171, 7
        %v4173 = vsub.s32 %v2476, %v4172
        %v4174 = vrot.slane %v3757, %v4173
        %v4175 = vsel %vm2481, %v4174, %v4170
        %v4176 = vlaneseq
        %v4177 = vshrl.u32 %v4176, 7
        %v4178 = vsub.s32 %v2483, %v4177
        %v4179 = vrot.slane %v3760, %v4178
        %v4180 = vsel %vm2488, %v4179, %v4175
        %v4181 = vlaneseq
        %v4182 = vshrl.u32 %v4181, 7
        %v4183 = vsub.s32 %v2490, %v4182
        %v4184 = vrot.slane %v3763, %v4183
        %v4185 = vsel %vm2495, %v4184, %v4180
        %v4186 = vlaneseq
        %v4187 = vshrl.u32 %v4186, 7
        %v4188 = vsub.s32 %v2497, %v4187
        %v4189 = vrot.slane %v3766, %v4188
        %v4190 = vsel %vm2502, %v4189, %v4185
        %v4191 = vlaneseq
        %v4192 = vshrl.u32 %v4191, 7
        %v4193 = vsub.s32 %v2504, %v4192
        %v4194 = vrot.slane %v3769, %v4193
        %v4195 = vsel %vm2509, %v4194, %v4190
        %v4196 = vlaneseq
        %v4197 = vshrl.u32 %v4196, 7
        %v4198 = vsub.s32 %v2511, %v4197
        %v4199 = vrot.slane %v3772, %v4198
        %v4200 = vsel %vm2516, %v4199, %v4195
        %v4201 = vlaneseq
        %v4202 = vshrl.u32 %v4201, 7
        %v4203 = vsub.s32 %v2518, %v4202
        %v4204 = vrot.slane %v3775, %v4203
        %v4205 = vsel %vm2523, %v4204, %v4200
        %v4206 = vlaneseq
        %v4207 = vshrl.u32 %v4206, 7
        %v4208 = vsub.s32 %v2525, %v4207
        %v4209 = vrot.slane %v3778, %v4208
        %v4210 = vsel %vm2530, %v4209, %v4205
        %v4211 = vlaneseq
        %v4212 = vshrl.u32 %v4211, 7
        %v4213 = vsub.s32 %v2532, %v4212
        %v4214 = vrot.slane %v3781, %v4213
        %v4215 = vsel %vm2537, %v4214, %v4210
        %v4216 = vlaneseq
        %v4217 = vshrl.u32 %v4216, 7
        %v4218 = vsub.s32 %v2539, %v4217
        %v4219 = vrot.slane %v3784, %v4218
        %v4220 = vsel %vm2544, %v4219, %v4215
        %v4221 = vlaneseq
        %v4222 = vshrl.u32 %v4221, 7
        %v4223 = vsub.s32 %v2546, %v4222
        %v4224 = vrot.slane %v3787, %v4223
        %v4225 = vsel %vm2551, %v4224, %v4220
        %v4226 = vlaneseq
        %v4227 = vshrl.u32 %v4226, 7
        %v4228 = vsub.s32 %v2553, %v4227
        %v4229 = vrot.slane %v3790, %v4228
        %v4230 = vsel %vm2558, %v4229, %v4225
        %v4231 = vlaneseq
        %v4232 = vshrl.u32 %v4231, 7
        %v4233 = vsub.s32 %v2560, %v4232
        %v4234 = vrot.slane %v3793, %v4233
        %v4235 = vsel %vm2565, %v4234, %v4230
        %v4236 = vlaneseq
        %v4237 = vshrl.u32 %v4236, 7
        %v4238 = vsub.s32 %v2567, %v4237
        %v4239 = vrot.slane %v3796, %v4238
        %v4240 = vsel %vm2572, %v4239, %v4235
        %v4241 = vlaneseq
        %v4242 = vshrl.u32 %v4241, 7
        %v4243 = vsub.s32 %v2574, %v4242
        %v4244 = vrot.slane %v3799, %v4243
        %v4245 = vsel %vm2579, %v4244, %v4240
        %v4246 = vlaneseq
        %v4247 = vshrl.u32 %v4246, 7
        %v4248 = vsub.s32 %v2471, %v4247
        %v4249 = vrot.slane %v3802, %v4248
        %v4250 = vlaneseq
        %v4251 = vshrl.u32 %v4250, 7
        %v4252 = vsub.s32 %v2476, %v4251
        %v4253 = vrot.slane %v3805, %v4252
        %v4254 = vsel %vm2481, %v4253, %v4249
        %v4255 = vlaneseq
        %v4256 = vshrl.u32 %v4255, 7
        %v4257 = vsub.s32 %v2483, %v4256
        %v4258 = vrot.slane %v3808, %v4257
        %v4259 = vsel %vm2488, %v4258, %v4254
        %v4260 = vlaneseq
        %v4261 = vshrl.u32 %v4260, 7
        %v4262 = vsub.s32 %v2490, %v4261
        %v4263 = vrot.slane %v3811, %v4262
        %v4264 = vsel %vm2495, %v4263, %v4259
        %v4265 = vlaneseq
        %v4266 = vshrl.u32 %v4265, 7
        %v4267 = vsub.s32 %v2497, %v4266
        %v4268 = vrot.slane %v3814, %v4267
        %v4269 = vsel %vm2502, %v4268, %v4264
        %v4270 = vlaneseq
        %v4271 = vshrl.u32 %v4270, 7
        %v4272 = vsub.s32 %v2504, %v4271
        %v4273 = vrot.slane %v3817, %v4272
        %v4274 = vsel %vm2509, %v4273, %v4269
        %v4275 = vlaneseq
        %v4276 = vshrl.u32 %v4275, 7
        %v4277 = vsub.s32 %v2511, %v4276
        %v4278 = vrot.slane %v3820, %v4277
        %v4279 = vsel %vm2516, %v4278, %v4274
        %v4280 = vlaneseq
        %v4281 = vshrl.u32 %v4280, 7
        %v4282 = vsub.s32 %v2518, %v4281
        %v4283 = vrot.slane %v3823, %v4282
        %v4284 = vsel %vm2523, %v4283, %v4279
        %v4285 = vlaneseq
        %v4286 = vshrl.u32 %v4285, 7
        %v4287 = vsub.s32 %v2525, %v4286
        %v4288 = vrot.slane %v3826, %v4287
        %v4289 = vsel %vm2530, %v4288, %v4284
        %v4290 = vlaneseq
        %v4291 = vshrl.u32 %v4290, 7
        %v4292 = vsub.s32 %v2532, %v4291
        %v4293 = vrot.slane %v3829, %v4292
        %v4294 = vsel %vm2537, %v4293, %v4289
        %v4295 = vlaneseq
        %v4296 = vshrl.u32 %v4295, 7
        %v4297 = vsub.s32 %v2539, %v4296
        %v4298 = vrot.slane %v3832, %v4297
        %v4299 = vsel %vm2544, %v4298, %v4294
        %v4300 = vlaneseq
        %v4301 = vshrl.u32 %v4300, 7
        %v4302 = vsub.s32 %v2546, %v4301
        %v4303 = vrot.slane %v3835, %v4302
        %v4304 = vsel %vm2551, %v4303, %v4299
        %v4305 = vlaneseq
        %v4306 = vshrl.u32 %v4305, 7
        %v4307 = vsub.s32 %v2553, %v4306
        %v4308 = vrot.slane %v3838, %v4307
        %v4309 = vsel %vm2558, %v4308, %v4304
        %v4310 = vlaneseq
        %v4311 = vshrl.u32 %v4310, 7
        %v4312 = vsub.s32 %v2560, %v4311
        %v4313 = vrot.slane %v3841, %v4312
        %v4314 = vsel %vm2565, %v4313, %v4309
        %v4315 = vlaneseq
        %v4316 = vshrl.u32 %v4315, 7
        %v4317 = vsub.s32 %v2567, %v4316
        %v4318 = vrot.slane %v3844, %v4317
        %v4319 = vsel %vm2572, %v4318, %v4314
        %v4320 = vlaneseq
        %v4321 = vshrl.u32 %v4320, 7
        %v4322 = vsub.s32 %v2574, %v4321
        %v4323 = vrot.slane %v3847, %v4322
        %v4324 = vsel %vm2579, %v4323, %v4319
        %v4325 = vlaneseq
        %v4326 = vshrl.u32 %v4325, 7
        %v4327 = vsub.s32 %v2471, %v4326
        %v4328 = vrot.slane %v3850, %v4327
        %v4329 = vlaneseq
        %v4330 = vshrl.u32 %v4329, 7
        %v4331 = vsub.s32 %v2476, %v4330
        %v4332 = vrot.slane %v3853, %v4331
        %v4333 = vsel %vm2481, %v4332, %v4328
        %v4334 = vlaneseq
        %v4335 = vshrl.u32 %v4334, 7
        %v4336 = vsub.s32 %v2483, %v4335
        %v4337 = vrot.slane %v3856, %v4336
        %v4338 = vsel %vm2488, %v4337, %v4333
        %v4339 = vlaneseq
        %v4340 = vshrl.u32 %v4339, 7
        %v4341 = vsub.s32 %v2490, %v4340
        %v4342 = vrot.slane %v3859, %v4341
        %v4343 = vsel %vm2495, %v4342, %v4338
        %v4344 = vlaneseq
        %v4345 = vshrl.u32 %v4344, 7
        %v4346 = vsub.s32 %v2497, %v4345
        %v4347 = vrot.slane %v3862, %v4346
        %v4348 = vsel %vm2502, %v4347, %v4343
        %v4349 = vlaneseq
        %v4350 = vshrl.u32 %v4349, 7
        %v4351 = vsub.s32 %v2504, %v4350
        %v4352 = vrot.slane %v3865, %v4351
        %v4353 = vsel %vm2509, %v4352, %v4348
        %v4354 = vlaneseq
        %v4355 = vshrl.u32 %v4354, 7
        %v4356 = vsub.s32 %v2511, %v4355
        %v4357 = vrot.slane %v3868, %v4356
        %v4358 = vsel %vm2516, %v4357, %v4353
        %v4359 = vlaneseq
        %v4360 = vshrl.u32 %v4359, 7
        %v4361 = vsub.s32 %v2518, %v4360
        %v4362 = vrot.slane %v3871, %v4361
        %v4363 = vsel %vm2523, %v4362, %v4358
        %v4364 = vlaneseq
        %v4365 = vshrl.u32 %v4364, 7
        %v4366 = vsub.s32 %v2525, %v4365
        %v4367 = vrot.slane %v3874, %v4366
        %v4368 = vsel %vm2530, %v4367, %v4363
        %v4369 = vlaneseq
        %v4370 = vshrl.u32 %v4369, 7
        %v4371 = vsub.s32 %v2532, %v4370
        %v4372 = vrot.slane %v3877, %v4371
        %v4373 = vsel %vm2537, %v4372, %v4368
        %v4374 = vlaneseq
        %v4375 = vshrl.u32 %v4374, 7
        %v4376 = vsub.s32 %v2539, %v4375
        %v4377 = vrot.slane %v3880, %v4376
        %v4378 = vsel %vm2544, %v4377, %v4373
        %v4379 = vlaneseq
        %v4380 = vshrl.u32 %v4379, 7
        %v4381 = vsub.s32 %v2546, %v4380
        %v4382 = vrot.slane %v3883, %v4381
        %v4383 = vsel %vm2551, %v4382, %v4378
        %v4384 = vlaneseq
        %v4385 = vshrl.u32 %v4384, 7
        %v4386 = vsub.s32 %v2553, %v4385
        %v4387 = vrot.slane %v3886, %v4386
        %v4388 = vsel %vm2558, %v4387, %v4383
        %v4389 = vlaneseq
        %v4390 = vshrl.u32 %v4389, 7
        %v4391 = vsub.s32 %v2560, %v4390
        %v4392 = vrot.slane %v3889, %v4391
        %v4393 = vsel %vm2565, %v4392, %v4388
        %v4394 = vlaneseq
        %v4395 = vshrl.u32 %v4394, 7
        %v4396 = vsub.s32 %v2567, %v4395
        %v4397 = vrot.slane %v3892, %v4396
        %v4398 = vsel %vm2572, %v4397, %v4393
        %v4399 = vlaneseq
        %v4400 = vshrl.u32 %v4399, 7
        %v4401 = vsub.s32 %v2574, %v4400
        %v4402 = vrot.slane %v3895, %v4401
        %v4403 = vsel %vm2579, %v4402, %v4398
        %v4404 = vlaneseq
        %v4405 = vshrl.u32 %v4404, 7
        %v4406 = vsub.s32 %v2471, %v4405
        %v4407 = vrot.slane %v3898, %v4406
        %v4408 = vlaneseq
        %v4409 = vshrl.u32 %v4408, 7
        %v4410 = vsub.s32 %v2476, %v4409
        %v4411 = vrot.slane %v3901, %v4410
        %v4412 = vsel %vm2481, %v4411, %v4407
        %v4413 = vlaneseq
        %v4414 = vshrl.u32 %v4413, 7
        %v4415 = vsub.s32 %v2483, %v4414
        %v4416 = vrot.slane %v3904, %v4415
        %v4417 = vsel %vm2488, %v4416, %v4412
        %v4418 = vlaneseq
        %v4419 = vshrl.u32 %v4418, 7
        %v4420 = vsub.s32 %v2490, %v4419
        %v4421 = vrot.slane %v3907, %v4420
        %v4422 = vsel %vm2495, %v4421, %v4417
        %v4423 = vlaneseq
        %v4424 = vshrl.u32 %v4423, 7
        %v4425 = vsub.s32 %v2497, %v4424
        %v4426 = vrot.slane %v3910, %v4425
        %v4427 = vsel %vm2502, %v4426, %v4422
        %v4428 = vlaneseq
        %v4429 = vshrl.u32 %v4428, 7
        %v4430 = vsub.s32 %v2504, %v4429
        %v4431 = vrot.slane %v3913, %v4430
        %v4432 = vsel %vm2509, %v4431, %v4427
        %v4433 = vlaneseq
        %v4434 = vshrl.u32 %v4433, 7
        %v4435 = vsub.s32 %v2511, %v4434
        %v4436 = vrot.slane %v3916, %v4435
        %v4437 = vsel %vm2516, %v4436, %v4432
        %v4438 = vlaneseq
        %v4439 = vshrl.u32 %v4438, 7
        %v4440 = vsub.s32 %v2518, %v4439
        %v4441 = vrot.slane %v3919, %v4440
        %v4442 = vsel %vm2523, %v4441, %v4437
        %v4443 = vlaneseq
        %v4444 = vshrl.u32 %v4443, 7
        %v4445 = vsub.s32 %v2525, %v4444
        %v4446 = vrot.slane %v3922, %v4445
        %v4447 = vsel %vm2530, %v4446, %v4442
        %v4448 = vlaneseq
        %v4449 = vshrl.u32 %v4448, 7
        %v4450 = vsub.s32 %v2532, %v4449
        %v4451 = vrot.slane %v3925, %v4450
        %v4452 = vsel %vm2537, %v4451, %v4447
        %v4453 = vlaneseq
        %v4454 = vshrl.u32 %v4453, 7
        %v4455 = vsub.s32 %v2539, %v4454
        %v4456 = vrot.slane %v3928, %v4455
        %v4457 = vsel %vm2544, %v4456, %v4452
        %v4458 = vlaneseq
        %v4459 = vshrl.u32 %v4458, 7
        %v4460 = vsub.s32 %v2546, %v4459
        %v4461 = vrot.slane %v3931, %v4460
        %v4462 = vsel %vm2551, %v4461, %v4457
        %v4463 = vlaneseq
        %v4464 = vshrl.u32 %v4463, 7
        %v4465 = vsub.s32 %v2553, %v4464
        %v4466 = vrot.slane %v3934, %v4465
        %v4467 = vsel %vm2558, %v4466, %v4462
        %v4468 = vlaneseq
        %v4469 = vshrl.u32 %v4468, 7
        %v4470 = vsub.s32 %v2560, %v4469
        %v4471 = vrot.slane %v3937, %v4470
        %v4472 = vsel %vm2565, %v4471, %v4467
        %v4473 = vlaneseq
        %v4474 = vshrl.u32 %v4473, 7
        %v4475 = vsub.s32 %v2567, %v4474
        %v4476 = vrot.slane %v3940, %v4475
        %v4477 = vsel %vm2572, %v4476, %v4472
        %v4478 = vlaneseq
        %v4479 = vshrl.u32 %v4478, 7
        %v4480 = vsub.s32 %v2574, %v4479
        %v4481 = vrot.slane %v3943, %v4480
        %v4482 = vsel %vm2579, %v4481, %v4477
        %v4483 = vlaneseq
        %v4484 = vshrl.u32 %v4483, 7
        %v4485 = vsub.s32 %v2471, %v4484
        %v4486 = vrot.slane %v3946, %v4485
        %v4487 = vlaneseq
        %v4488 = vshrl.u32 %v4487, 7
        %v4489 = vsub.s32 %v2476, %v4488
        %v4490 = vrot.slane %v3949, %v4489
        %v4491 = vsel %vm2481, %v4490, %v4486
        %v4492 = vlaneseq
        %v4493 = vshrl.u32 %v4492, 7
        %v4494 = vsub.s32 %v2483, %v4493
        %v4495 = vrot.slane %v3952, %v4494
        %v4496 = vsel %vm2488, %v4495, %v4491
        %v4497 = vlaneseq
        %v4498 = vshrl.u32 %v4497, 7
        %v4499 = vsub.s32 %v2490, %v4498
        %v4500 = vrot.slane %v3955, %v4499
        %v4501 = vsel %vm2495, %v4500, %v4496
        %v4502 = vlaneseq
        %v4503 = vshrl.u32 %v4502, 7
        %v4504 = vsub.s32 %v2497, %v4503
        %v4505 = vrot.slane %v3958, %v4504
        %v4506 = vsel %vm2502, %v4505, %v4501
        %v4507 = vlaneseq
        %v4508 = vshrl.u32 %v4507, 7
        %v4509 = vsub.s32 %v2504, %v4508
        %v4510 = vrot.slane %v3961, %v4509
        %v4511 = vsel %vm2509, %v4510, %v4506
        %v4512 = vlaneseq
        %v4513 = vshrl.u32 %v4512, 7
        %v4514 = vsub.s32 %v2511, %v4513
        %v4515 = vrot.slane %v3964, %v4514
        %v4516 = vsel %vm2516, %v4515, %v4511
        %v4517 = vlaneseq
        %v4518 = vshrl.u32 %v4517, 7
        %v4519 = vsub.s32 %v2518, %v4518
        %v4520 = vrot.slane %v3967, %v4519
        %v4521 = vsel %vm2523, %v4520, %v4516
        %v4522 = vlaneseq
        %v4523 = vshrl.u32 %v4522, 7
        %v4524 = vsub.s32 %v2525, %v4523
        %v4525 = vrot.slane %v3970, %v4524
        %v4526 = vsel %vm2530, %v4525, %v4521
        %v4527 = vlaneseq
        %v4528 = vshrl.u32 %v4527, 7
        %v4529 = vsub.s32 %v2532, %v4528
        %v4530 = vrot.slane %v3973, %v4529
        %v4531 = vsel %vm2537, %v4530, %v4526
        %v4532 = vlaneseq
        %v4533 = vshrl.u32 %v4532, 7
        %v4534 = vsub.s32 %v2539, %v4533
        %v4535 = vrot.slane %v3976, %v4534
        %v4536 = vsel %vm2544, %v4535, %v4531
        %v4537 = vlaneseq
        %v4538 = vshrl.u32 %v4537, 7
        %v4539 = vsub.s32 %v2546, %v4538
        %v4540 = vrot.slane %v3979, %v4539
        %v4541 = vsel %vm2551, %v4540, %v4536
        %v4542 = vlaneseq
        %v4543 = vshrl.u32 %v4542, 7
        %v4544 = vsub.s32 %v2553, %v4543
        %v4545 = vrot.slane %v3982, %v4544
        %v4546 = vsel %vm2558, %v4545, %v4541
        %v4547 = vlaneseq
        %v4548 = vshrl.u32 %v4547, 7
        %v4549 = vsub.s32 %v2560, %v4548
        %v4550 = vrot.slane %v3985, %v4549
        %v4551 = vsel %vm2565, %v4550, %v4546
        %v4552 = vlaneseq
        %v4553 = vshrl.u32 %v4552, 7
        %v4554 = vsub.s32 %v2567, %v4553
        %v4555 = vrot.slane %v3988, %v4554
        %v4556 = vsel %vm2572, %v4555, %v4551
        %v4557 = vlaneseq
        %v4558 = vshrl.u32 %v4557, 7
        %v4559 = vsub.s32 %v2574, %v4558
        %v4560 = vrot.slane %v3991, %v4559
        %v4561 = vsel %vm2579, %v4560, %v4556
        %v4562 = vlaneseq
        %v4563 = vshrl.u32 %v4562, 7
        %v4564 = vsub.s32 %v2471, %v4563
        %v4565 = vrot.slane %v3994, %v4564
        %v4566 = vlaneseq
        %v4567 = vshrl.u32 %v4566, 7
        %v4568 = vsub.s32 %v2476, %v4567
        %v4569 = vrot.slane %v3997, %v4568
        %v4570 = vsel %vm2481, %v4569, %v4565
        %v4571 = vlaneseq
        %v4572 = vshrl.u32 %v4571, 7
        %v4573 = vsub.s32 %v2483, %v4572
        %v4574 = vrot.slane %v4000, %v4573
        %v4575 = vsel %vm2488, %v4574, %v4570
        %v4576 = vlaneseq
        %v4577 = vshrl.u32 %v4576, 7
        %v4578 = vsub.s32 %v2490, %v4577
        %v4579 = vrot.slane %v4003, %v4578
        %v4580 = vsel %vm2495, %v4579, %v4575
        %v4581 = vlaneseq
        %v4582 = vshrl.u32 %v4581, 7
        %v4583 = vsub.s32 %v2497, %v4582
        %v4584 = vrot.slane %v4006, %v4583
        %v4585 = vsel %vm2502, %v4584, %v4580
        %v4586 = vlaneseq
        %v4587 = vshrl.u32 %v4586, 7
        %v4588 = vsub.s32 %v2504, %v4587
        %v4589 = vrot.slane %v4009, %v4588
        %v4590 = vsel %vm2509, %v4589, %v4585
        %v4591 = vlaneseq
        %v4592 = vshrl.u32 %v4591, 7
        %v4593 = vsub.s32 %v2511, %v4592
        %v4594 = vrot.slane %v4012, %v4593
        %v4595 = vsel %vm2516, %v4594, %v4590
        %v4596 = vlaneseq
        %v4597 = vshrl.u32 %v4596, 7
        %v4598 = vsub.s32 %v2518, %v4597
        %v4599 = vrot.slane %v4015, %v4598
        %v4600 = vsel %vm2523, %v4599, %v4595
        %v4601 = vlaneseq
        %v4602 = vshrl.u32 %v4601, 7
        %v4603 = vsub.s32 %v2525, %v4602
        %v4604 = vrot.slane %v4018, %v4603
        %v4605 = vsel %vm2530, %v4604, %v4600
        %v4606 = vlaneseq
        %v4607 = vshrl.u32 %v4606, 7
        %v4608 = vsub.s32 %v2532, %v4607
        %v4609 = vrot.slane %v4021, %v4608
        %v4610 = vsel %vm2537, %v4609, %v4605
        %v4611 = vlaneseq
        %v4612 = vshrl.u32 %v4611, 7
        %v4613 = vsub.s32 %v2539, %v4612
        %v4614 = vrot.slane %v4024, %v4613
        %v4615 = vsel %vm2544, %v4614, %v4610
        %v4616 = vlaneseq
        %v4617 = vshrl.u32 %v4616, 7
        %v4618 = vsub.s32 %v2546, %v4617
        %v4619 = vrot.slane %v4027, %v4618
        %v4620 = vsel %vm2551, %v4619, %v4615
        %v4621 = vlaneseq
        %v4622 = vshrl.u32 %v4621, 7
        %v4623 = vsub.s32 %v2553, %v4622
        %v4624 = vrot.slane %v4030, %v4623
        %v4625 = vsel %vm2558, %v4624, %v4620
        %v4626 = vlaneseq
        %v4627 = vshrl.u32 %v4626, 7
        %v4628 = vsub.s32 %v2560, %v4627
        %v4629 = vrot.slane %v4033, %v4628
        %v4630 = vsel %vm2565, %v4629, %v4625
        %v4631 = vlaneseq
        %v4632 = vshrl.u32 %v4631, 7
        %v4633 = vsub.s32 %v2567, %v4632
        %v4634 = vrot.slane %v4036, %v4633
        %v4635 = vsel %vm2572, %v4634, %v4630
        %v4636 = vlaneseq
        %v4637 = vshrl.u32 %v4636, 7
        %v4638 = vsub.s32 %v2574, %v4637
        %v4639 = vrot.slane %v4039, %v4638
        %v4640 = vsel %vm2579, %v4639, %v4635
        %v4641 = vlaneseq
        %v4642 = vshrl.u32 %v4641, 7
        %v4643 = vsub.s32 %v2471, %v4642
        %v4644 = vrot.slane %v4042, %v4643
        %v4645 = vlaneseq
        %v4646 = vshrl.u32 %v4645, 7
        %v4647 = vsub.s32 %v2476, %v4646
        %v4648 = vrot.slane %v4045, %v4647
        %v4649 = vsel %vm2481, %v4648, %v4644
        %v4650 = vlaneseq
        %v4651 = vshrl.u32 %v4650, 7
        %v4652 = vsub.s32 %v2483, %v4651
        %v4653 = vrot.slane %v4048, %v4652
        %v4654 = vsel %vm2488, %v4653, %v4649
        %v4655 = vlaneseq
        %v4656 = vshrl.u32 %v4655, 7
        %v4657 = vsub.s32 %v2490, %v4656
        %v4658 = vrot.slane %v4051, %v4657
        %v4659 = vsel %vm2495, %v4658, %v4654
        %v4660 = vlaneseq
        %v4661 = vshrl.u32 %v4660, 7
        %v4662 = vsub.s32 %v2497, %v4661
        %v4663 = vrot.slane %v4054, %v4662
        %v4664 = vsel %vm2502, %v4663, %v4659
        %v4665 = vlaneseq
        %v4666 = vshrl.u32 %v4665, 7
        %v4667 = vsub.s32 %v2504, %v4666
        %v4668 = vrot.slane %v4057, %v4667
        %v4669 = vsel %vm2509, %v4668, %v4664
        %v4670 = vlaneseq
        %v4671 = vshrl.u32 %v4670, 7
        %v4672 = vsub.s32 %v2511, %v4671
        %v4673 = vrot.slane %v4060, %v4672
        %v4674 = vsel %vm2516, %v4673, %v4669
        %v4675 = vlaneseq
        %v4676 = vshrl.u32 %v4675, 7
        %v4677 = vsub.s32 %v2518, %v4676
        %v4678 = vrot.slane %v4063, %v4677
        %v4679 = vsel %vm2523, %v4678, %v4674
        %v4680 = vlaneseq
        %v4681 = vshrl.u32 %v4680, 7
        %v4682 = vsub.s32 %v2525, %v4681
        %v4683 = vrot.slane %v4066, %v4682
        %v4684 = vsel %vm2530, %v4683, %v4679
        %v4685 = vlaneseq
        %v4686 = vshrl.u32 %v4685, 7
        %v4687 = vsub.s32 %v2532, %v4686
        %v4688 = vrot.slane %v4069, %v4687
        %v4689 = vsel %vm2537, %v4688, %v4684
        %v4690 = vlaneseq
        %v4691 = vshrl.u32 %v4690, 7
        %v4692 = vsub.s32 %v2539, %v4691
        %v4693 = vrot.slane %v4072, %v4692
        %v4694 = vsel %vm2544, %v4693, %v4689
        %v4695 = vlaneseq
        %v4696 = vshrl.u32 %v4695, 7
        %v4697 = vsub.s32 %v2546, %v4696
        %v4698 = vrot.slane %v4075, %v4697
        %v4699 = vsel %vm2551, %v4698, %v4694
        %v4700 = vlaneseq
        %v4701 = vshrl.u32 %v4700, 7
        %v4702 = vsub.s32 %v2553, %v4701
        %v4703 = vrot.slane %v4078, %v4702
        %v4704 = vsel %vm2558, %v4703, %v4699
        %v4705 = vlaneseq
        %v4706 = vshrl.u32 %v4705, 7
        %v4707 = vsub.s32 %v2560, %v4706
        %v4708 = vrot.slane %v4081, %v4707
        %v4709 = vsel %vm2565, %v4708, %v4704
        %v4710 = vlaneseq
        %v4711 = vshrl.u32 %v4710, 7
        %v4712 = vsub.s32 %v2567, %v4711
        %v4713 = vrot.slane %v4084, %v4712
        %v4714 = vsel %vm2572, %v4713, %v4709
        %v4715 = vlaneseq
        %v4716 = vshrl.u32 %v4715, 7
        %v4717 = vsub.s32 %v2574, %v4716
        %v4718 = vrot.slane %v4087, %v4717
        %v4719 = vsel %vm2579, %v4718, %v4714
        %v4720 = vsel %vm3134, %v4245, %v4166
        %v4721 = vsel %vm3136, %v4324, %v4720
        %v4722 = vsel %vm3138, %v4403, %v4721
        %v4723 = vsel %vm3140, %v4482, %v4722
        %v4724 = vsel %vm3142, %v4561, %v4723
        %v4725 = vsel %vm3144, %v4640, %v4724
        %v4726 = vsel %vm3146, %v4719, %v4725
        %4728 = vadd.xlane.f32.xlu0 %v4726
        %v4729 = vpop.xlane.xlu0 %4728
        %v4730 = vrcp.pop %v4729
        %v4731 = vmul.f32 %v4729, %v4730
        %v4732 = vsub.f32 2.0, %v4731
        %v4733 = vmul.f32 %v4730, %v4732
        %v4735 = vlaneseq
        %v4736 = vshrl.u32 %v4735, 7
        %v4737 = vsub.s32 0, %v4736
        %v4738 = vrot.slane %v4733, %v4737
        %v4739 = vlaneseq
        %v4740 = vshrl.u32 %v4739, 7
        %v4741 = vsub.s32 1, %v4740
        %v4742 = vrot.slane %v4733, %v4741
        %v4743 = vlaneseq
        %v4744 = vshrl.u32 %v4743, 7
        %v4745 = vsub.s32 2, %v4744
        %v4746 = vrot.slane %v4733, %v4745
        %v4747 = vlaneseq
        %v4748 = vshrl.u32 %v4747, 7
        %v4749 = vsub.s32 3, %v4748
        %v4750 = vrot.slane %v4733, %v4749
        %v4751 = vlaneseq
        %v4752 = vshrl.u32 %v4751, 7
        %v4753 = vsub.s32 4, %v4752
        %v4754 = vrot.slane %v4733, %v4753
        %v4755 = vlaneseq
        %v4756 = vshrl.u32 %v4755, 7
        %v4757 = vsub.s32 5, %v4756
        %v4758 = vrot.slane %v4733, %v4757
        %v4759 = vlaneseq
        %v4760 = vshrl.u32 %v4759, 7
        %v4761 = vsub.s32 6, %v4760
        %v4762 = vrot.slane %v4733, %v4761
        %v4763 = vlaneseq
        %v4764 = vshrl.u32 %v4763, 7
        %v4765 = vsub.s32 7, %v4764
        %v4766 = vrot.slane %v4733, %v4765
        %v4775 = vmul.f32 %v3321, %v4738
        %v4776 = vmul.f32 %v3323, %v4738
        %v4777 = vmul.f32 %v3325, %v4738
        %v4778 = vmul.f32 %v3327, %v4738
        %v4779 = vmul.f32 %v3329, %v4738
        %v4780 = vmul.f32 %v3331, %v4738
        %v4781 = vmul.f32 %v3333, %v4738
        %v4782 = vmul.f32 %v3335, %v4738
        %v4783 = vmul.f32 %v3337, %v4738
        %v4784 = vmul.f32 %v3339, %v4738
        %v4785 = vmul.f32 %v3341, %v4738
        %v4786 = vmul.f32 %v3343, %v4738
        %v4787 = vmul.f32 %v3345, %v4738
        %v4788 = vmul.f32 %v3347, %v4738
        %v4789 = vmul.f32 %v3349, %v4738
        %v4790 = vmul.f32 %v3351, %v4738
        %v4791 = vmul.f32 %v3353, %v4742
        %v4792 = vmul.f32 %v3355, %v4742
        %v4793 = vmul.f32 %v3357, %v4742
        %v4794 = vmul.f32 %v3359, %v4742
        %v4795 = vmul.f32 %v3361, %v4742
        %v4796 = vmul.f32 %v3363, %v4742
        %v4797 = vmul.f32 %v3365, %v4742
        %v4798 = vmul.f32 %v3367, %v4742
        %v4799 = vmul.f32 %v3369, %v4742
        %v4800 = vmul.f32 %v3371, %v4742
        %v4801 = vmul.f32 %v3373, %v4742
        %v4802 = vmul.f32 %v3375, %v4742
        %v4803 = vmul.f32 %v3377, %v4742
        %v4804 = vmul.f32 %v3379, %v4742
        %v4805 = vmul.f32 %v3381, %v4742
        %v4806 = vmul.f32 %v3383, %v4742
        %v4807 = vmul.f32 %v3385, %v4746
        %v4808 = vmul.f32 %v3387, %v4746
        %v4809 = vmul.f32 %v3389, %v4746
        %v4810 = vmul.f32 %v3391, %v4746
        %v4811 = vmul.f32 %v3393, %v4746
        %v4812 = vmul.f32 %v3395, %v4746
        %v4813 = vmul.f32 %v3397, %v4746
        %v4814 = vmul.f32 %v3399, %v4746
        %v4815 = vmul.f32 %v3401, %v4746
        %v4816 = vmul.f32 %v3403, %v4746
        %v4817 = vmul.f32 %v3405, %v4746
        %v4818 = vmul.f32 %v3407, %v4746
        %v4819 = vmul.f32 %v3409, %v4746
        %v4820 = vmul.f32 %v3411, %v4746
        %v4821 = vmul.f32 %v3413, %v4746
        %v4822 = vmul.f32 %v3415, %v4746
        %v4823 = vmul.f32 %v3417, %v4750
        %v4824 = vmul.f32 %v3419, %v4750
        %v4825 = vmul.f32 %v3421, %v4750
        %v4826 = vmul.f32 %v3423, %v4750
        %v4827 = vmul.f32 %v3425, %v4750
        %v4828 = vmul.f32 %v3427, %v4750
        %v4829 = vmul.f32 %v3429, %v4750
        %v4830 = vmul.f32 %v3431, %v4750
        %v4831 = vmul.f32 %v3433, %v4750
        %v4832 = vmul.f32 %v3435, %v4750
        %v4833 = vmul.f32 %v3437, %v4750
        %v4834 = vmul.f32 %v3439, %v4750
        %v4835 = vmul.f32 %v3441, %v4750
        %v4836 = vmul.f32 %v3443, %v4750
        %v4837 = vmul.f32 %v3445, %v4750
        %v4838 = vmul.f32 %v3447, %v4750
        %v4839 = vmul.f32 %v3449, %v4754
        %v4840 = vmul.f32 %v3451, %v4754
        %v4841 = vmul.f32 %v3453, %v4754
        %v4842 = vmul.f32 %v3455, %v4754
        %v4843 = vmul.f32 %v3457, %v4754
        %v4844 = vmul.f32 %v3459, %v4754
        %v4845 = vmul.f32 %v3461, %v4754
        %v4846 = vmul.f32 %v3463, %v4754
        %v4847 = vmul.f32 %v3465, %v4754
        %v4848 = vmul.f32 %v3467, %v4754
        %v4849 = vmul.f32 %v3469, %v4754
        %v4850 = vmul.f32 %v3471, %v4754
        %v4851 = vmul.f32 %v3473, %v4754
        %v4852 = vmul.f32 %v3475, %v4754
        %v4853 = vmul.f32 %v3477, %v4754
        %v4854 = vmul.f32 %v3479, %v4754
        %v4855 = vmul.f32 %v3481, %v4758
        %v4856 = vmul.f32 %v3483, %v4758
        %v4857 = vmul.f32 %v3485, %v4758
        %v4858 = vmul.f32 %v3487, %v4758
        %v4859 = vmul.f32 %v3489, %v4758
        %v4860 = vmul.f32 %v3491, %v4758
        %v4861 = vmul.f32 %v3493, %v4758
        %v4862 = vmul.f32 %v3495, %v4758
        %v4863 = vmul.f32 %v3497, %v4758
        %v4864 = vmul.f32 %v3499, %v4758
        %v4865 = vmul.f32 %v3501, %v4758
        %v4866 = vmul.f32 %v3503, %v4758
        %v4867 = vmul.f32 %v3505, %v4758
        %v4868 = vmul.f32 %v3507, %v4758
        %v4869 = vmul.f32 %v3509, %v4758
        %v4870 = vmul.f32 %v3511, %v4758
        %v4871 = vmul.f32 %v3513, %v4762
        %v4872 = vmul.f32 %v3515, %v4762
        %v4873 = vmul.f32 %v3517, %v4762
        %v4874 = vmul.f32 %v3519, %v4762
        %v4875 = vmul.f32 %v3521, %v4762
        %v4876 = vmul.f32 %v3523, %v4762
        %v4877 = vmul.f32 %v3525, %v4762
        %v4878 = vmul.f32 %v3527, %v4762
        %v4879 = vmul.f32 %v3529, %v4762
        %v4880 = vmul.f32 %v3531, %v4762
        %v4881 = vmul.f32 %v3533, %v4762
        %v4882 = vmul.f32 %v3535, %v4762
        %v4883 = vmul.f32 %v3537, %v4762
        %v4884 = vmul.f32 %v3539, %v4762
        %v4885 = vmul.f32 %v3541, %v4762
        %v4886 = vmul.f32 %v3543, %v4762
        %v4887 = vmul.f32 %v3545, %v4766
        %v4888 = vmul.f32 %v3547, %v4766
        %v4889 = vmul.f32 %v3549, %v4766
        %v4890 = vmul.f32 %v3551, %v4766
        %v4891 = vmul.f32 %v3553, %v4766
        %v4892 = vmul.f32 %v3555, %v4766
        %v4893 = vmul.f32 %v3557, %v4766
        %v4894 = vmul.f32 %v3559, %v4766
        %v4895 = vmul.f32 %v3561, %v4766
        %v4896 = vmul.f32 %v3563, %v4766
        %v4897 = vmul.f32 %v3565, %v4766
        %v4898 = vmul.f32 %v3567, %v4766
        %v4899 = vmul.f32 %v3569, %v4766
        %v4900 = vmul.f32 %v3571, %v4766
        %v4901 = vmul.f32 %v3573, %v4766
        %v4902 = vmul.f32 %v3575, %v4766
        %v4903 = vld [vmem:[#allocation4] sm:$0xff]
        %v4904 = vld [vmem:[#allocation4 + $0x8] sm:$0xff]
        %v4905 = vld [vmem:[#allocation4 + $0x10] sm:$0xff]
        %v4906 = vld [vmem:[#allocation4 + $0x18] sm:$0xff]
        %v4907 = vld [vmem:[#allocation4 + $0x20] sm:$0xff]
        %v4908 = vld [vmem:[#allocation4 + $0x28] sm:$0xff]
        %v4909 = vld [vmem:[#allocation4 + $0x30] sm:$0xff]
        %v4910 = vld [vmem:[#allocation4 + $0x38] sm:$0xff]
        %v4911 = vld [vmem:[#allocation4 + $0x40] sm:$0xff]
        %v4912 = vld [vmem:[#allocation4 + $0x48] sm:$0xff]
        %v4913 = vld [vmem:[#allocation4 + $0x50] sm:$0xff]
        %v4914 = vld [vmem:[#allocation4 + $0x58] sm:$0xff]
        %v4915 = vld [vmem:[#allocation4 + $0x60] sm:$0xff]
        %v4916 = vld [vmem:[#allocation4 + $0x68] sm:$0xff]
        %v4917 = vld [vmem:[#allocation4 + $0x70] sm:$0xff]
        %v4918 = vld [vmem:[#allocation4 + $0x78] sm:$0xff]
        %v4919 = vld [vmem:[#allocation4 + $0x80] sm:$0xff]
        %v4920 = vld [vmem:[#allocation4 + $0x88] sm:$0xff]
        %v4921 = vld [vmem:[#allocation4 + $0x90] sm:$0xff]
        %v4922 = vld [vmem:[#allocation4 + $0x98] sm:$0xff]
        %v4923 = vld [vmem:[#allocation4 + $0xa0] sm:$0xff]
        %v4924 = vld [vmem:[#allocation4 + $0xa8] sm:$0xff]
        %v4925 = vld [vmem:[#allocation4 + $0xb0] sm:$0xff]
        %v4926 = vld [vmem:[#allocation4 + $0xb8] sm:$0xff]
        %v4927 = vld [vmem:[#allocation4 + $0xc0] sm:$0xff]
        %v4928 = vld [vmem:[#allocation4 + $0xc8] sm:$0xff]
        %v4929 = vld [vmem:[#allocation4 + $0xd0] sm:$0xff]
        %v4930 = vld [vmem:[#allocation4 + $0xd8] sm:$0xff]
        %v4931 = vld [vmem:[#allocation4 + $0xe0] sm:$0xff]
        %v4932 = vld [vmem:[#allocation4 + $0xe8] sm:$0xff]
        %v4933 = vld [vmem:[#allocation4 + $0xf0] sm:$0xff]
        %v4934 = vld [vmem:[#allocation4 + $0xf8] sm:$0xff]
        %v4935 = vld [vmem:[#allocation4 + $0x100] sm:$0xff]
        %v4936 = vld [vmem:[#allocation4 + $0x108] sm:$0xff]
        %v4937 = vld [vmem:[#allocation4 + $0x110] sm:$0xff]
        %v4938 = vld [vmem:[#allocation4 + $0x118] sm:$0xff]
        %v4939 = vld [vmem:[#allocation4 + $0x120] sm:$0xff]
        %v4940 = vld [vmem:[#allocation4 + $0x128] sm:$0xff]
        %v4941 = vld [vmem:[#allocation4 + $0x130] sm:$0xff]
        %v4942 = vld [vmem:[#allocation4 + $0x138] sm:$0xff]
        %v4943 = vld [vmem:[#allocation4 + $0x140] sm:$0xff]
        %v4944 = vld [vmem:[#allocation4 + $0x148] sm:$0xff]
        %v4945 = vld [vmem:[#allocation4 + $0x150] sm:$0xff]
        %v4946 = vld [vmem:[#allocation4 + $0x158] sm:$0xff]
        %v4947 = vld [vmem:[#allocation4 + $0x160] sm:$0xff]
        %v4948 = vld [vmem:[#allocation4 + $0x168] sm:$0xff]
        %v4949 = vld [vmem:[#allocation4 + $0x170] sm:$0xff]
        %v4950 = vld [vmem:[#allocation4 + $0x178] sm:$0xff]
        %v4951 = vld [vmem:[#allocation4 + $0x180] sm:$0xff]
        %v4952 = vld [vmem:[#allocation4 + $0x188] sm:$0xff]
        %v4953 = vld [vmem:[#allocation4 + $0x190] sm:$0xff]
        %v4954 = vld [vmem:[#allocation4 + $0x198] sm:$0xff]
        %v4955 = vld [vmem:[#allocation4 + $0x1a0] sm:$0xff]
        %v4956 = vld [vmem:[#allocation4 + $0x1a8] sm:$0xff]
        %v4957 = vld [vmem:[#allocation4 + $0x1b0] sm:$0xff]
        %v4958 = vld [vmem:[#allocation4 + $0x1b8] sm:$0xff]
        %v4959 = vld [vmem:[#allocation4 + $0x1c0] sm:$0xff]
        %v4960 = vld [vmem:[#allocation4 + $0x1c8] sm:$0xff]
        %v4961 = vld [vmem:[#allocation4 + $0x1d0] sm:$0xff]
        %v4962 = vld [vmem:[#allocation4 + $0x1d8] sm:$0xff]
        %v4963 = vld [vmem:[#allocation4 + $0x1e0] sm:$0xff]
        %v4964 = vld [vmem:[#allocation4 + $0x1e8] sm:$0xff]
        %v4965 = vld [vmem:[#allocation4 + $0x1f0] sm:$0xff]
        %v4966 = vld [vmem:[#allocation4 + $0x1f8] sm:$0xff]
        %v4967 = vld [vmem:[#allocation4 + $0x200] sm:$0xff]
        %v4968 = vld [vmem:[#allocation4 + $0x208] sm:$0xff]
        %v4969 = vld [vmem:[#allocation4 + $0x210] sm:$0xff]
        %v4970 = vld [vmem:[#allocation4 + $0x218] sm:$0xff]
        %v4971 = vld [vmem:[#allocation4 + $0x220] sm:$0xff]
        %v4972 = vld [vmem:[#allocation4 + $0x228] sm:$0xff]
        %v4973 = vld [vmem:[#allocation4 + $0x230] sm:$0xff]
        %v4974 = vld [vmem:[#allocation4 + $0x238] sm:$0xff]
        %v4975 = vld [vmem:[#allocation4 + $0x240] sm:$0xff]
        %v4976 = vld [vmem:[#allocation4 + $0x248] sm:$0xff]
        %v4977 = vld [vmem:[#allocation4 + $0x250] sm:$0xff]
        %v4978 = vld [vmem:[#allocation4 + $0x258] sm:$0xff]
        %v4979 = vld [vmem:[#allocation4 + $0x260] sm:$0xff]
        %v4980 = vld [vmem:[#allocation4 + $0x268] sm:$0xff]
        %v4981 = vld [vmem:[#allocation4 + $0x270] sm:$0xff]
        %v4982 = vld [vmem:[#allocation4 + $0x278] sm:$0xff]
        %v4983 = vld [vmem:[#allocation4 + $0x280] sm:$0xff]
        %v4984 = vld [vmem:[#allocation4 + $0x288] sm:$0xff]
        %v4985 = vld [vmem:[#allocation4 + $0x290] sm:$0xff]
        %v4986 = vld [vmem:[#allocation4 + $0x298] sm:$0xff]
        %v4987 = vld [vmem:[#allocation4 + $0x2a0] sm:$0xff]
        %v4988 = vld [vmem:[#allocation4 + $0x2a8] sm:$0xff]
        %v4989 = vld [vmem:[#allocation4 + $0x2b0] sm:$0xff]
        %v4990 = vld [vmem:[#allocation4 + $0x2b8] sm:$0xff]
        %v4991 = vld [vmem:[#allocation4 + $0x2c0] sm:$0xff]
        %v4992 = vld [vmem:[#allocation4 + $0x2c8] sm:$0xff]
        %v4993 = vld [vmem:[#allocation4 + $0x2d0] sm:$0xff]
        %v4994 = vld [vmem:[#allocation4 + $0x2d8] sm:$0xff]
        %v4995 = vld [vmem:[#allocation4 + $0x2e0] sm:$0xff]
        %v4996 = vld [vmem:[#allocation4 + $0x2e8] sm:$0xff]
        %v4997 = vld [vmem:[#allocation4 + $0x2f0] sm:$0xff]
        %v4998 = vld [vmem:[#allocation4 + $0x2f8] sm:$0xff]
        %v4999 = vld [vmem:[#allocation4 + $0x300] sm:$0xff]
        %v5000 = vld [vmem:[#allocation4 + $0x308] sm:$0xff]
        %v5001 = vld [vmem:[#allocation4 + $0x310] sm:$0xff]
        %v5002 = vld [vmem:[#allocation4 + $0x318] sm:$0xff]
        %v5003 = vld [vmem:[#allocation4 + $0x320] sm:$0xff]
        %v5004 = vld [vmem:[#allocation4 + $0x328] sm:$0xff]
        %v5005 = vld [vmem:[#allocation4 + $0x330] sm:$0xff]
        %v5006 = vld [vmem:[#allocation4 + $0x338] sm:$0xff]
        %v5007 = vld [vmem:[#allocation4 + $0x340] sm:$0xff]
        %v5008 = vld [vmem:[#allocation4 + $0x348] sm:$0xff]
        %v5009 = vld [vmem:[#allocation4 + $0x350] sm:$0xff]
        %v5010 = vld [vmem:[#allocation4 + $0x358] sm:$0xff]
        %v5011 = vld [vmem:[#allocation4 + $0x360] sm:$0xff]
        %v5012 = vld [vmem:[#allocation4 + $0x368] sm:$0xff]
        %v5013 = vld [vmem:[#allocation4 + $0x370] sm:$0xff]
        %v5014 = vld [vmem:[#allocation4 + $0x378] sm:$0xff]
        %v5015 = vld [vmem:[#allocation4 + $0x380] sm:$0xff]
        %v5016 = vld [vmem:[#allocation4 + $0x388] sm:$0xff]
        %v5017 = vld [vmem:[#allocation4 + $0x390] sm:$0xff]
        %v5018 = vld [vmem:[#allocation4 + $0x398] sm:$0xff]
        %v5019 = vld [vmem:[#allocation4 + $0x3a0] sm:$0xff]
        %v5020 = vld [vmem:[#allocation4 + $0x3a8] sm:$0xff]
        %v5021 = vld [vmem:[#allocation4 + $0x3b0] sm:$0xff]
        %v5022 = vld [vmem:[#allocation4 + $0x3b8] sm:$0xff]
        %v5023 = vld [vmem:[#allocation4 + $0x3c0] sm:$0xff]
        %v5024 = vld [vmem:[#allocation4 + $0x3c8] sm:$0xff]
        %v5025 = vld [vmem:[#allocation4 + $0x3d0] sm:$0xff]
        %v5026 = vld [vmem:[#allocation4 + $0x3d8] sm:$0xff]
        %v5027 = vld [vmem:[#allocation4 + $0x3e0] sm:$0xff]
        %v5028 = vld [vmem:[#allocation4 + $0x3e8] sm:$0xff]
        %v5029 = vld [vmem:[#allocation4 + $0x3f0] sm:$0xff]
        %v5030 = vld [vmem:[#allocation4 + $0x3f8] sm:$0xff]
        %5032 = vset.pattern.permute.xlu0 0
        %5033 = vperm.xlu0 %5032, %v4775
        %v5034 = vpop.permute.xlu0 %5033
        %5037 = vset.pattern.permute.xlu0 0
        %5038 = vperm.xlu0 %5037, %v4776
        %v5039 = vpop.permute.xlu0 %5038
        %5042 = vset.pattern.permute.xlu0 0
        %5043 = vperm.xlu0 %5042, %v4777
        %v5044 = vpop.permute.xlu0 %5043
        %5047 = vset.pattern.permute.xlu0 0
        %5048 = vperm.xlu0 %5047, %v4778
        %v5049 = vpop.permute.xlu0 %5048
        %5052 = vset.pattern.permute.xlu0 0
        %5053 = vperm.xlu0 %5052, %v4779
        %v5054 = vpop.permute.xlu0 %5053
        %5057 = vset.pattern.permute.xlu0 0
        %5058 = vperm.xlu0 %5057, %v4780
        %v5059 = vpop.permute.xlu0 %5058
        %5062 = vset.pattern.permute.xlu0 0
        %5063 = vperm.xlu0 %5062, %v4781
        %v5064 = vpop.permute.xlu0 %5063
        %5067 = vset.pattern.permute.xlu0 0
        %5068 = vperm.xlu0 %5067, %v4782
        %v5069 = vpop.permute.xlu0 %5068
        %5072 = vset.pattern.permute.xlu0 0
        %5073 = vperm.xlu0 %5072, %v4783
        %v5074 = vpop.permute.xlu0 %5073
        %5077 = vset.pattern.permute.xlu0 0
        %5078 = vperm.xlu0 %5077, %v4784
        %v5079 = vpop.permute.xlu0 %5078
        %5082 = vset.pattern.permute.xlu0 0
        %5083 = vperm.xlu0 %5082, %v4785
        %v5084 = vpop.permute.xlu0 %5083
        %5087 = vset.pattern.permute.xlu0 0
        %5088 = vperm.xlu0 %5087, %v4786
        %v5089 = vpop.permute.xlu0 %5088
        %5092 = vset.pattern.permute.xlu0 0
        %5093 = vperm.xlu0 %5092, %v4787
        %v5094 = vpop.permute.xlu0 %5093
        %5097 = vset.pattern.permute.xlu0 0
        %5098 = vperm.xlu0 %5097, %v4788
        %v5099 = vpop.permute.xlu0 %5098
        %5102 = vset.pattern.permute.xlu0 0
        %5103 = vperm.xlu0 %5102, %v4789
        %v5104 = vpop.permute.xlu0 %5103
        %5107 = vset.pattern.permute.xlu0 0
        %5108 = vperm.xlu0 %5107, %v4790
        %v5109 = vpop.permute.xlu0 %5108
        %5112 = vset.pattern.permute.xlu0 0
        %5113 = vperm.xlu0 %5112, %v4791
        %v5114 = vpop.permute.xlu0 %5113
        %5117 = vset.pattern.permute.xlu0 0
        %5118 = vperm.xlu0 %5117, %v4792
        %v5119 = vpop.permute.xlu0 %5118
        %5122 = vset.pattern.permute.xlu0 0
        %5123 = vperm.xlu0 %5122, %v4793
        %v5124 = vpop.permute.xlu0 %5123
        %5127 = vset.pattern.permute.xlu0 0
        %5128 = vperm.xlu0 %5127, %v4794
        %v5129 = vpop.permute.xlu0 %5128
        %5132 = vset.pattern.permute.xlu0 0
        %5133 = vperm.xlu0 %5132, %v4795
        %v5134 = vpop.permute.xlu0 %5133
        %5137 = vset.pattern.permute.xlu0 0
        %5138 = vperm.xlu0 %5137, %v4796
        %v5139 = vpop.permute.xlu0 %5138
        %5142 = vset.pattern.permute.xlu0 0
        %5143 = vperm.xlu0 %5142, %v4797
        %v5144 = vpop.permute.xlu0 %5143
        %5147 = vset.pattern.permute.xlu0 0
        %5148 = vperm.xlu0 %5147, %v4798
        %v5149 = vpop.permute.xlu0 %5148
        %5152 = vset.pattern.permute.xlu0 0
        %5153 = vperm.xlu0 %5152, %v4799
        %v5154 = vpop.permute.xlu0 %5153
        %5157 = vset.pattern.permute.xlu0 0
        %5158 = vperm.xlu0 %5157, %v4800
        %v5159 = vpop.permute.xlu0 %5158
        %5162 = vset.pattern.permute.xlu0 0
        %5163 = vperm.xlu0 %5162, %v4801
        %v5164 = vpop.permute.xlu0 %5163
        %5167 = vset.pattern.permute.xlu0 0
        %5168 = vperm.xlu0 %5167, %v4802
        %v5169 = vpop.permute.xlu0 %5168
        %5172 = vset.pattern.permute.xlu0 0
        %5173 = vperm.xlu0 %5172, %v4803
        %v5174 = vpop.permute.xlu0 %5173
        %5177 = vset.pattern.permute.xlu0 0
        %5178 = vperm.xlu0 %5177, %v4804
        %v5179 = vpop.permute.xlu0 %5178
        %5182 = vset.pattern.permute.xlu0 0
        %5183 = vperm.xlu0 %5182, %v4805
        %v5184 = vpop.permute.xlu0 %5183
        %5187 = vset.pattern.permute.xlu0 0
        %5188 = vperm.xlu0 %5187, %v4806
        %v5189 = vpop.permute.xlu0 %5188
        %5192 = vset.pattern.permute.xlu0 0
        %5193 = vperm.xlu0 %5192, %v4807
        %v5194 = vpop.permute.xlu0 %5193
        %5197 = vset.pattern.permute.xlu0 0
        %5198 = vperm.xlu0 %5197, %v4808
        %v5199 = vpop.permute.xlu0 %5198
        %5202 = vset.pattern.permute.xlu0 0
        %5203 = vperm.xlu0 %5202, %v4809
        %v5204 = vpop.permute.xlu0 %5203
        %5207 = vset.pattern.permute.xlu0 0
        %5208 = vperm.xlu0 %5207, %v4810
        %v5209 = vpop.permute.xlu0 %5208
        %5212 = vset.pattern.permute.xlu0 0
        %5213 = vperm.xlu0 %5212, %v4811
        %v5214 = vpop.permute.xlu0 %5213
        %5217 = vset.pattern.permute.xlu0 0
        %5218 = vperm.xlu0 %5217, %v4812
        %v5219 = vpop.permute.xlu0 %5218
        %5222 = vset.pattern.permute.xlu0 0
        %5223 = vperm.xlu0 %5222, %v4813
        %v5224 = vpop.permute.xlu0 %5223
        %5227 = vset.pattern.permute.xlu0 0
        %5228 = vperm.xlu0 %5227, %v4814
        %v5229 = vpop.permute.xlu0 %5228
        %5232 = vset.pattern.permute.xlu0 0
        %5233 = vperm.xlu0 %5232, %v4815
        %v5234 = vpop.permute.xlu0 %5233
        %5237 = vset.pattern.permute.xlu0 0
        %5238 = vperm.xlu0 %5237, %v4816
        %v5239 = vpop.permute.xlu0 %5238
        %5242 = vset.pattern.permute.xlu0 0
        %5243 = vperm.xlu0 %5242, %v4817
        %v5244 = vpop.permute.xlu0 %5243
        %5247 = vset.pattern.permute.xlu0 0
        %5248 = vperm.xlu0 %5247, %v4818
        %v5249 = vpop.permute.xlu0 %5248
        %5252 = vset.pattern.permute.xlu0 0
        %5253 = vperm.xlu0 %5252, %v4819
        %v5254 = vpop.permute.xlu0 %5253
        %5257 = vset.pattern.permute.xlu0 0
        %5258 = vperm.xlu0 %5257, %v4820
        %v5259 = vpop.permute.xlu0 %5258
        %5262 = vset.pattern.permute.xlu0 0
        %5263 = vperm.xlu0 %5262, %v4821
        %v5264 = vpop.permute.xlu0 %5263
        %5267 = vset.pattern.permute.xlu0 0
        %5268 = vperm.xlu0 %5267, %v4822
        %v5269 = vpop.permute.xlu0 %5268
        %5272 = vset.pattern.permute.xlu0 0
        %5273 = vperm.xlu0 %5272, %v4823
        %v5274 = vpop.permute.xlu0 %5273
        %5277 = vset.pattern.permute.xlu0 0
        %5278 = vperm.xlu0 %5277, %v4824
        %v5279 = vpop.permute.xlu0 %5278
        %5282 = vset.pattern.permute.xlu0 0
        %5283 = vperm.xlu0 %5282, %v4825
        %v5284 = vpop.permute.xlu0 %5283
        %5287 = vset.pattern.permute.xlu0 0
        %5288 = vperm.xlu0 %5287, %v4826
        %v5289 = vpop.permute.xlu0 %5288
        %5292 = vset.pattern.permute.xlu0 0
        %5293 = vperm.xlu0 %5292, %v4827
        %v5294 = vpop.permute.xlu0 %5293
        %5297 = vset.pattern.permute.xlu0 0
        %5298 = vperm.xlu0 %5297, %v4828
        %v5299 = vpop.permute.xlu0 %5298
        %5302 = vset.pattern.permute.xlu0 0
        %5303 = vperm.xlu0 %5302, %v4829
        %v5304 = vpop.permute.xlu0 %5303
        %5307 = vset.pattern.permute.xlu0 0
        %5308 = vperm.xlu0 %5307, %v4830
        %v5309 = vpop.permute.xlu0 %5308
        %5312 = vset.pattern.permute.xlu0 0
        %5313 = vperm.xlu0 %5312, %v4831
        %v5314 = vpop.permute.xlu0 %5313
        %5317 = vset.pattern.permute.xlu0 0
        %5318 = vperm.xlu0 %5317, %v4832
        %v5319 = vpop.permute.xlu0 %5318
        %5322 = vset.pattern.permute.xlu0 0
        %5323 = vperm.xlu0 %5322, %v4833
        %v5324 = vpop.permute.xlu0 %5323
        %5327 = vset.pattern.permute.xlu0 0
        %5328 = vperm.xlu0 %5327, %v4834
        %v5329 = vpop.permute.xlu0 %5328
        %5332 = vset.pattern.permute.xlu0 0
        %5333 = vperm.xlu0 %5332, %v4835
        %v5334 = vpop.permute.xlu0 %5333
        %5337 = vset.pattern.permute.xlu0 0
        %5338 = vperm.xlu0 %5337, %v4836
        %v5339 = vpop.permute.xlu0 %5338
        %5342 = vset.pattern.permute.xlu0 0
        %5343 = vperm.xlu0 %5342, %v4837
        %v5344 = vpop.permute.xlu0 %5343
        %5347 = vset.pattern.permute.xlu0 0
        %5348 = vperm.xlu0 %5347, %v4838
        %v5349 = vpop.permute.xlu0 %5348
        %5352 = vset.pattern.permute.xlu0 0
        %5353 = vperm.xlu0 %5352, %v4839
        %v5354 = vpop.permute.xlu0 %5353
        %5357 = vset.pattern.permute.xlu0 0
        %5358 = vperm.xlu0 %5357, %v4840
        %v5359 = vpop.permute.xlu0 %5358
        %5362 = vset.pattern.permute.xlu0 0
        %5363 = vperm.xlu0 %5362, %v4841
        %v5364 = vpop.permute.xlu0 %5363
        %5367 = vset.pattern.permute.xlu0 0
        %5368 = vperm.xlu0 %5367, %v4842
        %v5369 = vpop.permute.xlu0 %5368
        %5372 = vset.pattern.permute.xlu0 0
        %5373 = vperm.xlu0 %5372, %v4843
        %v5374 = vpop.permute.xlu0 %5373
        %5377 = vset.pattern.permute.xlu0 0
        %5378 = vperm.xlu0 %5377, %v4844
        %v5379 = vpop.permute.xlu0 %5378
        %5382 = vset.pattern.permute.xlu0 0
        %5383 = vperm.xlu0 %5382, %v4845
        %v5384 = vpop.permute.xlu0 %5383
        %5387 = vset.pattern.permute.xlu0 0
        %5388 = vperm.xlu0 %5387, %v4846
        %v5389 = vpop.permute.xlu0 %5388
        %5392 = vset.pattern.permute.xlu0 0
        %5393 = vperm.xlu0 %5392, %v4847
        %v5394 = vpop.permute.xlu0 %5393
        %5397 = vset.pattern.permute.xlu0 0
        %5398 = vperm.xlu0 %5397, %v4848
        %v5399 = vpop.permute.xlu0 %5398
        %5402 = vset.pattern.permute.xlu0 0
        %5403 = vperm.xlu0 %5402, %v4849
        %v5404 = vpop.permute.xlu0 %5403
        %5407 = vset.pattern.permute.xlu0 0
        %5408 = vperm.xlu0 %5407, %v4850
        %v5409 = vpop.permute.xlu0 %5408
        %5412 = vset.pattern.permute.xlu0 0
        %5413 = vperm.xlu0 %5412, %v4851
        %v5414 = vpop.permute.xlu0 %5413
        %5417 = vset.pattern.permute.xlu0 0
        %5418 = vperm.xlu0 %5417, %v4852
        %v5419 = vpop.permute.xlu0 %5418
        %5422 = vset.pattern.permute.xlu0 0
        %5423 = vperm.xlu0 %5422, %v4853
        %v5424 = vpop.permute.xlu0 %5423
        %5427 = vset.pattern.permute.xlu0 0
        %5428 = vperm.xlu0 %5427, %v4854
        %v5429 = vpop.permute.xlu0 %5428
        %5432 = vset.pattern.permute.xlu0 0
        %5433 = vperm.xlu0 %5432, %v4855
        %v5434 = vpop.permute.xlu0 %5433
        %5437 = vset.pattern.permute.xlu0 0
        %5438 = vperm.xlu0 %5437, %v4856
        %v5439 = vpop.permute.xlu0 %5438
        %5442 = vset.pattern.permute.xlu0 0
        %5443 = vperm.xlu0 %5442, %v4857
        %v5444 = vpop.permute.xlu0 %5443
        %5447 = vset.pattern.permute.xlu0 0
        %5448 = vperm.xlu0 %5447, %v4858
        %v5449 = vpop.permute.xlu0 %5448
        %5452 = vset.pattern.permute.xlu0 0
        %5453 = vperm.xlu0 %5452, %v4859
        %v5454 = vpop.permute.xlu0 %5453
        %5457 = vset.pattern.permute.xlu0 0
        %5458 = vperm.xlu0 %5457, %v4860
        %v5459 = vpop.permute.xlu0 %5458
        %5462 = vset.pattern.permute.xlu0 0
        %5463 = vperm.xlu0 %5462, %v4861
        %v5464 = vpop.permute.xlu0 %5463
        %5467 = vset.pattern.permute.xlu0 0
        %5468 = vperm.xlu0 %5467, %v4862
        %v5469 = vpop.permute.xlu0 %5468
        %5472 = vset.pattern.permute.xlu0 0
        %5473 = vperm.xlu0 %5472, %v4863
        %v5474 = vpop.permute.xlu0 %5473
        %5477 = vset.pattern.permute.xlu0 0
        %5478 = vperm.xlu0 %5477, %v4864
        %v5479 = vpop.permute.xlu0 %5478
        %5482 = vset.pattern.permute.xlu0 0
        %5483 = vperm.xlu0 %5482, %v4865
        %v5484 = vpop.permute.xlu0 %5483
        %5487 = vset.pattern.permute.xlu0 0
        %5488 = vperm.xlu0 %5487, %v4866
        %v5489 = vpop.permute.xlu0 %5488
        %5492 = vset.pattern.permute.xlu0 0
        %5493 = vperm.xlu0 %5492, %v4867
        %v5494 = vpop.permute.xlu0 %5493
        %5497 = vset.pattern.permute.xlu0 0
        %5498 = vperm.xlu0 %5497, %v4868
        %v5499 = vpop.permute.xlu0 %5498
        %5502 = vset.pattern.permute.xlu0 0
        %5503 = vperm.xlu0 %5502, %v4869
        %v5504 = vpop.permute.xlu0 %5503
        %5507 = vset.pattern.permute.xlu0 0
        %5508 = vperm.xlu0 %5507, %v4870
        %v5509 = vpop.permute.xlu0 %5508
        %5512 = vset.pattern.permute.xlu0 0
        %5513 = vperm.xlu0 %5512, %v4871
        %v5514 = vpop.permute.xlu0 %5513
        %5517 = vset.pattern.permute.xlu0 0
        %5518 = vperm.xlu0 %5517, %v4872
        %v5519 = vpop.permute.xlu0 %5518
        %5522 = vset.pattern.permute.xlu0 0
        %5523 = vperm.xlu0 %5522, %v4873
        %v5524 = vpop.permute.xlu0 %5523
        %5527 = vset.pattern.permute.xlu0 0
        %5528 = vperm.xlu0 %5527, %v4874
        %v5529 = vpop.permute.xlu0 %5528
        %5532 = vset.pattern.permute.xlu0 0
        %5533 = vperm.xlu0 %5532, %v4875
        %v5534 = vpop.permute.xlu0 %5533
        %5537 = vset.pattern.permute.xlu0 0
        %5538 = vperm.xlu0 %5537, %v4876
        %v5539 = vpop.permute.xlu0 %5538
        %5542 = vset.pattern.permute.xlu0 0
        %5543 = vperm.xlu0 %5542, %v4877
        %v5544 = vpop.permute.xlu0 %5543
        %5547 = vset.pattern.permute.xlu0 0
        %5548 = vperm.xlu0 %5547, %v4878
        %v5549 = vpop.permute.xlu0 %5548
        %5552 = vset.pattern.permute.xlu0 0
        %5553 = vperm.xlu0 %5552, %v4879
        %v5554 = vpop.permute.xlu0 %5553
        %5557 = vset.pattern.permute.xlu0 0
        %5558 = vperm.xlu0 %5557, %v4880
        %v5559 = vpop.permute.xlu0 %5558
        %5562 = vset.pattern.permute.xlu0 0
        %5563 = vperm.xlu0 %5562, %v4881
        %v5564 = vpop.permute.xlu0 %5563
        %5567 = vset.pattern.permute.xlu0 0
        %5568 = vperm.xlu0 %5567, %v4882
        %v5569 = vpop.permute.xlu0 %5568
        %5572 = vset.pattern.permute.xlu0 0
        %5573 = vperm.xlu0 %5572, %v4883
        %v5574 = vpop.permute.xlu0 %5573
        %5577 = vset.pattern.permute.xlu0 0
        %5578 = vperm.xlu0 %5577, %v4884
        %v5579 = vpop.permute.xlu0 %5578
        %5582 = vset.pattern.permute.xlu0 0
        %5583 = vperm.xlu0 %5582, %v4885
        %v5584 = vpop.permute.xlu0 %5583
        %5587 = vset.pattern.permute.xlu0 0
        %5588 = vperm.xlu0 %5587, %v4886
        %v5589 = vpop.permute.xlu0 %5588
        %5592 = vset.pattern.permute.xlu0 0
        %5593 = vperm.xlu0 %5592, %v4887
        %v5594 = vpop.permute.xlu0 %5593
        %5597 = vset.pattern.permute.xlu0 0
        %5598 = vperm.xlu0 %5597, %v4888
        %v5599 = vpop.permute.xlu0 %5598
        %5602 = vset.pattern.permute.xlu0 0
        %5603 = vperm.xlu0 %5602, %v4889
        %v5604 = vpop.permute.xlu0 %5603
        %5607 = vset.pattern.permute.xlu0 0
        %5608 = vperm.xlu0 %5607, %v4890
        %v5609 = vpop.permute.xlu0 %5608
        %5612 = vset.pattern.permute.xlu0 0
        %5613 = vperm.xlu0 %5612, %v4891
        %v5614 = vpop.permute.xlu0 %5613
        %5617 = vset.pattern.permute.xlu0 0
        %5618 = vperm.xlu0 %5617, %v4892
        %v5619 = vpop.permute.xlu0 %5618
        %5622 = vset.pattern.permute.xlu0 0
        %5623 = vperm.xlu0 %5622, %v4893
        %v5624 = vpop.permute.xlu0 %5623
        %5627 = vset.pattern.permute.xlu0 0
        %5628 = vperm.xlu0 %5627, %v4894
        %v5629 = vpop.permute.xlu0 %5628
        %5632 = vset.pattern.permute.xlu0 0
        %5633 = vperm.xlu0 %5632, %v4895
        %v5634 = vpop.permute.xlu0 %5633
        %5637 = vset.pattern.permute.xlu0 0
        %5638 = vperm.xlu0 %5637, %v4896
        %v5639 = vpop.permute.xlu0 %5638
        %5642 = vset.pattern.permute.xlu0 0
        %5643 = vperm.xlu0 %5642, %v4897
        %v5644 = vpop.permute.xlu0 %5643
        %5647 = vset.pattern.permute.xlu0 0
        %5648 = vperm.xlu0 %5647, %v4898
        %v5649 = vpop.permute.xlu0 %5648
        %5652 = vset.pattern.permute.xlu0 0
        %5653 = vperm.xlu0 %5652, %v4899
        %v5654 = vpop.permute.xlu0 %5653
        %5657 = vset.pattern.permute.xlu0 0
        %5658 = vperm.xlu0 %5657, %v4900
        %v5659 = vpop.permute.xlu0 %5658
        %5662 = vset.pattern.permute.xlu0 0
        %5663 = vperm.xlu0 %5662, %v4901
        %v5664 = vpop.permute.xlu0 %5663
        %5667 = vset.pattern.permute.xlu0 0
        %5668 = vperm.xlu0 %5667, %v4902
        %v5669 = vpop.permute.xlu0 %5668
        %v5671 = vmul.f32 %v4903, %v5034
        %v5672 = vmul.f32 %v4904, %v5039
        %v5673 = vmul.f32 %v4905, %v5044
        %v5674 = vmul.f32 %v4906, %v5049
        %v5675 = vmul.f32 %v4907, %v5054
        %v5676 = vmul.f32 %v4908, %v5059
        %v5677 = vmul.f32 %v4909, %v5064
        %v5678 = vmul.f32 %v4910, %v5069
        %v5679 = vmul.f32 %v4911, %v5074
        %v5680 = vmul.f32 %v4912, %v5079
        %v5681 = vmul.f32 %v4913, %v5084
        %v5682 = vmul.f32 %v4914, %v5089
        %v5683 = vmul.f32 %v4915, %v5094
        %v5684 = vmul.f32 %v4916, %v5099
        %v5685 = vmul.f32 %v4917, %v5104
        %v5686 = vmul.f32 %v4918, %v5109
        %v5687 = vmul.f32 %v4919, %v5114
        %v5688 = vmul.f32 %v4920, %v5119
        %v5689 = vmul.f32 %v4921, %v5124
        %v5690 = vmul.f32 %v4922, %v5129
        %v5691 = vmul.f32 %v4923, %v5134
        %v5692 = vmul.f32 %v4924, %v5139
        %v5693 = vmul.f32 %v4925, %v5144
        %v5694 = vmul.f32 %v4926, %v5149
        %v5695 = vmul.f32 %v4927, %v5154
        %v5696 = vmul.f32 %v4928, %v5159
        %v5697 = vmul.f32 %v4929, %v5164
        %v5698 = vmul.f32 %v4930, %v5169
        %v5699 = vmul.f32 %v4931, %v5174
        %v5700 = vmul.f32 %v4932, %v5179
        %v5701 = vmul.f32 %v4933, %v5184
        %v5702 = vmul.f32 %v4934, %v5189
        %v5703 = vmul.f32 %v4935, %v5194
        %v5704 = vmul.f32 %v4936, %v5199
        %v5705 = vmul.f32 %v4937, %v5204
        %v5706 = vmul.f32 %v4938, %v5209
        %v5707 = vmul.f32 %v4939, %v5214
        %v5708 = vmul.f32 %v4940, %v5219
        %v5709 = vmul.f32 %v4941, %v5224
        %v5710 = vmul.f32 %v4942, %v5229
        %v5711 = vmul.f32 %v4943, %v5234
        %v5712 = vmul.f32 %v4944, %v5239
        %v5713 = vmul.f32 %v4945, %v5244
        %v5714 = vmul.f32 %v4946, %v5249
        %v5715 = vmul.f32 %v4947, %v5254
        %v5716 = vmul.f32 %v4948, %v5259
        %v5717 = vmul.f32 %v4949, %v5264
        %v5718 = vmul.f32 %v4950, %v5269
        %v5719 = vmul.f32 %v4951, %v5274
        %v5720 = vmul.f32 %v4952, %v5279
        %v5721 = vmul.f32 %v4953, %v5284
        %v5722 = vmul.f32 %v4954, %v5289
        %v5723 = vmul.f32 %v4955, %v5294
        %v5724 = vmul.f32 %v4956, %v5299
        %v5725 = vmul.f32 %v4957, %v5304
        %v5726 = vmul.f32 %v4958, %v5309
        %v5727 = vmul.f32 %v4959, %v5314
        %v5728 = vmul.f32 %v4960, %v5319
        %v5729 = vmul.f32 %v4961, %v5324
        %v5730 = vmul.f32 %v4962, %v5329
        %v5731 = vmul.f32 %v4963, %v5334
        %v5732 = vmul.f32 %v4964, %v5339
        %v5733 = vmul.f32 %v4965, %v5344
        %v5734 = vmul.f32 %v4966, %v5349
        %v5735 = vmul.f32 %v4967, %v5354
        %v5736 = vmul.f32 %v4968, %v5359
        %v5737 = vmul.f32 %v4969, %v5364
        %v5738 = vmul.f32 %v4970, %v5369
        %v5739 = vmul.f32 %v4971, %v5374
        %v5740 = vmul.f32 %v4972, %v5379
        %v5741 = vmul.f32 %v4973, %v5384
        %v5742 = vmul.f32 %v4974, %v5389
        %v5743 = vmul.f32 %v4975, %v5394
        %v5744 = vmul.f32 %v4976, %v5399
        %v5745 = vmul.f32 %v4977, %v5404
        %v5746 = vmul.f32 %v4978, %v5409
        %v5747 = vmul.f32 %v4979, %v5414
        %v5748 = vmul.f32 %v4980, %v5419
        %v5749 = vmul.f32 %v4981, %v5424
        %v5750 = vmul.f32 %v4982, %v5429
        %v5751 = vmul.f32 %v4983, %v5434
        %v5752 = vmul.f32 %v4984, %v5439
        %v5753 = vmul.f32 %v4985, %v5444
        %v5754 = vmul.f32 %v4986, %v5449
        %v5755 = vmul.f32 %v4987, %v5454
        %v5756 = vmul.f32 %v4988, %v5459
        %v5757 = vmul.f32 %v4989, %v5464
        %v5758 = vmul.f32 %v4990, %v5469
        %v5759 = vmul.f32 %v4991, %v5474
        %v5760 = vmul.f32 %v4992, %v5479
        %v5761 = vmul.f32 %v4993, %v5484
        %v5762 = vmul.f32 %v4994, %v5489
        %v5763 = vmul.f32 %v4995, %v5494
        %v5764 = vmul.f32 %v4996, %v5499
        %v5765 = vmul.f32 %v4997, %v5504
        %v5766 = vmul.f32 %v4998, %v5509
        %v5767 = vmul.f32 %v4999, %v5514
        %v5768 = vmul.f32 %v5000, %v5519
        %v5769 = vmul.f32 %v5001, %v5524
        %v5770 = vmul.f32 %v5002, %v5529
        %v5771 = vmul.f32 %v5003, %v5534
        %v5772 = vmul.f32 %v5004, %v5539
        %v5773 = vmul.f32 %v5005, %v5544
        %v5774 = vmul.f32 %v5006, %v5549
        %v5775 = vmul.f32 %v5007, %v5554
        %v5776 = vmul.f32 %v5008, %v5559
        %v5777 = vmul.f32 %v5009, %v5564
        %v5778 = vmul.f32 %v5010, %v5569
        %v5779 = vmul.f32 %v5011, %v5574
        %v5780 = vmul.f32 %v5012, %v5579
        %v5781 = vmul.f32 %v5013, %v5584
        %v5782 = vmul.f32 %v5014, %v5589
        %v5783 = vmul.f32 %v5015, %v5594
        %v5784 = vmul.f32 %v5016, %v5599
        %v5785 = vmul.f32 %v5017, %v5604
        %v5786 = vmul.f32 %v5018, %v5609
        %v5787 = vmul.f32 %v5019, %v5614
        %v5788 = vmul.f32 %v5020, %v5619
        %v5789 = vmul.f32 %v5021, %v5624
        %v5790 = vmul.f32 %v5022, %v5629
        %v5791 = vmul.f32 %v5023, %v5634
        %v5792 = vmul.f32 %v5024, %v5639
        %v5793 = vmul.f32 %v5025, %v5644
        %v5794 = vmul.f32 %v5026, %v5649
        %v5795 = vmul.f32 %v5027, %v5654
        %v5796 = vmul.f32 %v5028, %v5659
        %v5797 = vmul.f32 %v5029, %v5664
        %v5798 = vmul.f32 %v5030, %v5669
        %v5799 = vsel %vm607, %v5671, 0.0
        %v5800 = vsel %vm607, %v5672, 0.0
        %v5801 = vadd.f32 %v5799, %v5800
        %v5802 = vsel %vm607, %v5673, 0.0
        %v5803 = vadd.f32 %v5801, %v5802
        %v5804 = vsel %vm607, %v5674, 0.0
        %v5805 = vadd.f32 %v5803, %v5804
        %v5806 = vsel %vm607, %v5675, 0.0
        %v5807 = vadd.f32 %v5805, %v5806
        %v5808 = vsel %vm607, %v5676, 0.0
        %v5809 = vadd.f32 %v5807, %v5808
        %v5810 = vsel %vm607, %v5677, 0.0
        %v5811 = vadd.f32 %v5809, %v5810
        %v5812 = vsel %vm607, %v5678, 0.0
        %v5813 = vadd.f32 %v5811, %v5812
        %v5814 = vsel %vm607, %v5679, 0.0
        %v5815 = vadd.f32 %v5813, %v5814
        %v5816 = vsel %vm607, %v5680, 0.0
        %v5817 = vadd.f32 %v5815, %v5816
        %v5818 = vsel %vm607, %v5681, 0.0
        %v5819 = vadd.f32 %v5817, %v5818
        %v5820 = vsel %vm607, %v5682, 0.0
        %v5821 = vadd.f32 %v5819, %v5820
        %v5822 = vsel %vm607, %v5683, 0.0
        %v5823 = vadd.f32 %v5821, %v5822
        %v5824 = vsel %vm607, %v5684, 0.0
        %v5825 = vadd.f32 %v5823, %v5824
        %v5826 = vsel %vm607, %v5685, 0.0
        %v5827 = vadd.f32 %v5825, %v5826
        %v5828 = vsel %vm607, %v5686, 0.0
        %v5829 = vadd.f32 %v5827, %v5828
        %v5830 = vrot.slane %v5829, 4
        %v5831 = vadd.f32 %v5829, %v5830
        %v5832 = vrot.slane %v5831, 2
        %v5833 = vadd.f32 %v5831, %v5832
        %v5834 = vrot.slane %v5833, 1
        %v5835 = vadd.f32 %v5833, %v5834
        %v5836 = vsel %vm607, %v5687, 0.0
        %v5837 = vsel %vm607, %v5688, 0.0
        %v5838 = vadd.f32 %v5836, %v5837
        %v5839 = vsel %vm607, %v5689, 0.0
        %v5840 = vadd.f32 %v5838, %v5839
        %v5841 = vsel %vm607, %v5690, 0.0
        %v5842 = vadd.f32 %v5840, %v5841
        %v5843 = vsel %vm607, %v5691, 0.0
        %v5844 = vadd.f32 %v5842, %v5843
        %v5845 = vsel %vm607, %v5692, 0.0
        %v5846 = vadd.f32 %v5844, %v5845
        %v5847 = vsel %vm607, %v5693, 0.0
        %v5848 = vadd.f32 %v5846, %v5847
        %v5849 = vsel %vm607, %v5694, 0.0
        %v5850 = vadd.f32 %v5848, %v5849
        %v5851 = vsel %vm607, %v5695, 0.0
        %v5852 = vadd.f32 %v5850, %v5851
        %v5853 = vsel %vm607, %v5696, 0.0
        %v5854 = vadd.f32 %v5852, %v5853
        %v5855 = vsel %vm607, %v5697, 0.0
        %v5856 = vadd.f32 %v5854, %v5855
        %v5857 = vsel %vm607, %v5698, 0.0
        %v5858 = vadd.f32 %v5856, %v5857
        %v5859 = vsel %vm607, %v5699, 0.0
        %v5860 = vadd.f32 %v5858, %v5859
        %v5861 = vsel %vm607, %v5700, 0.0
        %v5862 = vadd.f32 %v5860, %v5861
        %v5863 = vsel %vm607, %v5701, 0.0
        %v5864 = vadd.f32 %v5862, %v5863
        %v5865 = vsel %vm607, %v5702, 0.0
        %v5866 = vadd.f32 %v5864, %v5865
        %v5867 = vrot.slane %v5866, 4
        %v5868 = vadd.f32 %v5866, %v5867
        %v5869 = vrot.slane %v5868, 2
        %v5870 = vadd.f32 %v5868, %v5869
        %v5871 = vrot.slane %v5870, 1
        %v5872 = vadd.f32 %v5870, %v5871
        %v5873 = vsel %vm607, %v5703, 0.0
        %v5874 = vsel %vm607, %v5704, 0.0
        %v5875 = vadd.f32 %v5873, %v5874
        %v5876 = vsel %vm607, %v5705, 0.0
        %v5877 = vadd.f32 %v5875, %v5876
        %v5878 = vsel %vm607, %v5706, 0.0
        %v5879 = vadd.f32 %v5877, %v5878
        %v5880 = vsel %vm607, %v5707, 0.0
        %v5881 = vadd.f32 %v5879, %v5880
        %v5882 = vsel %vm607, %v5708, 0.0
        %v5883 = vadd.f32 %v5881, %v5882
        %v5884 = vsel %vm607, %v5709, 0.0
        %v5885 = vadd.f32 %v5883, %v5884
        %v5886 = vsel %vm607, %v5710, 0.0
        %v5887 = vadd.f32 %v5885, %v5886
        %v5888 = vsel %vm607, %v5711, 0.0
        %v5889 = vadd.f32 %v5887, %v5888
        %v5890 = vsel %vm607, %v5712, 0.0
        %v5891 = vadd.f32 %v5889, %v5890
        %v5892 = vsel %vm607, %v5713, 0.0
        %v5893 = vadd.f32 %v5891, %v5892
        %v5894 = vsel %vm607, %v5714, 0.0
        %v5895 = vadd.f32 %v5893, %v5894
        %v5896 = vsel %vm607, %v5715, 0.0
        %v5897 = vadd.f32 %v5895, %v5896
        %v5898 = vsel %vm607, %v5716, 0.0
        %v5899 = vadd.f32 %v5897, %v5898
        %v5900 = vsel %vm607, %v5717, 0.0
        %v5901 = vadd.f32 %v5899, %v5900
        %v5902 = vsel %vm607, %v5718, 0.0
        %v5903 = vadd.f32 %v5901, %v5902
        %v5904 = vrot.slane %v5903, 4
        %v5905 = vadd.f32 %v5903, %v5904
        %v5906 = vrot.slane %v5905, 2
        %v5907 = vadd.f32 %v5905, %v5906
        %v5908 = vrot.slane %v5907, 1
        %v5909 = vadd.f32 %v5907, %v5908
        %v5910 = vsel %vm607, %v5719, 0.0
        %v5911 = vsel %vm607, %v5720, 0.0
        %v5912 = vadd.f32 %v5910, %v5911
        %v5913 = vsel %vm607, %v5721, 0.0
        %v5914 = vadd.f32 %v5912, %v5913
        %v5915 = vsel %vm607, %v5722, 0.0
        %v5916 = vadd.f32 %v5914, %v5915
        %v5917 = vsel %vm607, %v5723, 0.0
        %v5918 = vadd.f32 %v5916, %v5917
        %v5919 = vsel %vm607, %v5724, 0.0
        %v5920 = vadd.f32 %v5918, %v5919
        %v5921 = vsel %vm607, %v5725, 0.0
        %v5922 = vadd.f32 %v5920, %v5921
        %v5923 = vsel %vm607, %v5726, 0.0
        %v5924 = vadd.f32 %v5922, %v5923
        %v5925 = vsel %vm607, %v5727, 0.0
        %v5926 = vadd.f32 %v5924, %v5925
        %v5927 = vsel %vm607, %v5728, 0.0
        %v5928 = vadd.f32 %v5926, %v5927
        %v5929 = vsel %vm607, %v5729, 0.0
        %v5930 = vadd.f32 %v5928, %v5929
        %v5931 = vsel %vm607, %v5730, 0.0
        %v5932 = vadd.f32 %v5930, %v5931
        %v5933 = vsel %vm607, %v5731, 0.0
        %v5934 = vadd.f32 %v5932, %v5933
        %v5935 = vsel %vm607, %v5732, 0.0
        %v5936 = vadd.f32 %v5934, %v5935
        %v5937 = vsel %vm607, %v5733, 0.0
        %v5938 = vadd.f32 %v5936, %v5937
        %v5939 = vsel %vm607, %v5734, 0.0
        %v5940 = vadd.f32 %v5938, %v5939
        %v5941 = vrot.slane %v5940, 4
        %v5942 = vadd.f32 %v5940, %v5941
        %v5943 = vrot.slane %v5942, 2
        %v5944 = vadd.f32 %v5942, %v5943
        %v5945 = vrot.slane %v5944, 1
        %v5946 = vadd.f32 %v5944, %v5945
        %v5947 = vsel %vm607, %v5735, 0.0
        %v5948 = vsel %vm607, %v5736, 0.0
        %v5949 = vadd.f32 %v5947, %v5948
        %v5950 = vsel %vm607, %v5737, 0.0
        %v5951 = vadd.f32 %v5949, %v5950
        %v5952 = vsel %vm607, %v5738, 0.0
        %v5953 = vadd.f32 %v5951, %v5952
        %v5954 = vsel %vm607, %v5739, 0.0
        %v5955 = vadd.f32 %v5953, %v5954
        %v5956 = vsel %vm607, %v5740, 0.0
        %v5957 = vadd.f32 %v5955, %v5956
        %v5958 = vsel %vm607, %v5741, 0.0
        %v5959 = vadd.f32 %v5957, %v5958
        %v5960 = vsel %vm607, %v5742, 0.0
        %v5961 = vadd.f32 %v5959, %v5960
        %v5962 = vsel %vm607, %v5743, 0.0
        %v5963 = vadd.f32 %v5961, %v5962
        %v5964 = vsel %vm607, %v5744, 0.0
        %v5965 = vadd.f32 %v5963, %v5964
        %v5966 = vsel %vm607, %v5745, 0.0
        %v5967 = vadd.f32 %v5965, %v5966
        %v5968 = vsel %vm607, %v5746, 0.0
        %v5969 = vadd.f32 %v5967, %v5968
        %v5970 = vsel %vm607, %v5747, 0.0
        %v5971 = vadd.f32 %v5969, %v5970
        %v5972 = vsel %vm607, %v5748, 0.0
        %v5973 = vadd.f32 %v5971, %v5972
        %v5974 = vsel %vm607, %v5749, 0.0
        %v5975 = vadd.f32 %v5973, %v5974
        %v5976 = vsel %vm607, %v5750, 0.0
        %v5977 = vadd.f32 %v5975, %v5976
        %v5978 = vrot.slane %v5977, 4
        %v5979 = vadd.f32 %v5977, %v5978
        %v5980 = vrot.slane %v5979, 2
        %v5981 = vadd.f32 %v5979, %v5980
        %v5982 = vrot.slane %v5981, 1
        %v5983 = vadd.f32 %v5981, %v5982
        %v5984 = vsel %vm607, %v5751, 0.0
        %v5985 = vsel %vm607, %v5752, 0.0
        %v5986 = vadd.f32 %v5984, %v5985
        %v5987 = vsel %vm607, %v5753, 0.0
        %v5988 = vadd.f32 %v5986, %v5987
        %v5989 = vsel %vm607, %v5754, 0.0
        %v5990 = vadd.f32 %v5988, %v5989
        %v5991 = vsel %vm607, %v5755, 0.0
        %v5992 = vadd.f32 %v5990, %v5991
        %v5993 = vsel %vm607, %v5756, 0.0
        %v5994 = vadd.f32 %v5992, %v5993
        %v5995 = vsel %vm607, %v5757, 0.0
        %v5996 = vadd.f32 %v5994, %v5995
        %v5997 = vsel %vm607, %v5758, 0.0
        %v5998 = vadd.f32 %v5996, %v5997
        %v5999 = vsel %vm607, %v5759, 0.0
        %v6000 = vadd.f32 %v5998, %v5999
        %v6001 = vsel %vm607, %v5760, 0.0
        %v6002 = vadd.f32 %v6000, %v6001
        %v6003 = vsel %vm607, %v5761, 0.0
        %v6004 = vadd.f32 %v6002, %v6003
        %v6005 = vsel %vm607, %v5762, 0.0
        %v6006 = vadd.f32 %v6004, %v6005
        %v6007 = vsel %vm607, %v5763, 0.0
        %v6008 = vadd.f32 %v6006, %v6007
        %v6009 = vsel %vm607, %v5764, 0.0
        %v6010 = vadd.f32 %v6008, %v6009
        %v6011 = vsel %vm607, %v5765, 0.0
        %v6012 = vadd.f32 %v6010, %v6011
        %v6013 = vsel %vm607, %v5766, 0.0
        %v6014 = vadd.f32 %v6012, %v6013
        %v6015 = vrot.slane %v6014, 4
        %v6016 = vadd.f32 %v6014, %v6015
        %v6017 = vrot.slane %v6016, 2
        %v6018 = vadd.f32 %v6016, %v6017
        %v6019 = vrot.slane %v6018, 1
        %v6020 = vadd.f32 %v6018, %v6019
        %v6021 = vsel %vm607, %v5767, 0.0
        %v6022 = vsel %vm607, %v5768, 0.0
        %v6023 = vadd.f32 %v6021, %v6022
        %v6024 = vsel %vm607, %v5769, 0.0
        %v6025 = vadd.f32 %v6023, %v6024
        %v6026 = vsel %vm607, %v5770, 0.0
        %v6027 = vadd.f32 %v6025, %v6026
        %v6028 = vsel %vm607, %v5771, 0.0
        %v6029 = vadd.f32 %v6027, %v6028
        %v6030 = vsel %vm607, %v5772, 0.0
        %v6031 = vadd.f32 %v6029, %v6030
        %v6032 = vsel %vm607, %v5773, 0.0
        %v6033 = vadd.f32 %v6031, %v6032
        %v6034 = vsel %vm607, %v5774, 0.0
        %v6035 = vadd.f32 %v6033, %v6034
        %v6036 = vsel %vm607, %v5775, 0.0
        %v6037 = vadd.f32 %v6035, %v6036
        %v6038 = vsel %vm607, %v5776, 0.0
        %v6039 = vadd.f32 %v6037, %v6038
        %v6040 = vsel %vm607, %v5777, 0.0
        %v6041 = vadd.f32 %v6039, %v6040
        %v6042 = vsel %vm607, %v5778, 0.0
        %v6043 = vadd.f32 %v6041, %v6042
        %v6044 = vsel %vm607, %v5779, 0.0
        %v6045 = vadd.f32 %v6043, %v6044
        %v6046 = vsel %vm607, %v5780, 0.0
        %v6047 = vadd.f32 %v6045, %v6046
        %v6048 = vsel %vm607, %v5781, 0.0
        %v6049 = vadd.f32 %v6047, %v6048
        %v6050 = vsel %vm607, %v5782, 0.0
        %v6051 = vadd.f32 %v6049, %v6050
        %v6052 = vrot.slane %v6051, 4
        %v6053 = vadd.f32 %v6051, %v6052
        %v6054 = vrot.slane %v6053, 2
        %v6055 = vadd.f32 %v6053, %v6054
        %v6056 = vrot.slane %v6055, 1
        %v6057 = vadd.f32 %v6055, %v6056
        %v6058 = vsel %vm607, %v5783, 0.0
        %v6059 = vsel %vm607, %v5784, 0.0
        %v6060 = vadd.f32 %v6058, %v6059
        %v6061 = vsel %vm607, %v5785, 0.0
        %v6062 = vadd.f32 %v6060, %v6061
        %v6063 = vsel %vm607, %v5786, 0.0
        %v6064 = vadd.f32 %v6062, %v6063
        %v6065 = vsel %vm607, %v5787, 0.0
        %v6066 = vadd.f32 %v6064, %v6065
        %v6067 = vsel %vm607, %v5788, 0.0
        %v6068 = vadd.f32 %v6066, %v6067
        %v6069 = vsel %vm607, %v5789, 0.0
        %v6070 = vadd.f32 %v6068, %v6069
        %v6071 = vsel %vm607, %v5790, 0.0
        %v6072 = vadd.f32 %v6070, %v6071
        %v6073 = vsel %vm607, %v5791, 0.0
        %v6074 = vadd.f32 %v6072, %v6073
        %v6075 = vsel %vm607, %v5792, 0.0
        %v6076 = vadd.f32 %v6074, %v6075
        %v6077 = vsel %vm607, %v5793, 0.0
        %v6078 = vadd.f32 %v6076, %v6077
        %v6079 = vsel %vm607, %v5794, 0.0
        %v6080 = vadd.f32 %v6078, %v6079
        %v6081 = vsel %vm607, %v5795, 0.0
        %v6082 = vadd.f32 %v6080, %v6081
        %v6083 = vsel %vm607, %v5796, 0.0
        %v6084 = vadd.f32 %v6082, %v6083
        %v6085 = vsel %vm607, %v5797, 0.0
        %v6086 = vadd.f32 %v6084, %v6085
        %v6087 = vsel %vm607, %v5798, 0.0
        %v6088 = vadd.f32 %v6086, %v6087
        %v6089 = vrot.slane %v6088, 4
        %v6090 = vadd.f32 %v6088, %v6089
        %v6091 = vrot.slane %v6090, 2
        %v6092 = vadd.f32 %v6090, %v6091
        %v6093 = vrot.slane %v6092, 1
        %v6094 = vadd.f32 %v6092, %v6093
        %v6095 = vld [vmem:[#allocation16] sm:$0x1]
        %v6097 = vlaneseq
        %v6098 = vshrl.u32 %v6097, 7
        %v6099 = vsub.s32 0, %v6098
        %v6100 = vrot.slane %v6095, %v6099
        %v6102 = vadd.f32 %v680, %v6100
        %v6103 = vxor.u32 %v6102, 2147483648
        %v6104 = vmul.f32 %v6103, 1.442695
        %v6105 = vpow.pop %v6104
        %v6106 = vadd.f32 %v6105, 1.0
        %v6107 = vrcp.pop %v6106
        %v6108 = vmul.f32 1.0, %v6107
        %v6110 = vrot.slane %v6108, 1
        %v6111 = vrot.slane %v6108, 2
        %v6112 = vrot.slane %v6108, 3
        %v6113 = vrot.slane %v6108, 4
        %v6114 = vrot.slane %v6108, 5
        %v6115 = vrot.slane %v6108, 6
        %v6116 = vrot.slane %v6108, 7
        %v6125 = vmul.f32 %v5835, %v6108
        %v6126 = vmul.f32 %v5872, %v6110
        %v6127 = vmul.f32 %v5909, %v6111
        %v6128 = vmul.f32 %v5946, %v6112
        %v6129 = vmul.f32 %v5983, %v6113
        %v6130 = vmul.f32 %v6020, %v6114
        %v6131 = vmul.f32 %v6057, %v6115
        %v6132 = vmul.f32 %v6094, %v6116
        %v6133 = vld [vmem:[%s510] sm:$0xff]
        %v6134 = vld [vmem:[#allocation19] sm:$0xff]
        %v6135 = vld [vmem:[#allocation19 + $0x8] sm:$0xff]
        %v6136 = vld [vmem:[#allocation19 + $0x10] sm:$0xff]
        %v6137 = vld [vmem:[#allocation19 + $0x18] sm:$0xff]
        %v6146 = vrot.slane %v6126, 7
        %v6147 = vsel %vm3134, %v6146, %v6125
        %v6148 = vrot.slane %v6127, 6
        %v6149 = vsel %vm3136, %v6148, %v6147
        %v6150 = vrot.slane %v6128, 5
        %v6151 = vsel %vm3138, %v6150, %v6149
        %v6152 = vrot.slane %v6129, 4
        %v6153 = vsel %vm3140, %v6152, %v6151
        %v6154 = vrot.slane %v6130, 3
        %v6155 = vsel %vm3142, %v6154, %v6153
        %v6156 = vrot.slane %v6131, 2
        %v6157 = vsel %vm3144, %v6156, %v6155
        %v6158 = vrot.slane %v6132, 1
        %v6159 = vsel %vm3146, %v6158, %v6157
        %v6160 = vsel %vm607, %v6159, 0
        %6162 = vmatprep.subr.mxu0 0.0
        %6163 = vmatpush1.msra.mxu0 %v6134
        %6164 = vmatprep.subr.mxu0 0.0
        %6165 = vmatpush1.msra.mxu0 %v6135
        %6166 = vmatprep.subr.mxu0 0.0
        %6167 = vmatpush1.msra.mxu0 %v6136
        %6168 = vmatprep.subr.mxu0 0.0
        %6169 = vmatpush1.msra.mxu0 %v6137
        %6170 = vmatprep.subr.mxu0 0.0
        %6171 = vmatpush1.msra.mxu0 0.0
        %6172 = vmatprep.subr.mxu0 0.0
        %6173 = vmatpush1.msra.mxu0 0.0
        %6174 = vmatprep.subr.mxu0 0.0
        %6175 = vmatpush1.msra.mxu0 0.0
        %6176 = vmatprep.subr.mxu0 0.0
        %6177 = vmatpush1.msra.mxu0 0.0
        %6178 = vmatprep.subr.mxu0 0.0
        %6179 = vmatpush1.msra.mxu0 0.0
        %6180 = vmatprep.subr.mxu0 0.0
        %6181 = vmatpush1.msra.mxu0 0.0
        %6182 = vmatprep.subr.mxu0 0.0
        %6183 = vmatpush1.msra.mxu0 0.0
        %6184 = vmatprep.subr.mxu0 0.0
        %6185 = vmatpush1.msra.mxu0 0.0
        %6186 = vmatprep.subr.mxu0 0.0
        %6187 = vmatpush1.msra.mxu0 0.0
        %6188 = vmatprep.subr.mxu0 0.0
        %6189 = vmatpush1.msra.mxu0 0.0
        %6190 = vmatprep.subr.mxu0 0.0
        %6191 = vmatpush1.msra.mxu0 0.0
        %6192 = vmatprep.subr.mxu0 0.0
        %6193 = vmatpush1.msra.mxu0 0.0
        %6194 = vmatprep.subr.mxu0 0.0
        %6195 = vmatpush1.msra.mxu0 0.0
        %6196 = vmatprep.subr.mxu0 0.0
        %6197 = vmatpush1.msra.mxu0 0.0
        %6198 = vmatprep.subr.mxu0 0.0
        %6199 = vmatpush1.msra.mxu0 0.0
        %6200 = vmatprep.subr.mxu0 0.0
        %6201 = vmatpush1.msra.mxu0 0.0
        %6202 = vmatprep.subr.mxu0 0.0
        %6203 = vmatpush1.msra.mxu0 0.0
        %6204 = vmatprep.subr.mxu0 0.0
        %6205 = vmatpush1.msra.mxu0 0.0
        %6206 = vmatprep.subr.mxu0 0.0
        %6207 = vmatpush1.msra.mxu0 0.0
        %6208 = vmatprep.subr.mxu0 0.0
        %6209 = vmatpush1.msra.mxu0 0.0
        %6210 = vmatprep.subr.mxu0 0.0
        %6211 = vmatpush1.msra.mxu0 0.0
        %6212 = vmatprep.subr.mxu0 0.0
        %6213 = vmatpush1.msra.mxu0 0.0
        %6214 = vmatprep.subr.mxu0 0.0
        %6215 = vmatpush1.msra.mxu0 0.0
        %6216 = vmatprep.subr.mxu0 0.0
        %6217 = vmatpush1.msra.mxu0 0.0
        %6218 = vmatprep.subr.mxu0 0.0
        %6219 = vmatpush1.msra.mxu0 0.0
        %6220 = vmatprep.subr.mxu0 0.0
        %6221 = vmatpush1.msra.mxu0 0.0
        %6222 = vmatprep.subr.mxu0 0.0
        %6223 = vmatpush1.msra.mxu0 0.0
        %6224 = vmatprep.subr.mxu0 0.0
        %6225 = vmatpush1.msra.mxu0 0.0
        %6226 = vmatprep.mubr.f32.mxu0 0.0
        %6227 = vmatmul.mubr.f32.gmra.mrb[0].mxu0 %v6160
        %v6228 = vpop.f32.mrb[0].mxu0
        %v6229 = vadd.f32 0.0, %v6228
        %v6230 = vpop.f32.mrb[0].mxu0
        %6231 = vdwg.mxu0
        %v6232 = vadd.f32 %v6133, %v6229
        %v6233 = vadd.f32 %v6232, %v749
        %v6234 = vxor.u32 %v6233, 2147483648
        %v6235 = vmul.f32 %v6234, 1.442695
        %v6236 = vpow.pop %v6235
        %v6237 = vadd.f32 %v6236, 1.0
        %v6238 = vrcp.pop %v6237
        %v6239 = vmul.f32 1.0, %v6238
        %v6240 = vtanh.pop %v6233
        %6242 = vrot.lane.b32.xlu0 %v594, 32
        %v6243 = vpop.permute.xlu0 %6242
        %v6245 = vmul.f32 %v6239, %v6243
        %6247 = vrot.lane.b32.xlu0 %v6240, 64
        %v6248 = vpop.permute.xlu0 %6247
        %v6250 = vmul.f32 %v6239, %v6248
        %6252 = vrot.lane.b32.xlu0 %v6250, 32
        %v6253 = vpop.permute.xlu0 %6252
        %v6255 = vadd.f32 %v6245, %v6253
        %v6256 = vtanh.pop %v6255
        %6258 = vrot.lane.b32.xlu0 %v6256, 64
        %v6259 = vpop.permute.xlu0 %6258
        %v6261 = vmul.f32 %v6239, %v6259
        %6263 = vrot.lane.b32.xlu0 %v6261, 32
        %v6264 = vpop.permute.xlu0 %6263
        %6266 = vst.msk [vmem:[#allocation2] sm:$0xff] %vm607, %v6264
        %6268 = vrot.lane.b32.xlu0 %v6255, 96
        %v6269 = vpop.permute.xlu0 %6268
        %6271 = vst.msk [vmem:[#allocation3] sm:$0xff] %vm607, %v6269
        %6272 = vst.msk [vmem:[%s574] sm:$0xff] %vm607, %v6264
        %v6273 = vlaneseq
        %v6274 = vshrl.u32 %v6273, 7
        %v6275 = vsub.s32 %v2471, %v6274
        %v6276 = vrot.slane %v5034, %v6275
        %v6277 = vlaneseq
        %v6278 = vshrl.u32 %v6277, 7
        %v6279 = vsub.s32 %v2476, %v6278
        %v6280 = vrot.slane %v5039, %v6279
        %v6281 = vsel %vm2481, %v6280, %v6276
        %v6282 = vlaneseq
        %v6283 = vshrl.u32 %v6282, 7
        %v6284 = vsub.s32 %v2483, %v6283
        %v6285 = vrot.slane %v5044, %v6284
        %v6286 = vsel %vm2488, %v6285, %v6281
        %v6287 = vlaneseq
        %v6288 = vshrl.u32 %v6287, 7
        %v6289 = vsub.s32 %v2490, %v6288
        %v6290 = vrot.slane %v5049, %v6289
        %v6291 = vsel %vm2495, %v6290, %v6286
        %v6292 = vlaneseq
        %v6293 = vshrl.u32 %v6292, 7
        %v6294 = vsub.s32 %v2497, %v6293
        %v6295 = vrot.slane %v5054, %v6294
        %v6296 = vsel %vm2502, %v6295, %v6291
        %v6297 = vlaneseq
        %v6298 = vshrl.u32 %v6297, 7
        %v6299 = vsub.s32 %v2504, %v6298
        %v6300 = vrot.slane %v5059, %v6299
        %v6301 = vsel %vm2509, %v6300, %v6296
        %v6302 = vlaneseq
        %v6303 = vshrl.u32 %v6302, 7
        %v6304 = vsub.s32 %v2511, %v6303
        %v6305 = vrot.slane %v5064, %v6304
        %v6306 = vsel %vm2516, %v6305, %v6301
        %v6307 = vlaneseq
        %v6308 = vshrl.u32 %v6307, 7
        %v6309 = vsub.s32 %v2518, %v6308
        %v6310 = vrot.slane %v5069, %v6309
        %v6311 = vsel %vm2523, %v6310, %v6306
        %v6312 = vlaneseq
        %v6313 = vshrl.u32 %v6312, 7
        %v6314 = vsub.s32 %v2525, %v6313
        %v6315 = vrot.slane %v5074, %v6314
        %v6316 = vsel %vm2530, %v6315, %v6311
        %v6317 = vlaneseq
        %v6318 = vshrl.u32 %v6317, 7
        %v6319 = vsub.s32 %v2532, %v6318
        %v6320 = vrot.slane %v5079, %v6319
        %v6321 = vsel %vm2537, %v6320, %v6316
        %v6322 = vlaneseq
        %v6323 = vshrl.u32 %v6322, 7
        %v6324 = vsub.s32 %v2539, %v6323
        %v6325 = vrot.slane %v5084, %v6324
        %v6326 = vsel %vm2544, %v6325, %v6321
        %v6327 = vlaneseq
        %v6328 = vshrl.u32 %v6327, 7
        %v6329 = vsub.s32 %v2546, %v6328
        %v6330 = vrot.slane %v5089, %v6329
        %v6331 = vsel %vm2551, %v6330, %v6326
        %v6332 = vlaneseq
        %v6333 = vshrl.u32 %v6332, 7
        %v6334 = vsub.s32 %v2553, %v6333
        %v6335 = vrot.slane %v5094, %v6334
        %v6336 = vsel %vm2558, %v6335, %v6331
        %v6337 = vlaneseq
        %v6338 = vshrl.u32 %v6337, 7
        %v6339 = vsub.s32 %v2560, %v6338
        %v6340 = vrot.slane %v5099, %v6339
        %v6341 = vsel %vm2565, %v6340, %v6336
        %v6342 = vlaneseq
        %v6343 = vshrl.u32 %v6342, 7
        %v6344 = vsub.s32 %v2567, %v6343
        %v6345 = vrot.slane %v5104, %v6344
        %v6346 = vsel %vm2572, %v6345, %v6341
        %v6347 = vlaneseq
        %v6348 = vshrl.u32 %v6347, 7
        %v6349 = vsub.s32 %v2574, %v6348
        %v6350 = vrot.slane %v5109, %v6349
        %v6351 = vsel %vm2579, %v6350, %v6346
        %v6352 = vlaneseq
        %v6353 = vshrl.u32 %v6352, 7
        %v6354 = vsub.s32 %v2471, %v6353
        %v6355 = vrot.slane %v5114, %v6354
        %v6356 = vlaneseq
        %v6357 = vshrl.u32 %v6356, 7
        %v6358 = vsub.s32 %v2476, %v6357
        %v6359 = vrot.slane %v5119, %v6358
        %v6360 = vsel %vm2481, %v6359, %v6355
        %v6361 = vlaneseq
        %v6362 = vshrl.u32 %v6361, 7
        %v6363 = vsub.s32 %v2483, %v6362
        %v6364 = vrot.slane %v5124, %v6363
        %v6365 = vsel %vm2488, %v6364, %v6360
        %v6366 = vlaneseq
        %v6367 = vshrl.u32 %v6366, 7
        %v6368 = vsub.s32 %v2490, %v6367
        %v6369 = vrot.slane %v5129, %v6368
        %v6370 = vsel %vm2495, %v6369, %v6365
        %v6371 = vlaneseq
        %v6372 = vshrl.u32 %v6371, 7
        %v6373 = vsub.s32 %v2497, %v6372
        %v6374 = vrot.slane %v5134, %v6373
        %v6375 = vsel %vm2502, %v6374, %v6370
        %v6376 = vlaneseq
        %v6377 = vshrl.u32 %v6376, 7
        %v6378 = vsub.s32 %v2504, %v6377
        %v6379 = vrot.slane %v5139, %v6378
        %v6380 = vsel %vm2509, %v6379, %v6375
        %v6381 = vlaneseq
        %v6382 = vshrl.u32 %v6381, 7
        %v6383 = vsub.s32 %v2511, %v6382
        %v6384 = vrot.slane %v5144, %v6383
        %v6385 = vsel %vm2516, %v6384, %v6380
        %v6386 = vlaneseq
        %v6387 = vshrl.u32 %v6386, 7
        %v6388 = vsub.s32 %v2518, %v6387
        %v6389 = vrot.slane %v5149, %v6388
        %v6390 = vsel %vm2523, %v6389, %v6385
        %v6391 = vlaneseq
        %v6392 = vshrl.u32 %v6391, 7
        %v6393 = vsub.s32 %v2525, %v6392
        %v6394 = vrot.slane %v5154, %v6393
        %v6395 = vsel %vm2530, %v6394, %v6390
        %v6396 = vlaneseq
        %v6397 = vshrl.u32 %v6396, 7
        %v6398 = vsub.s32 %v2532, %v6397
        %v6399 = vrot.slane %v5159, %v6398
        %v6400 = vsel %vm2537, %v6399, %v6395
        %v6401 = vlaneseq
        %v6402 = vshrl.u32 %v6401, 7
        %v6403 = vsub.s32 %v2539, %v6402
        %v6404 = vrot.slane %v5164, %v6403
        %v6405 = vsel %vm2544, %v6404, %v6400
        %v6406 = vlaneseq
        %v6407 = vshrl.u32 %v6406, 7
        %v6408 = vsub.s32 %v2546, %v6407
        %v6409 = vrot.slane %v5169, %v6408
        %v6410 = vsel %vm2551, %v6409, %v6405
        %v6411 = vlaneseq
        %v6412 = vshrl.u32 %v6411, 7
        %v6413 = vsub.s32 %v2553, %v6412
        %v6414 = vrot.slane %v5174, %v6413
        %v6415 = vsel %vm2558, %v6414, %v6410
        %v6416 = vlaneseq
        %v6417 = vshrl.u32 %v6416, 7
        %v6418 = vsub.s32 %v2560, %v6417
        %v6419 = vrot.slane %v5179, %v6418
        %v6420 = vsel %vm2565, %v6419, %v6415
        %v6421 = vlaneseq
        %v6422 = vshrl.u32 %v6421, 7
        %v6423 = vsub.s32 %v2567, %v6422
        %v6424 = vrot.slane %v5184, %v6423
        %v6425 = vsel %vm2572, %v6424, %v6420
        %v6426 = vlaneseq
        %v6427 = vshrl.u32 %v6426, 7
        %v6428 = vsub.s32 %v2574, %v6427
        %v6429 = vrot.slane %v5189, %v6428
        %v6430 = vsel %vm2579, %v6429, %v6425
        %v6431 = vlaneseq
        %v6432 = vshrl.u32 %v6431, 7
        %v6433 = vsub.s32 %v2471, %v6432
        %v6434 = vrot.slane %v5194, %v6433
        %v6435 = vlaneseq
        %v6436 = vshrl.u32 %v6435, 7
        %v6437 = vsub.s32 %v2476, %v6436
        %v6438 = vrot.slane %v5199, %v6437
        %v6439 = vsel %vm2481, %v6438, %v6434
        %v6440 = vlaneseq
        %v6441 = vshrl.u32 %v6440, 7
        %v6442 = vsub.s32 %v2483, %v6441
        %v6443 = vrot.slane %v5204, %v6442
        %v6444 = vsel %vm2488, %v6443, %v6439
        %v6445 = vlaneseq
        %v6446 = vshrl.u32 %v6445, 7
        %v6447 = vsub.s32 %v2490, %v6446
        %v6448 = vrot.slane %v5209, %v6447
        %v6449 = vsel %vm2495, %v6448, %v6444
        %v6450 = vlaneseq
        %v6451 = vshrl.u32 %v6450, 7
        %v6452 = vsub.s32 %v2497, %v6451
        %v6453 = vrot.slane %v5214, %v6452
        %v6454 = vsel %vm2502, %v6453, %v6449
        %v6455 = vlaneseq
        %v6456 = vshrl.u32 %v6455, 7
        %v6457 = vsub.s32 %v2504, %v6456
        %v6458 = vrot.slane %v5219, %v6457
        %v6459 = vsel %vm2509, %v6458, %v6454
        %v6460 = vlaneseq
        %v6461 = vshrl.u32 %v6460, 7
        %v6462 = vsub.s32 %v2511, %v6461
        %v6463 = vrot.slane %v5224, %v6462
        %v6464 = vsel %vm2516, %v6463, %v6459
        %v6465 = vlaneseq
        %v6466 = vshrl.u32 %v6465, 7
        %v6467 = vsub.s32 %v2518, %v6466
        %v6468 = vrot.slane %v5229, %v6467
        %v6469 = vsel %vm2523, %v6468, %v6464
        %v6470 = vlaneseq
        %v6471 = vshrl.u32 %v6470, 7
        %v6472 = vsub.s32 %v2525, %v6471
        %v6473 = vrot.slane %v5234, %v6472
        %v6474 = vsel %vm2530, %v6473, %v6469
        %v6475 = vlaneseq
        %v6476 = vshrl.u32 %v6475, 7
        %v6477 = vsub.s32 %v2532, %v6476
        %v6478 = vrot.slane %v5239, %v6477
        %v6479 = vsel %vm2537, %v6478, %v6474
        %v6480 = vlaneseq
        %v6481 = vshrl.u32 %v6480, 7
        %v6482 = vsub.s32 %v2539, %v6481
        %v6483 = vrot.slane %v5244, %v6482
        %v6484 = vsel %vm2544, %v6483, %v6479
        %v6485 = vlaneseq
        %v6486 = vshrl.u32 %v6485, 7
        %v6487 = vsub.s32 %v2546, %v6486
        %v6488 = vrot.slane %v5249, %v6487
        %v6489 = vsel %vm2551, %v6488, %v6484
        %v6490 = vlaneseq
        %v6491 = vshrl.u32 %v6490, 7
        %v6492 = vsub.s32 %v2553, %v6491
        %v6493 = vrot.slane %v5254, %v6492
        %v6494 = vsel %vm2558, %v6493, %v6489
        %v6495 = vlaneseq
        %v6496 = vshrl.u32 %v6495, 7
        %v6497 = vsub.s32 %v2560, %v6496
        %v6498 = vrot.slane %v5259, %v6497
        %v6499 = vsel %vm2565, %v6498, %v6494
        %v6500 = vlaneseq
        %v6501 = vshrl.u32 %v6500, 7
        %v6502 = vsub.s32 %v2567, %v6501
        %v6503 = vrot.slane %v5264, %v6502
        %v6504 = vsel %vm2572, %v6503, %v6499
        %v6505 = vlaneseq
        %v6506 = vshrl.u32 %v6505, 7
        %v6507 = vsub.s32 %v2574, %v6506
        %v6508 = vrot.slane %v5269, %v6507
        %v6509 = vsel %vm2579, %v6508, %v6504
        %v6510 = vlaneseq
        %v6511 = vshrl.u32 %v6510, 7
        %v6512 = vsub.s32 %v2471, %v6511
        %v6513 = vrot.slane %v5274, %v6512
        %v6514 = vlaneseq
        %v6515 = vshrl.u32 %v6514, 7
        %v6516 = vsub.s32 %v2476, %v6515
        %v6517 = vrot.slane %v5279, %v6516
        %v6518 = vsel %vm2481, %v6517, %v6513
        %v6519 = vlaneseq
        %v6520 = vshrl.u32 %v6519, 7
        %v6521 = vsub.s32 %v2483, %v6520
        %v6522 = vrot.slane %v5284, %v6521
        %v6523 = vsel %vm2488, %v6522, %v6518
        %v6524 = vlaneseq
        %v6525 = vshrl.u32 %v6524, 7
        %v6526 = vsub.s32 %v2490, %v6525
        %v6527 = vrot.slane %v5289, %v6526
        %v6528 = vsel %vm2495, %v6527, %v6523
        %v6529 = vlaneseq
        %v6530 = vshrl.u32 %v6529, 7
        %v6531 = vsub.s32 %v2497, %v6530
        %v6532 = vrot.slane %v5294, %v6531
        %v6533 = vsel %vm2502, %v6532, %v6528
        %v6534 = vlaneseq
        %v6535 = vshrl.u32 %v6534, 7
        %v6536 = vsub.s32 %v2504, %v6535
        %v6537 = vrot.slane %v5299, %v6536
        %v6538 = vsel %vm2509, %v6537, %v6533
        %v6539 = vlaneseq
        %v6540 = vshrl.u32 %v6539, 7
        %v6541 = vsub.s32 %v2511, %v6540
        %v6542 = vrot.slane %v5304, %v6541
        %v6543 = vsel %vm2516, %v6542, %v6538
        %v6544 = vlaneseq
        %v6545 = vshrl.u32 %v6544, 7
        %v6546 = vsub.s32 %v2518, %v6545
        %v6547 = vrot.slane %v5309, %v6546
        %v6548 = vsel %vm2523, %v6547, %v6543
        %v6549 = vlaneseq
        %v6550 = vshrl.u32 %v6549, 7
        %v6551 = vsub.s32 %v2525, %v6550
        %v6552 = vrot.slane %v5314, %v6551
        %v6553 = vsel %vm2530, %v6552, %v6548
        %v6554 = vlaneseq
        %v6555 = vshrl.u32 %v6554, 7
        %v6556 = vsub.s32 %v2532, %v6555
        %v6557 = vrot.slane %v5319, %v6556
        %v6558 = vsel %vm2537, %v6557, %v6553
        %v6559 = vlaneseq
        %v6560 = vshrl.u32 %v6559, 7
        %v6561 = vsub.s32 %v2539, %v6560
        %v6562 = vrot.slane %v5324, %v6561
        %v6563 = vsel %vm2544, %v6562, %v6558
        %v6564 = vlaneseq
        %v6565 = vshrl.u32 %v6564, 7
        %v6566 = vsub.s32 %v2546, %v6565
        %v6567 = vrot.slane %v5329, %v6566
        %v6568 = vsel %vm2551, %v6567, %v6563
        %v6569 = vlaneseq
        %v6570 = vshrl.u32 %v6569, 7
        %v6571 = vsub.s32 %v2553, %v6570
        %v6572 = vrot.slane %v5334, %v6571
        %v6573 = vsel %vm2558, %v6572, %v6568
        %v6574 = vlaneseq
        %v6575 = vshrl.u32 %v6574, 7
        %v6576 = vsub.s32 %v2560, %v6575
        %v6577 = vrot.slane %v5339, %v6576
        %v6578 = vsel %vm2565, %v6577, %v6573
        %v6579 = vlaneseq
        %v6580 = vshrl.u32 %v6579, 7
        %v6581 = vsub.s32 %v2567, %v6580
        %v6582 = vrot.slane %v5344, %v6581
        %v6583 = vsel %vm2572, %v6582, %v6578
        %v6584 = vlaneseq
        %v6585 = vshrl.u32 %v6584, 7
        %v6586 = vsub.s32 %v2574, %v6585
        %v6587 = vrot.slane %v5349, %v6586
        %v6588 = vsel %vm2579, %v6587, %v6583
        %v6589 = vlaneseq
        %v6590 = vshrl.u32 %v6589, 7
        %v6591 = vsub.s32 %v2471, %v6590
        %v6592 = vrot.slane %v5354, %v6591
        %v6593 = vlaneseq
        %v6594 = vshrl.u32 %v6593, 7
        %v6595 = vsub.s32 %v2476, %v6594
        %v6596 = vrot.slane %v5359, %v6595
        %v6597 = vsel %vm2481, %v6596, %v6592
        %v6598 = vlaneseq
        %v6599 = vshrl.u32 %v6598, 7
        %v6600 = vsub.s32 %v2483, %v6599
        %v6601 = vrot.slane %v5364, %v6600
        %v6602 = vsel %vm2488, %v6601, %v6597
        %v6603 = vlaneseq
        %v6604 = vshrl.u32 %v6603, 7
        %v6605 = vsub.s32 %v2490, %v6604
        %v6606 = vrot.slane %v5369, %v6605
        %v6607 = vsel %vm2495, %v6606, %v6602
        %v6608 = vlaneseq
        %v6609 = vshrl.u32 %v6608, 7
        %v6610 = vsub.s32 %v2497, %v6609
        %v6611 = vrot.slane %v5374, %v6610
        %v6612 = vsel %vm2502, %v6611, %v6607
        %v6613 = vlaneseq
        %v6614 = vshrl.u32 %v6613, 7
        %v6615 = vsub.s32 %v2504, %v6614
        %v6616 = vrot.slane %v5379, %v6615
        %v6617 = vsel %vm2509, %v6616, %v6612
        %v6618 = vlaneseq
        %v6619 = vshrl.u32 %v6618, 7
        %v6620 = vsub.s32 %v2511, %v6619
        %v6621 = vrot.slane %v5384, %v6620
        %v6622 = vsel %vm2516, %v6621, %v6617
        %v6623 = vlaneseq
        %v6624 = vshrl.u32 %v6623, 7
        %v6625 = vsub.s32 %v2518, %v6624
        %v6626 = vrot.slane %v5389, %v6625
        %v6627 = vsel %vm2523, %v6626, %v6622
        %v6628 = vlaneseq
        %v6629 = vshrl.u32 %v6628, 7
        %v6630 = vsub.s32 %v2525, %v6629
        %v6631 = vrot.slane %v5394, %v6630
        %v6632 = vsel %vm2530, %v6631, %v6627
        %v6633 = vlaneseq
        %v6634 = vshrl.u32 %v6633, 7
        %v6635 = vsub.s32 %v2532, %v6634
        %v6636 = vrot.slane %v5399, %v6635
        %v6637 = vsel %vm2537, %v6636, %v6632
        %v6638 = vlaneseq
        %v6639 = vshrl.u32 %v6638, 7
        %v6640 = vsub.s32 %v2539, %v6639
        %v6641 = vrot.slane %v5404, %v6640
        %v6642 = vsel %vm2544, %v6641, %v6637
        %v6643 = vlaneseq
        %v6644 = vshrl.u32 %v6643, 7
        %v6645 = vsub.s32 %v2546, %v6644
        %v6646 = vrot.slane %v5409, %v6645
        %v6647 = vsel %vm2551, %v6646, %v6642
        %v6648 = vlaneseq
        %v6649 = vshrl.u32 %v6648, 7
        %v6650 = vsub.s32 %v2553, %v6649
        %v6651 = vrot.slane %v5414, %v6650
        %v6652 = vsel %vm2558, %v6651, %v6647
        %v6653 = vlaneseq
        %v6654 = vshrl.u32 %v6653, 7
        %v6655 = vsub.s32 %v2560, %v6654
        %v6656 = vrot.slane %v5419, %v6655
        %v6657 = vsel %vm2565, %v6656, %v6652
        %v6658 = vlaneseq
        %v6659 = vshrl.u32 %v6658, 7
        %v6660 = vsub.s32 %v2567, %v6659
        %v6661 = vrot.slane %v5424, %v6660
        %v6662 = vsel %vm2572, %v6661, %v6657
        %v6663 = vlaneseq
        %v6664 = vshrl.u32 %v6663, 7
        %v6665 = vsub.s32 %v2574, %v6664
        %v6666 = vrot.slane %v5429, %v6665
        %v6667 = vsel %vm2579, %v6666, %v6662
        %v6668 = vlaneseq
        %v6669 = vshrl.u32 %v6668, 7
        %v6670 = vsub.s32 %v2471, %v6669
        %v6671 = vrot.slane %v5434, %v6670
        %v6672 = vlaneseq
        %v6673 = vshrl.u32 %v6672, 7
        %v6674 = vsub.s32 %v2476, %v6673
        %v6675 = vrot.slane %v5439, %v6674
        %v6676 = vsel %vm2481, %v6675, %v6671
        %v6677 = vlaneseq
        %v6678 = vshrl.u32 %v6677, 7
        %v6679 = vsub.s32 %v2483, %v6678
        %v6680 = vrot.slane %v5444, %v6679
        %v6681 = vsel %vm2488, %v6680, %v6676
        %v6682 = vlaneseq
        %v6683 = vshrl.u32 %v6682, 7
        %v6684 = vsub.s32 %v2490, %v6683
        %v6685 = vrot.slane %v5449, %v6684
        %v6686 = vsel %vm2495, %v6685, %v6681
        %v6687 = vlaneseq
        %v6688 = vshrl.u32 %v6687, 7
        %v6689 = vsub.s32 %v2497, %v6688
        %v6690 = vrot.slane %v5454, %v6689
        %v6691 = vsel %vm2502, %v6690, %v6686
        %v6692 = vlaneseq
        %v6693 = vshrl.u32 %v6692, 7
        %v6694 = vsub.s32 %v2504, %v6693
        %v6695 = vrot.slane %v5459, %v6694
        %v6696 = vsel %vm2509, %v6695, %v6691
        %v6697 = vlaneseq
        %v6698 = vshrl.u32 %v6697, 7
        %v6699 = vsub.s32 %v2511, %v6698
        %v6700 = vrot.slane %v5464, %v6699
        %v6701 = vsel %vm2516, %v6700, %v6696
        %v6702 = vlaneseq
        %v6703 = vshrl.u32 %v6702, 7
        %v6704 = vsub.s32 %v2518, %v6703
        %v6705 = vrot.slane %v5469, %v6704
        %v6706 = vsel %vm2523, %v6705, %v6701
        %v6707 = vlaneseq
        %v6708 = vshrl.u32 %v6707, 7
        %v6709 = vsub.s32 %v2525, %v6708
        %v6710 = vrot.slane %v5474, %v6709
        %v6711 = vsel %vm2530, %v6710, %v6706
        %v6712 = vlaneseq
        %v6713 = vshrl.u32 %v6712, 7
        %v6714 = vsub.s32 %v2532, %v6713
        %v6715 = vrot.slane %v5479, %v6714
        %v6716 = vsel %vm2537, %v6715, %v6711
        %v6717 = vlaneseq
        %v6718 = vshrl.u32 %v6717, 7
        %v6719 = vsub.s32 %v2539, %v6718
        %v6720 = vrot.slane %v5484, %v6719
        %v6721 = vsel %vm2544, %v6720, %v6716
        %v6722 = vlaneseq
        %v6723 = vshrl.u32 %v6722, 7
        %v6724 = vsub.s32 %v2546, %v6723
        %v6725 = vrot.slane %v5489, %v6724
        %v6726 = vsel %vm2551, %v6725, %v6721
        %v6727 = vlaneseq
        %v6728 = vshrl.u32 %v6727, 7
        %v6729 = vsub.s32 %v2553, %v6728
        %v6730 = vrot.slane %v5494, %v6729
        %v6731 = vsel %vm2558, %v6730, %v6726
        %v6732 = vlaneseq
        %v6733 = vshrl.u32 %v6732, 7
        %v6734 = vsub.s32 %v2560, %v6733
        %v6735 = vrot.slane %v5499, %v6734
        %v6736 = vsel %vm2565, %v6735, %v6731
        %v6737 = vlaneseq
        %v6738 = vshrl.u32 %v6737, 7
        %v6739 = vsub.s32 %v2567, %v6738
        %v6740 = vrot.slane %v5504, %v6739
        %v6741 = vsel %vm2572, %v6740, %v6736
        %v6742 = vlaneseq
        %v6743 = vshrl.u32 %v6742, 7
        %v6744 = vsub.s32 %v2574, %v6743
        %v6745 = vrot.slane %v5509, %v6744
        %v6746 = vsel %vm2579, %v6745, %v6741
        %v6747 = vlaneseq
        %v6748 = vshrl.u32 %v6747, 7
        %v6749 = vsub.s32 %v2471, %v6748
        %v6750 = vrot.slane %v5514, %v6749
        %v6751 = vlaneseq
        %v6752 = vshrl.u32 %v6751, 7
        %v6753 = vsub.s32 %v2476, %v6752
        %v6754 = vrot.slane %v5519, %v6753
        %v6755 = vsel %vm2481, %v6754, %v6750
        %v6756 = vlaneseq
        %v6757 = vshrl.u32 %v6756, 7
        %v6758 = vsub.s32 %v2483, %v6757
        %v6759 = vrot.slane %v5524, %v6758
        %v6760 = vsel %vm2488, %v6759, %v6755
        %v6761 = vlaneseq
        %v6762 = vshrl.u32 %v6761, 7
        %v6763 = vsub.s32 %v2490, %v6762
        %v6764 = vrot.slane %v5529, %v6763
        %v6765 = vsel %vm2495, %v6764, %v6760
        %v6766 = vlaneseq
        %v6767 = vshrl.u32 %v6766, 7
        %v6768 = vsub.s32 %v2497, %v6767
        %v6769 = vrot.slane %v5534, %v6768
        %v6770 = vsel %vm2502, %v6769, %v6765
        %v6771 = vlaneseq
        %v6772 = vshrl.u32 %v6771, 7
        %v6773 = vsub.s32 %v2504, %v6772
        %v6774 = vrot.slane %v5539, %v6773
        %v6775 = vsel %vm2509, %v6774, %v6770
        %v6776 = vlaneseq
        %v6777 = vshrl.u32 %v6776, 7
        %v6778 = vsub.s32 %v2511, %v6777
        %v6779 = vrot.slane %v5544, %v6778
        %v6780 = vsel %vm2516, %v6779, %v6775
        %v6781 = vlaneseq
        %v6782 = vshrl.u32 %v6781, 7
        %v6783 = vsub.s32 %v2518, %v6782
        %v6784 = vrot.slane %v5549, %v6783
        %v6785 = vsel %vm2523, %v6784, %v6780
        %v6786 = vlaneseq
        %v6787 = vshrl.u32 %v6786, 7
        %v6788 = vsub.s32 %v2525, %v6787
        %v6789 = vrot.slane %v5554, %v6788
        %v6790 = vsel %vm2530, %v6789, %v6785
        %v6791 = vlaneseq
        %v6792 = vshrl.u32 %v6791, 7
        %v6793 = vsub.s32 %v2532, %v6792
        %v6794 = vrot.slane %v5559, %v6793
        %v6795 = vsel %vm2537, %v6794, %v6790
        %v6796 = vlaneseq
        %v6797 = vshrl.u32 %v6796, 7
        %v6798 = vsub.s32 %v2539, %v6797
        %v6799 = vrot.slane %v5564, %v6798
        %v6800 = vsel %vm2544, %v6799, %v6795
        %v6801 = vlaneseq
        %v6802 = vshrl.u32 %v6801, 7
        %v6803 = vsub.s32 %v2546, %v6802
        %v6804 = vrot.slane %v5569, %v6803
        %v6805 = vsel %vm2551, %v6804, %v6800
        %v6806 = vlaneseq
        %v6807 = vshrl.u32 %v6806, 7
        %v6808 = vsub.s32 %v2553, %v6807
        %v6809 = vrot.slane %v5574, %v6808
        %v6810 = vsel %vm2558, %v6809, %v6805
        %v6811 = vlaneseq
        %v6812 = vshrl.u32 %v6811, 7
        %v6813 = vsub.s32 %v2560, %v6812
        %v6814 = vrot.slane %v5579, %v6813
        %v6815 = vsel %vm2565, %v6814, %v6810
        %v6816 = vlaneseq
        %v6817 = vshrl.u32 %v6816, 7
        %v6818 = vsub.s32 %v2567, %v6817
        %v6819 = vrot.slane %v5584, %v6818
        %v6820 = vsel %vm2572, %v6819, %v6815
        %v6821 = vlaneseq
        %v6822 = vshrl.u32 %v6821, 7
        %v6823 = vsub.s32 %v2574, %v6822
        %v6824 = vrot.slane %v5589, %v6823
        %v6825 = vsel %vm2579, %v6824, %v6820
        %v6826 = vlaneseq
        %v6827 = vshrl.u32 %v6826, 7
        %v6828 = vsub.s32 %v2471, %v6827
        %v6829 = vrot.slane %v5594, %v6828
        %v6830 = vlaneseq
        %v6831 = vshrl.u32 %v6830, 7
        %v6832 = vsub.s32 %v2476, %v6831
        %v6833 = vrot.slane %v5599, %v6832
        %v6834 = vsel %vm2481, %v6833, %v6829
        %v6835 = vlaneseq
        %v6836 = vshrl.u32 %v6835, 7
        %v6837 = vsub.s32 %v2483, %v6836
        %v6838 = vrot.slane %v5604, %v6837
        %v6839 = vsel %vm2488, %v6838, %v6834
        %v6840 = vlaneseq
        %v6841 = vshrl.u32 %v6840, 7
        %v6842 = vsub.s32 %v2490, %v6841
        %v6843 = vrot.slane %v5609, %v6842
        %v6844 = vsel %vm2495, %v6843, %v6839
        %v6845 = vlaneseq
        %v6846 = vshrl.u32 %v6845, 7
        %v6847 = vsub.s32 %v2497, %v6846
        %v6848 = vrot.slane %v5614, %v6847
        %v6849 = vsel %vm2502, %v6848, %v6844
        %v6850 = vlaneseq
        %v6851 = vshrl.u32 %v6850, 7
        %v6852 = vsub.s32 %v2504, %v6851
        %v6853 = vrot.slane %v5619, %v6852
        %v6854 = vsel %vm2509, %v6853, %v6849
        %v6855 = vlaneseq
        %v6856 = vshrl.u32 %v6855, 7
        %v6857 = vsub.s32 %v2511, %v6856
        %v6858 = vrot.slane %v5624, %v6857
        %v6859 = vsel %vm2516, %v6858, %v6854
        %v6860 = vlaneseq
        %v6861 = vshrl.u32 %v6860, 7
        %v6862 = vsub.s32 %v2518, %v6861
        %v6863 = vrot.slane %v5629, %v6862
        %v6864 = vsel %vm2523, %v6863, %v6859
        %v6865 = vlaneseq
        %v6866 = vshrl.u32 %v6865, 7
        %v6867 = vsub.s32 %v2525, %v6866
        %v6868 = vrot.slane %v5634, %v6867
        %v6869 = vsel %vm2530, %v6868, %v6864
        %v6870 = vlaneseq
        %v6871 = vshrl.u32 %v6870, 7
        %v6872 = vsub.s32 %v2532, %v6871
        %v6873 = vrot.slane %v5639, %v6872
        %v6874 = vsel %vm2537, %v6873, %v6869
        %v6875 = vlaneseq
        %v6876 = vshrl.u32 %v6875, 7
        %v6877 = vsub.s32 %v2539, %v6876
        %v6878 = vrot.slane %v5644, %v6877
        %v6879 = vsel %vm2544, %v6878, %v6874
        %v6880 = vlaneseq
        %v6881 = vshrl.u32 %v6880, 7
        %v6882 = vsub.s32 %v2546, %v6881
        %v6883 = vrot.slane %v5649, %v6882
        %v6884 = vsel %vm2551, %v6883, %v6879
        %v6885 = vlaneseq
        %v6886 = vshrl.u32 %v6885, 7
        %v6887 = vsub.s32 %v2553, %v6886
        %v6888 = vrot.slane %v5654, %v6887
        %v6889 = vsel %vm2558, %v6888, %v6884
        %v6890 = vlaneseq
        %v6891 = vshrl.u32 %v6890, 7
        %v6892 = vsub.s32 %v2560, %v6891
        %v6893 = vrot.slane %v5659, %v6892
        %v6894 = vsel %vm2565, %v6893, %v6889
        %v6895 = vlaneseq
        %v6896 = vshrl.u32 %v6895, 7
        %v6897 = vsub.s32 %v2567, %v6896
        %v6898 = vrot.slane %v5664, %v6897
        %v6899 = vsel %vm2572, %v6898, %v6894
        %v6900 = vlaneseq
        %v6901 = vshrl.u32 %v6900, 7
        %v6902 = vsub.s32 %v2574, %v6901
        %v6903 = vrot.slane %v5669, %v6902
        %v6904 = vsel %vm2579, %v6903, %v6899
        %v6905 = vsel %vm3134, %v6430, %v6351
        %v6906 = vsel %vm3136, %v6509, %v6905
        %v6907 = vsel %vm3138, %v6588, %v6906
        %v6908 = vsel %vm3140, %v6667, %v6907
        %v6909 = vsel %vm3142, %v6746, %v6908
        %v6910 = vsel %vm3144, %v6825, %v6909
        %v6911 = vsel %vm3146, %v6904, %v6910
        %6913 = vst [vmem:[%s581] sm:$0xff] %v6911
        %s6914 = sand.u32 %s293, 1
        %s6915 = scalar_lea.sflag [#allocation6], %s6914
        %s6916 = sand.u32 %s293, 1
        %s6917 = smul.addr %s6916, 8
        %s6918 = scalar_lea.vmem [#allocation20], %s6917
        %s6919 = sand.u32 %s321, 1
        %s6920 = scalar_lea.sflag [#allocation22], %s6919
        %s6921 = sand.u32 %s321, 1
        %s6922 = smul.addr %s6921, 8
        %s6923 = scalar_lea.vmem [#allocation21], %s6922
        // Predicated region
        $region105: #{tpu_custom_call.1} parent=59 // pred_check
          %p6924 = pneg %p303
        $region106: #{tpu_custom_call.1} parent=59 // pred_check_branch
          %6926 = sbr.rel (%p6924) target = $region108
        $region107: #{tpu_custom_call.1} parent=59 // pred_region
          %s6928 = ssub.s32 128, 128
          %6929 = vsyncadd %s6915, %s6928
          %s6930 = sadd.s32 %s38, %s39
          %s6931 = smul.addr %s6930, 128
          %s6932 = scalar_lea.hbm %s10, %s6931
          %s6934 = sshll.u32 %s6918, 4
          %s6935 = int_to_ptr.vmem [resolvable:$true] %s6934
          %6937 = dma.vmem_to_hbm [thread:$0]  %s6935, 128, %s6932, %s6915
        $region108: #{tpu_custom_call.1} parent=59 // pred_fallthru
          _
        // Predicated region
        $region109: #{tpu_custom_call.1} parent=59 // pred_check
          %p6938 = pneg %p331
        $region110: #{tpu_custom_call.1} parent=59 // pred_check_branch
          %6940 = sbr.rel (%p6938) target = $region112
        $region111: #{tpu_custom_call.1} parent=59 // pred_region
          %s6942 = ssub.s32 128, 128
          %6943 = vsyncadd %s6920, %s6942
          %s6944 = sadd.s32 %s38, %s39
          %s6945 = smul.addr %s6944, 128
          %s6946 = scalar_lea.hbm %s11, %s6945
          %s6948 = sshll.u32 %s6923, 4
          %s6949 = int_to_ptr.vmem [resolvable:$true] %s6948
          %6951 = dma.vmem_to_hbm [thread:$0]  %s6949, 128, %s6946, %s6920
        $region112: #{tpu_custom_call.1} parent=59 // pred_fallthru
          _
      $region60: #{tpu_custom_call.1} parent=5 // pred_fallthru
        _
      %p6952 = scmp.le.s32.totalorder 2, %s29
      // Predicated region
      $region113: #{tpu_custom_call.1} parent=5 // pred_check
        %p6953 = pneg %p6952
      $region114: #{tpu_custom_call.1} parent=5 // pred_check_branch
        %6955 = sbr.rel (%p6953) target = $region116
      $region115: #{tpu_custom_call.1} parent=5 // pred_region
        %s6956 = ssub.s32 %s29, 2
        // Predicated region
        $region117: #{tpu_custom_call.1} parent=115 // pred_check
          %p6957 = pneg %p309
        $region118: #{tpu_custom_call.1} parent=115 // pred_check_branch
          %6959 = sbr.rel (%p6957) target = $region120
        $region119: #{tpu_custom_call.1} parent=115 // pred_region
          %s6960 = sand.u32 %s294, 1
          %s6961 = scalar_lea.sflag [#allocation6], %s6960
          %s6962 = sand.u32 %s294, 1
          %s6963 = smul.addr %s6962, 8
          %s6964 = scalar_lea.vmem [#allocation20], %s6963
          %6965 = dma.done %s6961, 128
        $region120: #{tpu_custom_call.1} parent=115 // pred_fallthru
          _
        // Predicated region
        $region121: #{tpu_custom_call.1} parent=115 // pred_check
          %p6966 = pneg %p337
        $region122: #{tpu_custom_call.1} parent=115 // pred_check_branch
          %6968 = sbr.rel (%p6966) target = $region124
        $region123: #{tpu_custom_call.1} parent=115 // pred_region
          %s6969 = sand.u32 %s322, 1
          %s6970 = scalar_lea.sflag [#allocation22], %s6969
          %s6971 = sand.u32 %s322, 1
          %s6972 = smul.addr %s6971, 8
          %s6973 = scalar_lea.vmem [#allocation21], %s6972
          %6974 = dma.done %s6970, 128
        $region124: #{tpu_custom_call.1} parent=115 // pred_fallthru
          _
      $region116: #{tpu_custom_call.1} parent=5 // pred_fallthru
        _
    $region6: #{tpu_custom_call.1} parent=1 // loop_footer
      %s33 = sadd.s32 1, %s29
    $region7: #{tpu_custom_call.1} parent=1 // loop_footer_branch
      %28 = sbr.rel target = $region3
    $region8: #{tpu_custom_call.1} parent=1 // loop_exit
      _
    %6975 = vsyncpa [#allocation5], 1
    %s6976 = scalar_lea.sflag [#allocation5], 1
    %6977 = vsyncpa %s6976, 1
    %6978 = vsyncpa [#allocation8], 1
    %6979 = vsyncpa [#allocation12], 1
    %6980 = vsyncpa [#allocation15], 1
    %6981 = vsyncpa [#allocation18], 1
    %6982 = vsyncpa [#allocation6], 1
    %s6983 = scalar_lea.sflag [#allocation6], 1
    %6984 = vsyncpa %s6983, 1
    %6985 = vsyncpa [#allocation22], 1
    %s6986 = scalar_lea.sflag [#allocation22], 1
    %6987 = vsyncpa %s6986, 1

</llo_original>
